<compile_context>
chip_gen: v7x
topology: tpu7x:2x2x1
jax: 0.10.0
libtpu: 0.0.40
codegen_flags: <defaults>
</compile_context>

<pallas_src>
import functools

import numpy as np
import jax
import jax.numpy as jnp
from jax import lax
from jax.experimental import pallas as pl
from jax.experimental.pallas import tpu as pltpu

CONV_PAD = 2  # the PyTorch module hardcodes nn.Conv2d(..., padding=2)


def _round_up(x, m):
    return (x + m - 1) // m * m


def conv_geometry(in_dim, in_channels, conv_layers, conv_kernel_sizes):
    """Static per-layer geometry (stride-1 conv with pad=2, then MaxPool2d(2, 2))."""
    dims = []
    H, W = in_dim
    cin = in_channels
    for cout, k in zip(conv_layers, conv_kernel_sizes):
        pad = CONV_PAD
        Hp = H + 2 * pad                       # vertically padded rows held in VMEM
        Ho = H + 2 * pad - k + 1               # conv output height (stride 1)
        Wo = W + 2 * pad - k + 1               # conv output width
        Hq, Wq = Ho // 2, Wo // 2              # after 2x2 / stride-2 max-pool
        WCin = W * cin                         # real lane width of the activation
        WL = _round_up(WCin, 128)              # lane-dense allocated width
        dims.append(dict(H=H, W=W, Cin=cin, Cout=cout, K=k, pad=pad, Hp=Hp,
                         Ho=Ho, Wo=Wo, Hq=Hq, Wq=Wq, WCin=WCin, WL=WL))
        H, W, cin = Hq, Wq, cout
    return dims, (cin, H, W)                   # final (C, H, W) feature shape


def _pick_block_n(N, cap=16):
    """Largest divisor of N (<= cap) that keeps the grid length >= 2 so v7x's two
    TensorCores both get work; fall back to any divisor <= cap."""
    cands = [d for d in range(1, min(N, cap) + 1) if N % d == 0]
    two_core = [d for d in cands if N // d >= 2]
    return max(two_core) if two_core else max(cands)


# ---------------------------------------------------------------------------
# The fused kernel
# ---------------------------------------------------------------------------
def _fused_cnn_kernel(*refs, dims, n_fc, block_n):
    n_conv = len(dims)
    it = iter(refs)
    x_ref = next(it)                                         # (block_n, H0, W0*C0) f32
    conv_w = [(next(it), next(it)) for _ in range(n_conv)]   # (B_toeplitz, bias)
    fc_w = [(next(it), next(it)) for _ in range(n_fc)]       # (W, b)
    out_ref = next(it)                                       # (block_n, 1, out_pad) f32
    xv_refs = [next(it) for _ in range(n_conv)]              # (Hp*block_n, WL)
    a_refs = [next(it) for _ in range(n_conv)]               # (Ho*block_n, K*WL) bf16

    f32, bf16 = jnp.float32, jnp.bfloat16
    bn = block_n

    # Zero only the regions that are NOT fully overwritten every grid step: the
    # vertical pad rows and the dead lane-padding columns (the interiors are
    # rewritten below, so this preserves the pad=2 zero ring).
    for d, xv_ref in zip(dims, xv_refs):
        pad, H, Hp, WCin, WL = d["pad"], d["H"], d["Hp"], d["WCin"], d["WL"]
        xv_ref[0:pad * bn, :] = jnp.zeros((pad * bn, WL), xv_ref.dtype)
        xv_ref[(pad + H) * bn:Hp * bn, :] = jnp.zeros((pad * bn, WL), xv_ref.dtype)
        if WL > WCin:
            xv_ref[:, WCin:WL] = jnp.zeros((Hp * bn, WL - WCin), xv_ref.dtype)

    # Binarize the input exactly once, straight into the first padded buffer.
    # Rows are image-minor (row = spatial_row*block_n + n), so each store below
    # is a dense (block_n, W*Cin) slab at a static offset.
    d0 = dims[0]
    xb = (x_ref[...] > 0.5).astype(xv_refs[0].dtype)          # (block_n, H, W*Cin)
    for hr in range(d0["H"]):
        xv_refs[0][(d0["pad"] + hr) * bn:(d0["pad"] + hr + 1) * bn,
                   0:d0["WCin"]] = xb[:, hr, :]

    # ---- conv -> ReLU -> 2x2/2 max-pool stack, entirely in VMEM ----
    fc_in = None
    for li, d in enumerate(dims):
        xv_ref, a_ref = xv_refs[li], a_refs[li]
        bmat_ref, bias_ref = conv_w[li]
        K, Cout = d["K"], d["Cout"]
        Ho, Hq, Wq, WL = d["Ho"], d["Hq"], d["Wq"], d["WL"]
        WqC = Wq * Cout
        last = li == n_conv - 1

        # im2row: thanks to the image-minor layout the rows needed for kernel
        # row kh are one globally contiguous slab -> ONE dense copy per kh.
        for kh in range(K):
            a_ref[:, kh * WL:(kh + 1) * WL] = \
                xv_ref[kh * bn:(kh + Ho) * bn, :].astype(a_ref.dtype)

        # One MXU matmul for the whole conv layer (+ bias + ReLU), f32 accum.
        # B's output columns are pre-permuted (even conv columns first, odd
        # columns last), so the horizontal half of the max-pool is just a max
        # of the two contiguous halves -- no lane shuffles, no extra stores.
        y = jnp.dot(a_ref[...], bmat_ref[...], preferred_element_type=f32)
        y = jnp.maximum(y + bias_ref[...], 0.0)               # (Ho*bn, 2*Wq*Cout)
        pw = jnp.maximum(y[:, :WqC], y[:, WqC:])              # (Ho*bn, Wq*Cout)

        # Vertical half of the max-pool + scatter into the next padded buffer
        # (or the FC input).  All offsets are static dense slabs.
        if not last:
            nd = dims[li + 1]
            xvn_ref, padn = xv_refs[li + 1], nd["pad"]
            for h2 in range(Hq):
                v = jnp.maximum(pw[(2 * h2) * bn:(2 * h2 + 1) * bn, :],
                                pw[(2 * h2 + 1) * bn:(2 * h2 + 2) * bn, :])
                xvn_ref[(padn + h2) * bn:(padn + h2 + 1) * bn,
                        0:WqC] = v.astype(xvn_ref.dtype)
        else:
            parts = []
            for h2 in range(Hq):
                v = jnp.maximum(pw[(2 * h2) * bn:(2 * h2 + 1) * bn, :],
                                pw[(2 * h2 + 1) * bn:(2 * h2 + 2) * bn, :])
                parts.append(v.astype(bf16))
            # NHWC flatten; the NCHW flatten permutation of the PyTorch model is
            # folded into the first FC weight at init.
            fc_in = parts[0] if Hq == 1 else jnp.concatenate(parts, axis=1)

    # ---- FC stack (ReLU between layers; Dropout(p=0.0) == identity) ----
    hfc = fc_in                                               # (block_n, n_flatten) bf16
    for fi, (w_ref, b_ref) in enumerate(fc_w):
        z = jnp.dot(hfc, w_ref[...], preferred_element_type=f32) + b_ref[...]
        if fi < n_fc - 1:
            hfc = jnp.maximum(z, 0.0).astype(bf16)
        else:
            out_ref[:, 0, :] = z                              # lane-dense 128-wide slab


# ---------------------------------------------------------------------------
# Wrapper
# ---------------------------------------------------------------------------
def cnn_forward(x_nchw, kparams, *, block_n=None):
    dims = kparams["dims"]
    out_dim, out_pad = kparams["out_dim"], kparams["out_pad"]

    N, C, H, W = x_nchw.shape
    d0 = dims[0]
    assert (C, H, W) == (d0["Cin"], d0["H"], d0["W"])
    if block_n is None:
        block_n = _pick_block_n(N)
    assert N % block_n == 0, "block_n must divide the batch size"

    # NCHW -> (N, H, W*C); one cheap transpose/reshape outside the kernel.
    x3d = jnp.transpose(x_nchw, (0, 2, 3, 1)).reshape(N, H, W * C).astype(jnp.float32)

    weight_args, weight_specs = [], []
    for wmat, bvec in list(kparams["conv"]) + list(kparams["fc"]):
        weight_args += [wmat, bvec]
        weight_specs += [pl.BlockSpec(wmat.shape, lambda i: (0, 0)),
                         pl.BlockSpec(bvec.shape, lambda i: (0, 0))]

    # bf16 activation scratch (halved copy bandwidth); fall back to f32 when
    # block_n is odd so no sublane-packed slice ever lands on an odd row offset.
    act_dtype = jnp.bfloat16 if block_n % 2 == 0 else jnp.float32
    scratch = (
        [pltpu.VMEM((d["Hp"] * block_n, d["WL"]), act_dtype) for d in dims]          # padded act
        + [pltpu.VMEM((d["Ho"] * block_n, d["K"] * d["WL"]), jnp.bfloat16) for d in dims]  # im2row A
    )

    kernel = functools.partial(_fused_cnn_kernel, dims=dims,
                               n_fc=len(kparams["fc"]), block_n=block_n)

    out = pl.pallas_call(
        kernel,
        out_shape=jax.ShapeDtypeStruct((N, 1, out_pad), jnp.float32),
        grid_spec=pltpu.PrefetchScalarGridSpec(
            num_scalar_prefetch=0,
            grid=(N // block_n,),
            in_specs=[pl.BlockSpec((block_n, H, W * C), lambda i: (i, 0, 0))] + weight_specs,
            out_specs=pl.BlockSpec((block_n, 1, out_pad), lambda i: (i, 0, 0)),
            scratch_shapes=scratch),
        compiler_params=pltpu.CompilerParams(
            dimension_semantics=("parallel",),
            vmem_limit_bytes=32 * 1024 * 1024),
    )(x3d, *weight_args)

    return out.reshape(N, out_pad)[:, :out_dim]


# ---------------------------------------------------------------------------
# Parameters: random init in PyTorch layout, then one-time fold to kernel layout
# ---------------------------------------------------------------------------
def init_params(key, in_channels, in_dim, out_dim,
                conv_layers=(16, 16, 16), conv_kernel_sizes=(5, 5, 5),
                fc_layers=(128, 128)):
    params = {"conv": [], "fc": []}
    cin = in_channels
    for cout, k in zip(conv_layers, conv_kernel_sizes):
        key, k1, k2 = jax.random.split(key, 3)
        w = jax.random.normal(k1, (cout, cin, k, k), jnp.float32) / np.sqrt(cin * k * k)
        b = jax.random.normal(k2, (cout,), jnp.float32) * 0.01
        params["conv"].append((w, b))
        cin = cout
    _, (Cf, Hf, Wf) = conv_geometry(in_dim, in_channels, conv_layers, conv_kernel_sizes)
    feat = [Cf * Hf * Wf] + list(fc_layers) + [out_dim]
    for din, dout in zip(feat[:-1], feat[1:]):
        key, k1, k2 = jax.random.split(key, 3)
        w = jax.random.normal(k1, (dout, din), jnp.float32) / np.sqrt(din)  # torch (out, in)
        b = jax.random.normal(k2, (dout,), jnp.float32) * 0.01
        params["fc"].append((w, b))
    return params


def prepare_params(params, in_dim, in_channels, out_dim):
    """One-time fold of PyTorch-layout params into kernel-ready matrices."""
    conv_layers = [w.shape[0] for w, _ in params["conv"]]
    ksizes = [w.shape[-1] for w, _ in params["conv"]]
    dims, (Cf, Hf, Wf) = conv_geometry(in_dim, in_channels, conv_layers, ksizes)
    n_flatten = Cf * Hf * Wf
    out_pad = _round_up(out_dim, 128)

    conv_k = []
    for (w, b), d in zip(params["conv"], dims):
        w = np.asarray(w, np.float32)                  # (Cout, Cin, K, K)
        K, pad, Cin, Cout = d["K"], d["pad"], d["Cin"], d["Cout"]
        Wd, Wq, WL = d["W"], d["Wq"], d["WL"]
        wt = w.transpose(2, 3, 1, 0)                   # (kh, kw, ci, co)
        # Toeplitz expansion with the HORIZONTAL zero-padding folded in (clipped
        # taps), rows padded to the lane-dense width WL, and output columns
        # permuted so even conv columns (wo = 0,2,4,..) occupy the first Wq*Cout
        # lanes and odd columns the last Wq*Cout lanes (pool = max of halves).
        B = np.zeros((K, WL, 2 * Wq * Cout), np.float32)
        for kh in range(K):
            for j in range(Wq):
                for par in range(2):
                    wo = 2 * j + par
                    col0 = (par * Wq + j) * Cout
                    for kw in range(K):
                        u = wo + kw - pad
                        if 0 <= u < Wd:
                            B[kh, u * Cin:(u + 1) * Cin, col0:col0 + Cout] = wt[kh, kw]
        B = B.reshape(K * WL, 2 * Wq * Cout)
        bias = np.tile(np.asarray(b, np.float32), 2 * Wq).reshape(1, 2 * Wq * Cout)
        conv_k.append((jnp.asarray(B, jnp.bfloat16), jnp.asarray(bias, jnp.float32)))

    fc_k = []
    n_fc = len(params["fc"])
    # perm[j] = NCHW flat index of the feature the kernel stores at NHWC position j.
    perm = np.arange(n_flatten).reshape(Cf, Hf, Wf).transpose(1, 2, 0).reshape(-1)
    for fi, (w, b) in enumerate(params["fc"]):
        w, b = np.asarray(w, np.float32), np.asarray(b, np.float32)  # torch layout
        if fi == 0:
            w = w[:, perm]                             # fold NCHW flatten permutation into W1
        wk, bk = w.T, b.reshape(1, -1)
        if fi == n_fc - 1:                             # lane-dense 128-wide final slab
            wk = np.pad(wk, ((0, 0), (0, out_pad - wk.shape[1])))
            bk = np.pad(bk, ((0, 0), (0, out_pad - bk.shape[1])))
        fc_k.append((jnp.asarray(wk, jnp.bfloat16), jnp.asarray(bk, jnp.float32)))

    return {"dims": dims, "n_flatten": n_flatten, "out_dim": out_dim,
            "out_pad": out_pad, "conv": conv_k, "fc": fc_k}


# ---------------------------------------------------------------------------
# Pure-JAX reference (f32) of the PyTorch forward, for a loose sanity check
# ---------------------------------------------------------------------------
def reference_forward(x_nchw, params):
    x = (x_nchw > 0.5).astype(jnp.float32)
    for w, b in params["conv"]:
        x = lax.conv_general_dilated(
            x, w, window_strides=(1, 1),
            padding=((CONV_PAD, CONV_PAD), (CONV_PAD, CONV_PAD)),
            dimension_numbers=("NCHW", "OIHW", "NCHW"))
        x = jnp.maximum(x + b[None, :, None, None], 0.0)
        x = lax.reduce_window(x, -jnp.inf, lax.max,
                              window_dimensions=(1, 1, 2, 2),
                              window_strides=(1, 1, 2, 2), padding="VALID")
    x = x.reshape(x.shape[0], -1)                       # NCHW flatten (torch order)
    for i, (w, b) in enumerate(params["fc"]):
        x = x @ w.T + b
        if i < len(params["fc"]) - 1:
            x = jnp.maximum(x, 0.0)
    return x


if __name__ == "__main__":
    key = jax.random.PRNGKey(0)
    kx, kp = jax.random.split(key)

    N, C, H, W = 8, 4, 16, 16          # batch=8, in_channels=4, in_dim=(16, 16)
    out_dim = 10

    x = jax.random.uniform(kx, (N, C, H, W), dtype=jnp.float32)
    raw_params = init_params(kp, C, (H, W), out_dim)
    kparams = prepare_params(raw_params, (H, W), C, out_dim)

    fwd = jax.jit(lambda xin: cnn_forward(xin, kparams))
    y = jax.block_until_ready(fwd(x))

    assert y.shape == (N, out_dim), y.shape
    assert y.dtype == jnp.float32

    # Loose check against an f32 reference (kernel uses bf16 weights/activations,
    # so only approximate agreement is expected).
    y_ref = jax.block_until_ready(jax.jit(lambda xin: reference_forward(xin, raw_params))(x))
    max_err = float(jnp.max(jnp.abs(y - y_ref)))
    assert max_err < 0.2, f"max abs err vs reference: {max_err}"

    print("KERNEL_OK")
</pallas_src>

<mosaic_0001>
module attributes {stable_mosaic.version = 11 : i64} {
  func.func @_fused_cnn_kernel(%arg0: i32, %arg1: memref<4x16x64xf32, #tpu.memory_space<vmem>>, %arg2: memref<640x256xbf16, #tpu.memory_space<vmem>>, %arg3: memref<1x256xf32, #tpu.memory_space<vmem>>, %arg4: memref<640x128xbf16, #tpu.memory_space<vmem>>, %arg5: memref<1x128xf32, #tpu.memory_space<vmem>>, %arg6: memref<640x64xbf16, #tpu.memory_space<vmem>>, %arg7: memref<1x64xf32, #tpu.memory_space<vmem>>, %arg8: memref<64x128xbf16, #tpu.memory_space<vmem>>, %arg9: memref<1x128xf32, #tpu.memory_space<vmem>>, %arg10: memref<128x128xbf16, #tpu.memory_space<vmem>>, %arg11: memref<1x128xf32, #tpu.memory_space<vmem>>, %arg12: memref<128x128xbf16, #tpu.memory_space<vmem>>, %arg13: memref<1x128xf32, #tpu.memory_space<vmem>>, %arg14: memref<4x1x128xf32, #tpu.memory_space<vmem>>, %arg15: memref<80x128xbf16, #tpu.memory_space<vmem>>, %arg16: memref<48x128xbf16, #tpu.memory_space<vmem>>, %arg17: memref<32x128xbf16, #tpu.memory_space<vmem>>, %arg18: memref<64x640xbf16, #tpu.memory_space<vmem>>, %arg19: memref<32x640xbf16, #tpu.memory_space<vmem>>, %arg20: memref<16x640xbf16, #tpu.memory_space<vmem>>) attributes {dimension_semantics = [#tpu.dimension_semantics<parallel>], iteration_bounds = array<i64: 2>, scalar_prefetch = 0 : i64, scratch_operands = 6 : i64, tpu.core_type = #tpu.core_type<tc>, window_params = [{transform_indices = @transform_0, window_bounds = array<i64: 4, 16, 64>}, {pipeline_mode = #tpu.pipeline_mode<synchronous>, transform_indices = @transform_1, window_bounds = array<i64: 640, 256>}, {pipeline_mode = #tpu.pipeline_mode<synchronous>, transform_indices = @transform_2, window_bounds = array<i64: 1, 256>}, {pipeline_mode = #tpu.pipeline_mode<synchronous>, transform_indices = @transform_3, window_bounds = array<i64: 640, 128>}, {pipeline_mode = #tpu.pipeline_mode<synchronous>, transform_indices = @transform_4, window_bounds = array<i64: 1, 128>}, {pipeline_mode = #tpu.pipeline_mode<synchronous>, transform_indices = @transform_5, window_bounds = array<i64: 640, 64>}, {pipeline_mode = #tpu.pipeline_mode<synchronous>, transform_indices = @transform_6, window_bounds = array<i64: 1, 64>}, {pipeline_mode = #tpu.pipeline_mode<synchronous>, transform_indices = @transform_7, window_bounds = array<i64: 64, 128>}, {pipeline_mode = #tpu.pipeline_mode<synchronous>, transform_indices = @transform_8, window_bounds = array<i64: 1, 128>}, {pipeline_mode = #tpu.pipeline_mode<synchronous>, transform_indices = @transform_9, window_bounds = array<i64: 128, 128>}, {pipeline_mode = #tpu.pipeline_mode<synchronous>, transform_indices = @transform_10, window_bounds = array<i64: 1, 128>}, {pipeline_mode = #tpu.pipeline_mode<synchronous>, transform_indices = @transform_11, window_bounds = array<i64: 128, 128>}, {pipeline_mode = #tpu.pipeline_mode<synchronous>, transform_indices = @transform_12, window_bounds = array<i64: 1, 128>}, {transform_indices = @transform_13, window_bounds = array<i64: 4, 1, 128>}]} {
    %cst = arith.constant 0.000000e+00 : bf16
    %0 = vector.broadcast %cst : bf16 to vector<8x128xbf16>
    %c0 = arith.constant 0 : index
    %c0_0 = arith.constant 0 : index
    %1 = vector.load %arg15[%c0, %c0_0] : memref<80x128xbf16, #tpu.memory_space<vmem>>, vector<8x128xbf16>
    tpu.vector_store %arg15[%c0, %c0_0], %0 {strides = array<i32>} : memref<80x128xbf16, #tpu.memory_space<vmem>>, vector<8x128xbf16>,
    %cst_1 = arith.constant 0.000000e+00 : bf16
    %2 = vector.broadcast %cst_1 : bf16 to vector<8x128xbf16>
    %c72 = arith.constant 72 : index
    %c0_2 = arith.constant 0 : index
    %3 = vector.load %arg15[%c72, %c0_2] : memref<80x128xbf16, #tpu.memory_space<vmem>>, vector<8x128xbf16>
    tpu.vector_store %arg15[%c72, %c0_2], %2 {strides = array<i32>} : memref<80x128xbf16, #tpu.memory_space<vmem>>, vector<8x128xbf16>,
    %cst_3 = arith.constant 0.000000e+00 : bf16
    %4 = vector.broadcast %cst_3 : bf16 to vector<80x64xbf16>
    %c0_4 = arith.constant 0 : index
    %c64 = arith.constant 64 : index
    %5 = vector.load %arg15[%c0_4, %c64] : memref<80x128xbf16, #tpu.memory_space<vmem>>, vector<80x64xbf16>
    tpu.vector_store %arg15[%c0_4, %c64], %4 {strides = array<i32>} : memref<80x128xbf16, #tpu.memory_space<vmem>>, vector<80x64xbf16>,
    %cst_5 = arith.constant 0.000000e+00 : bf16
    %6 = vector.broadcast %cst_5 : bf16 to vector<8x128xbf16>
    %c0_6 = arith.constant 0 : index
    %c0_7 = arith.constant 0 : index
    %7 = vector.load %arg16[%c0_6, %c0_7] : memref<48x128xbf16, #tpu.memory_space<vmem>>, vector<8x128xbf16>
    tpu.vector_store %arg16[%c0_6, %c0_7], %6 {strides = array<i32>} : memref<48x128xbf16, #tpu.memory_space<vmem>>, vector<8x128xbf16>,
    %cst_8 = arith.constant 0.000000e+00 : bf16
    %8 = vector.broadcast %cst_8 : bf16 to vector<8x128xbf16>
    %c40 = arith.constant 40 : index
    %c0_9 = arith.constant 0 : index
    %9 = vector.load %arg16[%c40, %c0_9] : memref<48x128xbf16, #tpu.memory_space<vmem>>, vector<8x128xbf16>
    tpu.vector_store %arg16[%c40, %c0_9], %8 {strides = array<i32>} : memref<48x128xbf16, #tpu.memory_space<vmem>>, vector<8x128xbf16>,
    %cst_10 = arith.constant 0.000000e+00 : bf16
    %10 = vector.broadcast %cst_10 : bf16 to vector<8x128xbf16>
    %c0_11 = arith.constant 0 : index
    %c0_12 = arith.constant 0 : index
    %11 = vector.load %arg17[%c0_11, %c0_12] : memref<32x128xbf16, #tpu.memory_space<vmem>>, vector<8x128xbf16>
    tpu.vector_store %arg17[%c0_11, %c0_12], %10 {strides = array<i32>} : memref<32x128xbf16, #tpu.memory_space<vmem>>, vector<8x128xbf16>,
    %cst_13 = arith.constant 0.000000e+00 : bf16
    %12 = vector.broadcast %cst_13 : bf16 to vector<8x128xbf16>
    %c24 = arith.constant 24 : index
    %c0_14 = arith.constant 0 : index
    %13 = vector.load %arg17[%c24, %c0_14] : memref<32x128xbf16, #tpu.memory_space<vmem>>, vector<8x128xbf16>
    tpu.vector_store %arg17[%c24, %c0_14], %12 {strides = array<i32>} : memref<32x128xbf16, #tpu.memory_space<vmem>>, vector<8x128xbf16>,
    %cst_15 = arith.constant 0.000000e+00 : bf16
    %14 = vector.broadcast %cst_15 : bf16 to vector<32x64xbf16>
    %c0_16 = arith.constant 0 : index
    %c64_17 = arith.constant 64 : index
    %15 = vector.load %arg17[%c0_16, %c64_17] : memref<32x128xbf16, #tpu.memory_space<vmem>>, vector<32x64xbf16>
    tpu.vector_store %arg17[%c0_16, %c64_17], %14 {strides = array<i32>} : memref<32x128xbf16, #tpu.memory_space<vmem>>, vector<32x64xbf16>,
    %c0_18 = arith.constant 0 : index
    %c0_19 = arith.constant 0 : index
    %c0_20 = arith.constant 0 : index
    %16 = vector.load %arg1[%c0_18, %c0_19, %c0_20] : memref<4x16x64xf32, #tpu.memory_space<vmem>>, vector<4x16x64xf32>
    %cst_21 = arith.constant 5.000000e-01 : f32
    %17 = vector.broadcast %cst_21 : f32 to vector<4x16x64xf32>
    %18 = arith.cmpf ogt, %16, %17 : vector<4x16x64xf32>
    %19 = arith.extui %18 : vector<4x16x64xi1> to vector<4x16x64xi32>
    %20 = arith.sitofp %19 : vector<4x16x64xi32> to vector<4x16x64xf32>
    %21 = arith.truncf %20 : vector<4x16x64xf32> to vector<4x16x64xbf16>
    %22 = vector.extract_strided_slice %21 {offsets = [0, 0, 0], sizes = [4, 1, 64], strides = [1, 1, 1]} : vector<4x16x64xbf16> to vector<4x1x64xbf16>
    %23 = vector.shape_cast %22 : vector<4x1x64xbf16> to vector<4x64xbf16>
    %c8 = arith.constant 8 : index
    %c0_22 = arith.constant 0 : index
    %24 = vector.load %arg15[%c8, %c0_22] : memref<80x128xbf16, #tpu.memory_space<vmem>>, vector<4x64xbf16>
    tpu.vector_store %arg15[%c8, %c0_22], %23 {strides = array<i32>} : memref<80x128xbf16, #tpu.memory_space<vmem>>, vector<4x64xbf16>,
    %25 = vector.extract_strided_slice %21 {offsets = [0, 1, 0], sizes = [4, 1, 64], strides = [1, 1, 1]} : vector<4x16x64xbf16> to vector<4x1x64xbf16>
    %26 = vector.shape_cast %25 : vector<4x1x64xbf16> to vector<4x64xbf16>
    %c12 = arith.constant 12 : index
    %c0_23 = arith.constant 0 : index
    %27 = vector.load %arg15[%c12, %c0_23] : memref<80x128xbf16, #tpu.memory_space<vmem>>, vector<4x64xbf16>
    tpu.vector_store %arg15[%c12, %c0_23], %26 {strides = array<i32>} : memref<80x128xbf16, #tpu.memory_space<vmem>>, vector<4x64xbf16>,
    %28 = vector.extract_strided_slice %21 {offsets = [0, 2, 0], sizes = [4, 1, 64], strides = [1, 1, 1]} : vector<4x16x64xbf16> to vector<4x1x64xbf16>
    %29 = vector.shape_cast %28 : vector<4x1x64xbf16> to vector<4x64xbf16>
    %c16 = arith.constant 16 : index
    %c0_24 = arith.constant 0 : index
    %30 = vector.load %arg15[%c16, %c0_24] : memref<80x128xbf16, #tpu.memory_space<vmem>>, vector<4x64xbf16>
    tpu.vector_store %arg15[%c16, %c0_24], %29 {strides = array<i32>} : memref<80x128xbf16, #tpu.memory_space<vmem>>, vector<4x64xbf16>,
    %31 = vector.extract_strided_slice %21 {offsets = [0, 3, 0], sizes = [4, 1, 64], strides = [1, 1, 1]} : vector<4x16x64xbf16> to vector<4x1x64xbf16>
    %32 = vector.shape_cast %31 : vector<4x1x64xbf16> to vector<4x64xbf16>
    %c20 = arith.constant 20 : index
    %c0_25 = arith.constant 0 : index
    %33 = vector.load %arg15[%c20, %c0_25] : memref<80x128xbf16, #tpu.memory_space<vmem>>, vector<4x64xbf16>
    tpu.vector_store %arg15[%c20, %c0_25], %32 {strides = array<i32>} : memref<80x128xbf16, #tpu.memory_space<vmem>>, vector<4x64xbf16>,
    %34 = vector.extract_strided_slice %21 {offsets = [0, 4, 0], sizes = [4, 1, 64], strides = [1, 1, 1]} : vector<4x16x64xbf16> to vector<4x1x64xbf16>
    %35 = vector.shape_cast %34 : vector<4x1x64xbf16> to vector<4x64xbf16>
    %c24_26 = arith.constant 24 : index
    %c0_27 = arith.constant 0 : index
    %36 = vector.load %arg15[%c24_26, %c0_27] : memref<80x128xbf16, #tpu.memory_space<vmem>>, vector<4x64xbf16>
    tpu.vector_store %arg15[%c24_26, %c0_27], %35 {strides = array<i32>} : memref<80x128xbf16, #tpu.memory_space<vmem>>, vector<4x64xbf16>,
    %37 = vector.extract_strided_slice %21 {offsets = [0, 5, 0], sizes = [4, 1, 64], strides = [1, 1, 1]} : vector<4x16x64xbf16> to vector<4x1x64xbf16>
    %38 = vector.shape_cast %37 : vector<4x1x64xbf16> to vector<4x64xbf16>
    %c28 = arith.constant 28 : index
    %c0_28 = arith.constant 0 : index
    %39 = vector.load %arg15[%c28, %c0_28] : memref<80x128xbf16, #tpu.memory_space<vmem>>, vector<4x64xbf16>
    tpu.vector_store %arg15[%c28, %c0_28], %38 {strides = array<i32>} : memref<80x128xbf16, #tpu.memory_space<vmem>>, vector<4x64xbf16>,
    %40 = vector.extract_strided_slice %21 {offsets = [0, 6, 0], sizes = [4, 1, 64], strides = [1, 1, 1]} : vector<4x16x64xbf16> to vector<4x1x64xbf16>
    %41 = vector.shape_cast %40 : vector<4x1x64xbf16> to vector<4x64xbf16>
    %c32 = arith.constant 32 : index
    %c0_29 = arith.constant 0 : index
    %42 = vector.load %arg15[%c32, %c0_29] : memref<80x128xbf16, #tpu.memory_space<vmem>>, vector<4x64xbf16>
    tpu.vector_store %arg15[%c32, %c0_29], %41 {strides = array<i32>} : memref<80x128xbf16, #tpu.memory_space<vmem>>, vector<4x64xbf16>,
    %43 = vector.extract_strided_slice %21 {offsets = [0, 7, 0], sizes = [4, 1, 64], strides = [1, 1, 1]} : vector<4x16x64xbf16> to vector<4x1x64xbf16>
    %44 = vector.shape_cast %43 : vector<4x1x64xbf16> to vector<4x64xbf16>
    %c36 = arith.constant 36 : index
    %c0_30 = arith.constant 0 : index
    %45 = vector.load %arg15[%c36, %c0_30] : memref<80x128xbf16, #tpu.memory_space<vmem>>, vector<4x64xbf16>
    tpu.vector_store %arg15[%c36, %c0_30], %44 {strides = array<i32>} : memref<80x128xbf16, #tpu.memory_space<vmem>>, vector<4x64xbf16>,
    %46 = vector.extract_strided_slice %21 {offsets = [0, 8, 0], sizes = [4, 1, 64], strides = [1, 1, 1]} : vector<4x16x64xbf16> to vector<4x1x64xbf16>
    %47 = vector.shape_cast %46 : vector<4x1x64xbf16> to vector<4x64xbf16>
    %c40_31 = arith.constant 40 : index
    %c0_32 = arith.constant 0 : index
    %48 = vector.load %arg15[%c40_31, %c0_32] : memref<80x128xbf16, #tpu.memory_space<vmem>>, vector<4x64xbf16>
    tpu.vector_store %arg15[%c40_31, %c0_32], %47 {strides = array<i32>} : memref<80x128xbf16, #tpu.memory_space<vmem>>, vector<4x64xbf16>,
    %49 = vector.extract_strided_slice %21 {offsets = [0, 9, 0], sizes = [4, 1, 64], strides = [1, 1, 1]} : vector<4x16x64xbf16> to vector<4x1x64xbf16>
    %50 = vector.shape_cast %49 : vector<4x1x64xbf16> to vector<4x64xbf16>
    %c44 = arith.constant 44 : index
    %c0_33 = arith.constant 0 : index
    %51 = vector.load %arg15[%c44, %c0_33] : memref<80x128xbf16, #tpu.memory_space<vmem>>, vector<4x64xbf16>
    tpu.vector_store %arg15[%c44, %c0_33], %50 {strides = array<i32>} : memref<80x128xbf16, #tpu.memory_space<vmem>>, vector<4x64xbf16>,
    %52 = vector.extract_strided_slice %21 {offsets = [0, 10, 0], sizes = [4, 1, 64], strides = [1, 1, 1]} : vector<4x16x64xbf16> to vector<4x1x64xbf16>
    %53 = vector.shape_cast %52 : vector<4x1x64xbf16> to vector<4x64xbf16>
    %c48 = arith.constant 48 : index
    %c0_34 = arith.constant 0 : index
    %54 = vector.load %arg15[%c48, %c0_34] : memref<80x128xbf16, #tpu.memory_space<vmem>>, vector<4x64xbf16>
    tpu.vector_store %arg15[%c48, %c0_34], %53 {strides = array<i32>} : memref<80x128xbf16, #tpu.memory_space<vmem>>, vector<4x64xbf16>,
    %55 = vector.extract_strided_slice %21 {offsets = [0, 11, 0], sizes = [4, 1, 64], strides = [1, 1, 1]} : vector<4x16x64xbf16> to vector<4x1x64xbf16>
    %56 = vector.shape_cast %55 : vector<4x1x64xbf16> to vector<4x64xbf16>
    %c52 = arith.constant 52 : index
    %c0_35 = arith.constant 0 : index
    %57 = vector.load %arg15[%c52, %c0_35] : memref<80x128xbf16, #tpu.memory_space<vmem>>, vector<4x64xbf16>
    tpu.vector_store %arg15[%c52, %c0_35], %56 {strides = array<i32>} : memref<80x128xbf16, #tpu.memory_space<vmem>>, vector<4x64xbf16>,
    %58 = vector.extract_strided_slice %21 {offsets = [0, 12, 0], sizes = [4, 1, 64], strides = [1, 1, 1]} : vector<4x16x64xbf16> to vector<4x1x64xbf16>
    %59 = vector.shape_cast %58 : vector<4x1x64xbf16> to vector<4x64xbf16>
    %c56 = arith.constant 56 : index
    %c0_36 = arith.constant 0 : index
    %60 = vector.load %arg15[%c56, %c0_36] : memref<80x128xbf16, #tpu.memory_space<vmem>>, vector<4x64xbf16>
    tpu.vector_store %arg15[%c56, %c0_36], %59 {strides = array<i32>} : memref<80x128xbf16, #tpu.memory_space<vmem>>, vector<4x64xbf16>,
    %61 = vector.extract_strided_slice %21 {offsets = [0, 13, 0], sizes = [4, 1, 64], strides = [1, 1, 1]} : vector<4x16x64xbf16> to vector<4x1x64xbf16>
    %62 = vector.shape_cast %61 : vector<4x1x64xbf16> to vector<4x64xbf16>
    %c60 = arith.constant 60 : index
    %c0_37 = arith.constant 0 : index
    %63 = vector.load %arg15[%c60, %c0_37] : memref<80x128xbf16, #tpu.memory_space<vmem>>, vector<4x64xbf16>
    tpu.vector_store %arg15[%c60, %c0_37], %62 {strides = array<i32>} : memref<80x128xbf16, #tpu.memory_space<vmem>>, vector<4x64xbf16>,
    %64 = vector.extract_strided_slice %21 {offsets = [0, 14, 0], sizes = [4, 1, 64], strides = [1, 1, 1]} : vector<4x16x64xbf16> to vector<4x1x64xbf16>
    %65 = vector.shape_cast %64 : vector<4x1x64xbf16> to vector<4x64xbf16>
    %c64_38 = arith.constant 64 : index
    %c0_39 = arith.constant 0 : index
    %66 = vector.load %arg15[%c64_38, %c0_39] : memref<80x128xbf16, #tpu.memory_space<vmem>>, vector<4x64xbf16>
    tpu.vector_store %arg15[%c64_38, %c0_39], %65 {strides = array<i32>} : memref<80x128xbf16, #tpu.memory_space<vmem>>, vector<4x64xbf16>,
    %67 = vector.extract_strided_slice %21 {offsets = [0, 15, 0], sizes = [4, 1, 64], strides = [1, 1, 1]} : vector<4x16x64xbf16> to vector<4x1x64xbf16>
    %68 = vector.shape_cast %67 : vector<4x1x64xbf16> to vector<4x64xbf16>
    %c68 = arith.constant 68 : index
    %c0_40 = arith.constant 0 : index
    %69 = vector.load %arg15[%c68, %c0_40] : memref<80x128xbf16, #tpu.memory_space<vmem>>, vector<4x64xbf16>
    tpu.vector_store %arg15[%c68, %c0_40], %68 {strides = array<i32>} : memref<80x128xbf16, #tpu.memory_space<vmem>>, vector<4x64xbf16>,
    %c0_41 = arith.constant 0 : index
    %c0_42 = arith.constant 0 : index
    %70 = vector.load %arg15[%c0_41, %c0_42] : memref<80x128xbf16, #tpu.memory_space<vmem>>, vector<64x128xbf16>
    %c0_43 = arith.constant 0 : index
    %c0_44 = arith.constant 0 : index
    %71 = vector.load %arg18[%c0_43, %c0_44] : memref<64x640xbf16, #tpu.memory_space<vmem>>, vector<64x128xbf16>
    tpu.vector_store %arg18[%c0_43, %c0_44], %70 {strides = array<i32>} : memref<64x640xbf16, #tpu.memory_space<vmem>>, vector<64x128xbf16>,
    %c4 = arith.constant 4 : index
    %c0_45 = arith.constant 0 : index
    %72 = vector.load %arg15[%c4, %c0_45] : memref<80x128xbf16, #tpu.memory_space<vmem>>, vector<64x128xbf16>
    %c0_46 = arith.constant 0 : index
    %c128 = arith.constant 128 : index
    %73 = vector.load %arg18[%c0_46, %c128] : memref<64x640xbf16, #tpu.memory_space<vmem>>, vector<64x128xbf16>
    tpu.vector_store %arg18[%c0_46, %c128], %72 {strides = array<i32>} : memref<64x640xbf16, #tpu.memory_space<vmem>>, vector<64x128xbf16>,
    %c8_47 = arith.constant 8 : index
    %c0_48 = arith.constant 0 : index
    %74 = vector.load %arg15[%c8_47, %c0_48] : memref<80x128xbf16, #tpu.memory_space<vmem>>, vector<64x128xbf16>
    %c0_49 = arith.constant 0 : index
    %c256 = arith.constant 256 : index
    %75 = vector.load %arg18[%c0_49, %c256] : memref<64x640xbf16, #tpu.memory_space<vmem>>, vector<64x128xbf16>
    tpu.vector_store %arg18[%c0_49, %c256], %74 {strides = array<i32>} : memref<64x640xbf16, #tpu.memory_space<vmem>>, vector<64x128xbf16>,
    %c12_50 = arith.constant 12 : index
    %c0_51 = arith.constant 0 : index
    %76 = vector.load %arg15[%c12_50, %c0_51] : memref<80x128xbf16, #tpu.memory_space<vmem>>, vector<64x128xbf16>
    %c0_52 = arith.constant 0 : index
    %c384 = arith.constant 384 : index
    %77 = vector.load %arg18[%c0_52, %c384] : memref<64x640xbf16, #tpu.memory_space<vmem>>, vector<64x128xbf16>
    tpu.vector_store %arg18[%c0_52, %c384], %76 {strides = array<i32>} : memref<64x640xbf16, #tpu.memory_space<vmem>>, vector<64x128xbf16>,
    %c16_53 = arith.constant 16 : index
    %c0_54 = arith.constant 0 : index
    %78 = vector.load %arg15[%c16_53, %c0_54] : memref<80x128xbf16, #tpu.memory_space<vmem>>, vector<64x128xbf16>
    %c0_55 = arith.constant 0 : index
    %c512 = arith.constant 512 : index
    %79 = vector.load %arg18[%c0_55, %c512] : memref<64x640xbf16, #tpu.memory_space<vmem>>, vector<64x128xbf16>
    tpu.vector_store %arg18[%c0_55, %c512], %78 {strides = array<i32>} : memref<64x640xbf16, #tpu.memory_space<vmem>>, vector<64x128xbf16>,
    %c0_56 = arith.constant 0 : index
    %c0_57 = arith.constant 0 : index
    %80 = vector.load %arg18[%c0_56, %c0_57] : memref<64x640xbf16, #tpu.memory_space<vmem>>, vector<64x640xbf16>
    %c0_58 = arith.constant 0 : index
    %c0_59 = arith.constant 0 : index
    %81 = vector.load %arg2[%c0_58, %c0_59] : memref<640x256xbf16, #tpu.memory_space<vmem>>, vector<640x256xbf16>
    %cst_60 = arith.constant dense<0.000000e+00> : vector<64x256xf32>
    %82 = tpu.matmul %80, %81, %cst_60 {dimension_numbers = #tpu.dot_dimension_numbers<[1], [0], [0], [1], [0, 0, 1, 1], [], []>} : vector<64x640xbf16>, vector<640x256xbf16>, vector<64x256xf32> -> vector<64x256xf32>
    %c0_61 = arith.constant 0 : index
    %c0_62 = arith.constant 0 : index
    %83 = vector.load %arg3[%c0_61, %c0_62] : memref<1x256xf32, #tpu.memory_space<vmem>>, vector<1x256xf32>
    %84 = vector.broadcast %83 : vector<1x256xf32> to vector<64x256xf32>
    %85 = arith.addf %82, %84 : vector<64x256xf32>
    %cst_63 = arith.constant 0.000000e+00 : f32
    %86 = vector.broadcast %cst_63 : f32 to vector<64x256xf32>
    %87 = arith.maximumf %85, %86 : vector<64x256xf32>
    %88 = vector.extract_strided_slice %87 {offsets = [0, 0], sizes = [64, 128], strides = [1, 1]} : vector<64x256xf32> to vector<64x128xf32>
    %89 = vector.extract_strided_slice %87 {offsets = [0, 128], sizes = [64, 128], strides = [1, 1]} : vector<64x256xf32> to vector<64x128xf32>
    %90 = arith.maximumf %88, %89 : vector<64x128xf32>
    %91 = vector.extract_strided_slice %90 {offsets = [0, 0], sizes = [4, 128], strides = [1, 1]} : vector<64x128xf32> to vector<4x128xf32>
    %92 = vector.extract_strided_slice %90 {offsets = [4, 0], sizes = [4, 128], strides = [1, 1]} : vector<64x128xf32> to vector<4x128xf32>
    %93 = arith.maximumf %91, %92 : vector<4x128xf32>
    %94 = arith.truncf %93 : vector<4x128xf32> to vector<4x128xbf16>
    %c8_64 = arith.constant 8 : index
    %c0_65 = arith.constant 0 : index
    %95 = vector.load %arg16[%c8_64, %c0_65] : memref<48x128xbf16, #tpu.memory_space<vmem>>, vector<4x128xbf16>
    tpu.vector_store %arg16[%c8_64, %c0_65], %94 {strides = array<i32>} : memref<48x128xbf16, #tpu.memory_space<vmem>>, vector<4x128xbf16>,
    %96 = vector.extract_strided_slice %90 {offsets = [8, 0], sizes = [4, 128], strides = [1, 1]} : vector<64x128xf32> to vector<4x128xf32>
    %97 = vector.extract_strided_slice %90 {offsets = [12, 0], sizes = [4, 128], strides = [1, 1]} : vector<64x128xf32> to vector<4x128xf32>
    %98 = arith.maximumf %96, %97 : vector<4x128xf32>
    %99 = arith.truncf %98 : vector<4x128xf32> to vector<4x128xbf16>
    %c12_66 = arith.constant 12 : index
    %c0_67 = arith.constant 0 : index
    %100 = vector.load %arg16[%c12_66, %c0_67] : memref<48x128xbf16, #tpu.memory_space<vmem>>, vector<4x128xbf16>
    tpu.vector_store %arg16[%c12_66, %c0_67], %99 {strides = array<i32>} : memref<48x128xbf16, #tpu.memory_space<vmem>>, vector<4x128xbf16>,
    %101 = vector.extract_strided_slice %90 {offsets = [16, 0], sizes = [4, 128], strides = [1, 1]} : vector<64x128xf32> to vector<4x128xf32>
    %102 = vector.extract_strided_slice %90 {offsets = [20, 0], sizes = [4, 128], strides = [1, 1]} : vector<64x128xf32> to vector<4x128xf32>
    %103 = arith.maximumf %101, %102 : vector<4x128xf32>
    %104 = arith.truncf %103 : vector<4x128xf32> to vector<4x128xbf16>
    %c16_68 = arith.constant 16 : index
    %c0_69 = arith.constant 0 : index
    %105 = vector.load %arg16[%c16_68, %c0_69] : memref<48x128xbf16, #tpu.memory_space<vmem>>, vector<4x128xbf16>
    tpu.vector_store %arg16[%c16_68, %c0_69], %104 {strides = array<i32>} : memref<48x128xbf16, #tpu.memory_space<vmem>>, vector<4x128xbf16>,
    %106 = vector.extract_strided_slice %90 {offsets = [24, 0], sizes = [4, 128], strides = [1, 1]} : vector<64x128xf32> to vector<4x128xf32>
    %107 = vector.extract_strided_slice %90 {offsets = [28, 0], sizes = [4, 128], strides = [1, 1]} : vector<64x128xf32> to vector<4x128xf32>
    %108 = arith.maximumf %106, %107 : vector<4x128xf32>
    %109 = arith.truncf %108 : vector<4x128xf32> to vector<4x128xbf16>
    %c20_70 = arith.constant 20 : index
    %c0_71 = arith.constant 0 : index
    %110 = vector.load %arg16[%c20_70, %c0_71] : memref<48x128xbf16, #tpu.memory_space<vmem>>, vector<4x128xbf16>
    tpu.vector_store %arg16[%c20_70, %c0_71], %109 {strides = array<i32>} : memref<48x128xbf16, #tpu.memory_space<vmem>>, vector<4x128xbf16>,
    %111 = vector.extract_strided_slice %90 {offsets = [32, 0], sizes = [4, 128], strides = [1, 1]} : vector<64x128xf32> to vector<4x128xf32>
    %112 = vector.extract_strided_slice %90 {offsets = [36, 0], sizes = [4, 128], strides = [1, 1]} : vector<64x128xf32> to vector<4x128xf32>
    %113 = arith.maximumf %111, %112 : vector<4x128xf32>
    %114 = arith.truncf %113 : vector<4x128xf32> to vector<4x128xbf16>
    %c24_72 = arith.constant 24 : index
    %c0_73 = arith.constant 0 : index
    %115 = vector.load %arg16[%c24_72, %c0_73] : memref<48x128xbf16, #tpu.memory_space<vmem>>, vector<4x128xbf16>
    tpu.vector_store %arg16[%c24_72, %c0_73], %114 {strides = array<i32>} : memref<48x128xbf16, #tpu.memory_space<vmem>>, vector<4x128xbf16>,
    %116 = vector.extract_strided_slice %90 {offsets = [40, 0], sizes = [4, 128], strides = [1, 1]} : vector<64x128xf32> to vector<4x128xf32>
    %117 = vector.extract_strided_slice %90 {offsets = [44, 0], sizes = [4, 128], strides = [1, 1]} : vector<64x128xf32> to vector<4x128xf32>
    %118 = arith.maximumf %116, %117 : vector<4x128xf32>
    %119 = arith.truncf %118 : vector<4x128xf32> to vector<4x128xbf16>
    %c28_74 = arith.constant 28 : index
    %c0_75 = arith.constant 0 : index
    %120 = vector.load %arg16[%c28_74, %c0_75] : memref<48x128xbf16, #tpu.memory_space<vmem>>, vector<4x128xbf16>
    tpu.vector_store %arg16[%c28_74, %c0_75], %119 {strides = array<i32>} : memref<48x128xbf16, #tpu.memory_space<vmem>>, vector<4x128xbf16>,
    %121 = vector.extract_strided_slice %90 {offsets = [48, 0], sizes = [4, 128], strides = [1, 1]} : vector<64x128xf32> to vector<4x128xf32>
    %122 = vector.extract_strided_slice %90 {offsets = [52, 0], sizes = [4, 128], strides = [1, 1]} : vector<64x128xf32> to vector<4x128xf32>
    %123 = arith.maximumf %121, %122 : vector<4x128xf32>
    %124 = arith.truncf %123 : vector<4x128xf32> to vector<4x128xbf16>
    %c32_76 = arith.constant 32 : index
    %c0_77 = arith.constant 0 : index
    %125 = vector.load %arg16[%c32_76, %c0_77] : memref<48x128xbf16, #tpu.memory_space<vmem>>, vector<4x128xbf16>
    tpu.vector_store %arg16[%c32_76, %c0_77], %124 {strides = array<i32>} : memref<48x128xbf16, #tpu.memory_space<vmem>>, vector<4x128xbf16>,
    %126 = vector.extract_strided_slice %90 {offsets = [56, 0], sizes = [4, 128], strides = [1, 1]} : vector<64x128xf32> to vector<4x128xf32>
    %127 = vector.extract_strided_slice %90 {offsets = [60, 0], sizes = [4, 128], strides = [1, 1]} : vector<64x128xf32> to vector<4x128xf32>
    %128 = arith.maximumf %126, %127 : vector<4x128xf32>
    %129 = arith.truncf %128 : vector<4x128xf32> to vector<4x128xbf16>
    %c36_78 = arith.constant 36 : index
    %c0_79 = arith.constant 0 : index
    %130 = vector.load %arg16[%c36_78, %c0_79] : memref<48x128xbf16, #tpu.memory_space<vmem>>, vector<4x128xbf16>
    tpu.vector_store %arg16[%c36_78, %c0_79], %129 {strides = array<i32>} : memref<48x128xbf16, #tpu.memory_space<vmem>>, vector<4x128xbf16>,
    %c0_80 = arith.constant 0 : index
    %c0_81 = arith.constant 0 : index
    %131 = vector.load %arg16[%c0_80, %c0_81] : memref<48x128xbf16, #tpu.memory_space<vmem>>, vector<32x128xbf16>
    %c0_82 = arith.constant 0 : index
    %c0_83 = arith.constant 0 : index
    %132 = vector.load %arg19[%c0_82, %c0_83] : memref<32x640xbf16, #tpu.memory_space<vmem>>, vector<32x128xbf16>
    tpu.vector_store %arg19[%c0_82, %c0_83], %131 {strides = array<i32>} : memref<32x640xbf16, #tpu.memory_space<vmem>>, vector<32x128xbf16>,
    %c4_84 = arith.constant 4 : index
    %c0_85 = arith.constant 0 : index
    %133 = vector.load %arg16[%c4_84, %c0_85] : memref<48x128xbf16, #tpu.memory_space<vmem>>, vector<32x128xbf16>
    %c0_86 = arith.constant 0 : index
    %c128_87 = arith.constant 128 : index
    %134 = vector.load %arg19[%c0_86, %c128_87] : memref<32x640xbf16, #tpu.memory_space<vmem>>, vector<32x128xbf16>
    tpu.vector_store %arg19[%c0_86, %c128_87], %133 {strides = array<i32>} : memref<32x640xbf16, #tpu.memory_space<vmem>>, vector<32x128xbf16>,
    %c8_88 = arith.constant 8 : index
    %c0_89 = arith.constant 0 : index
    %135 = vector.load %arg16[%c8_88, %c0_89] : memref<48x128xbf16, #tpu.memory_space<vmem>>, vector<32x128xbf16>
    %c0_90 = arith.constant 0 : index
    %c256_91 = arith.constant 256 : index
    %136 = vector.load %arg19[%c0_90, %c256_91] : memref<32x640xbf16, #tpu.memory_space<vmem>>, vector<32x128xbf16>
    tpu.vector_store %arg19[%c0_90, %c256_91], %135 {strides = array<i32>} : memref<32x640xbf16, #tpu.memory_space<vmem>>, vector<32x128xbf16>,
    %c12_92 = arith.constant 12 : index
    %c0_93 = arith.constant 0 : index
    %137 = vector.load %arg16[%c12_92, %c0_93] : memref<48x128xbf16, #tpu.memory_space<vmem>>, vector<32x128xbf16>
    %c0_94 = arith.constant 0 : index
    %c384_95 = arith.constant 384 : index
    %138 = vector.load %arg19[%c0_94, %c384_95] : memref<32x640xbf16, #tpu.memory_space<vmem>>, vector<32x128xbf16>
    tpu.vector_store %arg19[%c0_94, %c384_95], %137 {strides = array<i32>} : memref<32x640xbf16, #tpu.memory_space<vmem>>, vector<32x128xbf16>,
    %c16_96 = arith.constant 16 : index
    %c0_97 = arith.constant 0 : index
    %139 = vector.load %arg16[%c16_96, %c0_97] : memref<48x128xbf16, #tpu.memory_space<vmem>>, vector<32x128xbf16>
    %c0_98 = arith.constant 0 : index
    %c512_99 = arith.constant 512 : index
    %140 = vector.load %arg19[%c0_98, %c512_99] : memref<32x640xbf16, #tpu.memory_space<vmem>>, vector<32x128xbf16>
    tpu.vector_store %arg19[%c0_98, %c512_99], %139 {strides = array<i32>} : memref<32x640xbf16, #tpu.memory_space<vmem>>, vector<32x128xbf16>,
    %c0_100 = arith.constant 0 : index
    %c0_101 = arith.constant 0 : index
    %141 = vector.load %arg19[%c0_100, %c0_101] : memref<32x640xbf16, #tpu.memory_space<vmem>>, vector<32x640xbf16>
    %c0_102 = arith.constant 0 : index
    %c0_103 = arith.constant 0 : index
    %142 = vector.load %arg4[%c0_102, %c0_103] : memref<640x128xbf16, #tpu.memory_space<vmem>>, vector<640x128xbf16>
    %cst_104 = arith.constant dense<0.000000e+00> : vector<32x128xf32>
    %143 = tpu.matmul %141, %142, %cst_104 {dimension_numbers = #tpu.dot_dimension_numbers<[1], [0], [0], [1], [0, 0, 1, 1], [], []>} : vector<32x640xbf16>, vector<640x128xbf16>, vector<32x128xf32> -> vector<32x128xf32>
    %c0_105 = arith.constant 0 : index
    %c0_106 = arith.constant 0 : index
    %144 = vector.load %arg5[%c0_105, %c0_106] : memref<1x128xf32, #tpu.memory_space<vmem>>, vector<1x128xf32>
    %145 = vector.broadcast %144 : vector<1x128xf32> to vector<32x128xf32>
    %146 = arith.addf %143, %145 : vector<32x128xf32>
    %cst_107 = arith.constant 0.000000e+00 : f32
    %147 = vector.broadcast %cst_107 : f32 to vector<32x128xf32>
    %148 = arith.maximumf %146, %147 : vector<32x128xf32>
    %149 = vector.extract_strided_slice %148 {offsets = [0, 0], sizes = [32, 64], strides = [1, 1]} : vector<32x128xf32> to vector<32x64xf32>
    %150 = vector.extract_strided_slice %148 {offsets = [0, 64], sizes = [32, 64], strides = [1, 1]} : vector<32x128xf32> to vector<32x64xf32>
    %151 = arith.maximumf %149, %150 : vector<32x64xf32>
    %152 = vector.extract_strided_slice %151 {offsets = [0, 0], sizes = [4, 64], strides = [1, 1]} : vector<32x64xf32> to vector<4x64xf32>
    %153 = vector.extract_strided_slice %151 {offsets = [4, 0], sizes = [4, 64], strides = [1, 1]} : vector<32x64xf32> to vector<4x64xf32>
    %154 = arith.maximumf %152, %153 : vector<4x64xf32>
    %155 = arith.truncf %154 : vector<4x64xf32> to vector<4x64xbf16>
    %c8_108 = arith.constant 8 : index
    %c0_109 = arith.constant 0 : index
    %156 = vector.load %arg17[%c8_108, %c0_109] : memref<32x128xbf16, #tpu.memory_space<vmem>>, vector<4x64xbf16>
    tpu.vector_store %arg17[%c8_108, %c0_109], %155 {strides = array<i32>} : memref<32x128xbf16, #tpu.memory_space<vmem>>, vector<4x64xbf16>,
    %157 = vector.extract_strided_slice %151 {offsets = [8, 0], sizes = [4, 64], strides = [1, 1]} : vector<32x64xf32> to vector<4x64xf32>
    %158 = vector.extract_strided_slice %151 {offsets = [12, 0], sizes = [4, 64], strides = [1, 1]} : vector<32x64xf32> to vector<4x64xf32>
    %159 = arith.maximumf %157, %158 : vector<4x64xf32>
    %160 = arith.truncf %159 : vector<4x64xf32> to vector<4x64xbf16>
    %c12_110 = arith.constant 12 : index
    %c0_111 = arith.constant 0 : index
    %161 = vector.load %arg17[%c12_110, %c0_111] : memref<32x128xbf16, #tpu.memory_space<vmem>>, vector<4x64xbf16>
    tpu.vector_store %arg17[%c12_110, %c0_111], %160 {strides = array<i32>} : memref<32x128xbf16, #tpu.memory_space<vmem>>, vector<4x64xbf16>,
    %162 = vector.extract_strided_slice %151 {offsets = [16, 0], sizes = [4, 64], strides = [1, 1]} : vector<32x64xf32> to vector<4x64xf32>
    %163 = vector.extract_strided_slice %151 {offsets = [20, 0], sizes = [4, 64], strides = [1, 1]} : vector<32x64xf32> to vector<4x64xf32>
    %164 = arith.maximumf %162, %163 : vector<4x64xf32>
    %165 = arith.truncf %164 : vector<4x64xf32> to vector<4x64xbf16>
    %c16_112 = arith.constant 16 : index
    %c0_113 = arith.constant 0 : index
    %166 = vector.load %arg17[%c16_112, %c0_113] : memref<32x128xbf16, #tpu.memory_space<vmem>>, vector<4x64xbf16>
    tpu.vector_store %arg17[%c16_112, %c0_113], %165 {strides = array<i32>} : memref<32x128xbf16, #tpu.memory_space<vmem>>, vector<4x64xbf16>,
    %167 = vector.extract_strided_slice %151 {offsets = [24, 0], sizes = [4, 64], strides = [1, 1]} : vector<32x64xf32> to vector<4x64xf32>
    %168 = vector.extract_strided_slice %151 {offsets = [28, 0], sizes = [4, 64], strides = [1, 1]} : vector<32x64xf32> to vector<4x64xf32>
    %169 = arith.maximumf %167, %168 : vector<4x64xf32>
    %170 = arith.truncf %169 : vector<4x64xf32> to vector<4x64xbf16>
    %c20_114 = arith.constant 20 : index
    %c0_115 = arith.constant 0 : index
    %171 = vector.load %arg17[%c20_114, %c0_115] : memref<32x128xbf16, #tpu.memory_space<vmem>>, vector<4x64xbf16>
    tpu.vector_store %arg17[%c20_114, %c0_115], %170 {strides = array<i32>} : memref<32x128xbf16, #tpu.memory_space<vmem>>, vector<4x64xbf16>,
    %c0_116 = arith.constant 0 : index
    %c0_117 = arith.constant 0 : index
    %172 = vector.load %arg17[%c0_116, %c0_117] : memref<32x128xbf16, #tpu.memory_space<vmem>>, vector<16x128xbf16>
    %c0_118 = arith.constant 0 : index
    %c0_119 = arith.constant 0 : index
    %173 = vector.load %arg20[%c0_118, %c0_119] : memref<16x640xbf16, #tpu.memory_space<vmem>>, vector<16x128xbf16>
    tpu.vector_store %arg20[%c0_118, %c0_119], %172 {strides = array<i32>} : memref<16x640xbf16, #tpu.memory_space<vmem>>, vector<16x128xbf16>,
    %c4_120 = arith.constant 4 : index
    %c0_121 = arith.constant 0 : index
    %174 = vector.load %arg17[%c4_120, %c0_121] : memref<32x128xbf16, #tpu.memory_space<vmem>>, vector<16x128xbf16>
    %c0_122 = arith.constant 0 : index
    %c128_123 = arith.constant 128 : index
    %175 = vector.load %arg20[%c0_122, %c128_123] : memref<16x640xbf16, #tpu.memory_space<vmem>>, vector<16x128xbf16>
    tpu.vector_store %arg20[%c0_122, %c128_123], %174 {strides = array<i32>} : memref<16x640xbf16, #tpu.memory_space<vmem>>, vector<16x128xbf16>,
    %c8_124 = arith.constant 8 : index
    %c0_125 = arith.constant 0 : index
    %176 = vector.load %arg17[%c8_124, %c0_125] : memref<32x128xbf16, #tpu.memory_space<vmem>>, vector<16x128xbf16>
    %c0_126 = arith.constant 0 : index
    %c256_127 = arith.constant 256 : index
    %177 = vector.load %arg20[%c0_126, %c256_127] : memref<16x640xbf16, #tpu.memory_space<vmem>>, vector<16x128xbf16>
    tpu.vector_store %arg20[%c0_126, %c256_127], %176 {strides = array<i32>} : memref<16x640xbf16, #tpu.memory_space<vmem>>, vector<16x128xbf16>,
    %c12_128 = arith.constant 12 : index
    %c0_129 = arith.constant 0 : index
    %178 = vector.load %arg17[%c12_128, %c0_129] : memref<32x128xbf16, #tpu.memory_space<vmem>>, vector<16x128xbf16>
    %c0_130 = arith.constant 0 : index
    %c384_131 = arith.constant 384 : index
    %179 = vector.load %arg20[%c0_130, %c384_131] : memref<16x640xbf16, #tpu.memory_space<vmem>>, vector<16x128xbf16>
    tpu.vector_store %arg20[%c0_130, %c384_131], %178 {strides = array<i32>} : memref<16x640xbf16, #tpu.memory_space<vmem>>, vector<16x128xbf16>,
    %c16_132 = arith.constant 16 : index
    %c0_133 = arith.constant 0 : index
    %180 = vector.load %arg17[%c16_132, %c0_133] : memref<32x128xbf16, #tpu.memory_space<vmem>>, vector<16x128xbf16>
    %c0_134 = arith.constant 0 : index
    %c512_135 = arith.constant 512 : index
    %181 = vector.load %arg20[%c0_134, %c512_135] : memref<16x640xbf16, #tpu.memory_space<vmem>>, vector<16x128xbf16>
    tpu.vector_store %arg20[%c0_134, %c512_135], %180 {strides = array<i32>} : memref<16x640xbf16, #tpu.memory_space<vmem>>, vector<16x128xbf16>,
    %c0_136 = arith.constant 0 : index
    %c0_137 = arith.constant 0 : index
    %182 = vector.load %arg20[%c0_136, %c0_137] : memref<16x640xbf16, #tpu.memory_space<vmem>>, vector<16x640xbf16>
    %c0_138 = arith.constant 0 : index
    %c0_139 = arith.constant 0 : index
    %183 = vector.load %arg6[%c0_138, %c0_139] : memref<640x64xbf16, #tpu.memory_space<vmem>>, vector<640x64xbf16>
    %cst_140 = arith.constant dense<0.000000e+00> : vector<16x64xf32>
    %184 = tpu.matmul %182, %183, %cst_140 {dimension_numbers = #tpu.dot_dimension_numbers<[1], [0], [0], [1], [0, 0, 1, 1], [], []>} : vector<16x640xbf16>, vector<640x64xbf16>, vector<16x64xf32> -> vector<16x64xf32>
    %c0_141 = arith.constant 0 : index
    %c0_142 = arith.constant 0 : index
    %185 = vector.load %arg7[%c0_141, %c0_142] : memref<1x64xf32, #tpu.memory_space<vmem>>, vector<1x64xf32>
    %186 = vector.broadcast %185 : vector<1x64xf32> to vector<16x64xf32>
    %187 = arith.addf %184, %186 : vector<16x64xf32>
    %cst_143 = arith.constant 0.000000e+00 : f32
    %188 = vector.broadcast %cst_143 : f32 to vector<16x64xf32>
    %189 = arith.maximumf %187, %188 : vector<16x64xf32>
    %190 = vector.extract_strided_slice %189 {offsets = [0, 0], sizes = [16, 32], strides = [1, 1]} : vector<16x64xf32> to vector<16x32xf32>
    %191 = vector.extract_strided_slice %189 {offsets = [0, 32], sizes = [16, 32], strides = [1, 1]} : vector<16x64xf32> to vector<16x32xf32>
    %192 = arith.maximumf %190, %191 : vector<16x32xf32>
    %193 = vector.extract_strided_slice %192 {offsets = [0, 0], sizes = [4, 32], strides = [1, 1]} : vector<16x32xf32> to vector<4x32xf32>
    %194 = vector.extract_strided_slice %192 {offsets = [4, 0], sizes = [4, 32], strides = [1, 1]} : vector<16x32xf32> to vector<4x32xf32>
    %195 = arith.maximumf %193, %194 : vector<4x32xf32>
    %196 = arith.truncf %195 : vector<4x32xf32> to vector<4x32xbf16>
    %197 = vector.extract_strided_slice %192 {offsets = [8, 0], sizes = [4, 32], strides = [1, 1]} : vector<16x32xf32> to vector<4x32xf32>
    %198 = vector.extract_strided_slice %192 {offsets = [12, 0], sizes = [4, 32], strides = [1, 1]} : vector<16x32xf32> to vector<4x32xf32>
    %199 = arith.maximumf %197, %198 : vector<4x32xf32>
    %200 = arith.truncf %199 : vector<4x32xf32> to vector<4x32xbf16>
    %201 = tpu.concatenate %196, %200 in 1 : vector<4x32xbf16>, vector<4x32xbf16> -> vector<4x64xbf16>
    %c0_144 = arith.constant 0 : index
    %c0_145 = arith.constant 0 : index
    %202 = vector.load %arg8[%c0_144, %c0_145] : memref<64x128xbf16, #tpu.memory_space<vmem>>, vector<64x128xbf16>
    %cst_146 = arith.constant dense<0.000000e+00> : vector<4x128xf32>
    %203 = tpu.matmul %201, %202, %cst_146 {dimension_numbers = #tpu.dot_dimension_numbers<[1], [0], [0], [1], [0, 0, 1, 1], [], []>} : vector<4x64xbf16>, vector<64x128xbf16>, vector<4x128xf32> -> vector<4x128xf32>
    %c0_147 = arith.constant 0 : index
    %c0_148 = arith.constant 0 : index
    %204 = vector.load %arg9[%c0_147, %c0_148] : memref<1x128xf32, #tpu.memory_space<vmem>>, vector<1x128xf32>
    %205 = vector.broadcast %204 : vector<1x128xf32> to vector<4x128xf32>
    %206 = arith.addf %203, %205 : vector<4x128xf32>
    %cst_149 = arith.constant 0.000000e+00 : f32
    %207 = vector.broadcast %cst_149 : f32 to vector<4x128xf32>
    %208 = arith.maximumf %206, %207 : vector<4x128xf32>
    %209 = arith.truncf %208 : vector<4x128xf32> to vector<4x128xbf16>
    %c0_150 = arith.constant 0 : index
    %c0_151 = arith.constant 0 : index
    %210 = vector.load %arg10[%c0_150, %c0_151] : memref<128x128xbf16, #tpu.memory_space<vmem>>, vector<128x128xbf16>
    %cst_152 = arith.constant dense<0.000000e+00> : vector<4x128xf32>
    %211 = tpu.matmul %209, %210, %cst_152 {dimension_numbers = #tpu.dot_dimension_numbers<[1], [0], [0], [1], [0, 0, 1, 1], [], []>} : vector<4x128xbf16>, vector<128x128xbf16>, vector<4x128xf32> -> vector<4x128xf32>
    %c0_153 = arith.constant 0 : index
    %c0_154 = arith.constant 0 : index
    %212 = vector.load %arg11[%c0_153, %c0_154] : memref<1x128xf32, #tpu.memory_space<vmem>>, vector<1x128xf32>
    %213 = vector.broadcast %212 : vector<1x128xf32> to vector<4x128xf32>
    %214 = arith.addf %211, %213 : vector<4x128xf32>
    %cst_155 = arith.constant 0.000000e+00 : f32
    %215 = vector.broadcast %cst_155 : f32 to vector<4x128xf32>
    %216 = arith.maximumf %214, %215 : vector<4x128xf32>
    %217 = arith.truncf %216 : vector<4x128xf32> to vector<4x128xbf16>
    %c0_156 = arith.constant 0 : index
    %c0_157 = arith.constant 0 : index
    %218 = vector.load %arg12[%c0_156, %c0_157] : memref<128x128xbf16, #tpu.memory_space<vmem>>, vector<128x128xbf16>
    %cst_158 = arith.constant dense<0.000000e+00> : vector<4x128xf32>
    %219 = tpu.matmul %217, %218, %cst_158 {dimension_numbers = #tpu.dot_dimension_numbers<[1], [0], [0], [1], [0, 0, 1, 1], [], []>} : vector<4x128xbf16>, vector<128x128xbf16>, vector<4x128xf32> -> vector<4x128xf32>
    %c0_159 = arith.constant 0 : index
    %c0_160 = arith.constant 0 : index
    %220 = vector.load %arg13[%c0_159, %c0_160] : memref<1x128xf32, #tpu.memory_space<vmem>>, vector<1x128xf32>
    %221 = vector.broadcast %220 : vector<1x128xf32> to vector<4x128xf32>
    %222 = arith.addf %219, %221 : vector<4x128xf32>
    %c0_161 = arith.constant 0 : index
    %c0_162 = arith.constant 0 : index
    %c0_163 = arith.constant 0 : index
    %223 = vector.load %arg14[%c0_161, %c0_162, %c0_163] : memref<4x1x128xf32, #tpu.memory_space<vmem>>, vector<4x1x128xf32>
    %224 = vector.shape_cast %223 : vector<4x1x128xf32> to vector<4x128xf32>
    %225 = vector.shape_cast %222 : vector<4x128xf32> to vector<4x1x128xf32>
    tpu.vector_store %arg14[%c0_161, %c0_162, %c0_163], %225 {strides = array<i32>} : memref<4x1x128xf32, #tpu.memory_space<vmem>>, vector<4x1x128xf32>,
    return
  }
  func.func @transform_0(%arg0: i32) -> (i32, i32, i32) {
    %c0_i32 = arith.constant 0 : i32
    %c0_i32_0 = arith.constant 0 : i32
    %c0_i32_1 = arith.constant 0 : i32
    return %arg0, %c0_i32, %c0_i32_0 : i32, i32, i32
  }
  func.func @transform_1(%arg0: i32) -> (i32, i32) {
    %c0_i32 = arith.constant 0 : i32
    %c0_i32_0 = arith.constant 0 : i32
    %c0_i32_1 = arith.constant 0 : i32
    return %c0_i32, %c0_i32_0 : i32, i32
  }
  func.func @transform_2(%arg0: i32) -> (i32, i32) {
    %c0_i32 = arith.constant 0 : i32
    %c0_i32_0 = arith.constant 0 : i32
    %c0_i32_1 = arith.constant 0 : i32
    return %c0_i32, %c0_i32_0 : i32, i32
  }
  func.func @transform_3(%arg0: i32) -> (i32, i32) {
    %c0_i32 = arith.constant 0 : i32
    %c0_i32_0 = arith.constant 0 : i32
    %c0_i32_1 = arith.constant 0 : i32
    return %c0_i32, %c0_i32_0 : i32, i32
  }
  func.func @transform_4(%arg0: i32) -> (i32, i32) {
    %c0_i32 = arith.constant 0 : i32
    %c0_i32_0 = arith.constant 0 : i32
    %c0_i32_1 = arith.constant 0 : i32
    return %c0_i32, %c0_i32_0 : i32, i32
  }
  func.func @transform_5(%arg0: i32) -> (i32, i32) {
    %c0_i32 = arith.constant 0 : i32
    %c0_i32_0 = arith.constant 0 : i32
    %c0_i32_1 = arith.constant 0 : i32
    return %c0_i32, %c0_i32_0 : i32, i32
  }
  func.func @transform_6(%arg0: i32) -> (i32, i32) {
    %c0_i32 = arith.constant 0 : i32
    %c0_i32_0 = arith.constant 0 : i32
    %c0_i32_1 = arith.constant 0 : i32
    return %c0_i32, %c0_i32_0 : i32, i32
  }
  func.func @transform_7(%arg0: i32) -> (i32, i32) {
    %c0_i32 = arith.constant 0 : i32
    %c0_i32_0 = arith.constant 0 : i32
    %c0_i32_1 = arith.constant 0 : i32
    return %c0_i32, %c0_i32_0 : i32, i32
  }
  func.func @transform_8(%arg0: i32) -> (i32, i32) {
    %c0_i32 = arith.constant 0 : i32
    %c0_i32_0 = arith.constant 0 : i32
    %c0_i32_1 = arith.constant 0 : i32
    return %c0_i32, %c0_i32_0 : i32, i32
  }
  func.func @transform_9(%arg0: i32) -> (i32, i32) {
    %c0_i32 = arith.constant 0 : i32
    %c0_i32_0 = arith.constant 0 : i32
    %c0_i32_1 = arith.constant 0 : i32
    return %c0_i32, %c0_i32_0 : i32, i32
  }
  func.func @transform_10(%arg0: i32) -> (i32, i32) {
    %c0_i32 = arith.constant 0 : i32
    %c0_i32_0 = arith.constant 0 : i32
    %c0_i32_1 = arith.constant 0 : i32
    return %c0_i32, %c0_i32_0 : i32, i32
  }
  func.func @transform_11(%arg0: i32) -> (i32, i32) {
    %c0_i32 = arith.constant 0 : i32
    %c0_i32_0 = arith.constant 0 : i32
    %c0_i32_1 = arith.constant 0 : i32
    return %c0_i32, %c0_i32_0 : i32, i32
  }
  func.func @transform_12(%arg0: i32) -> (i32, i32) {
    %c0_i32 = arith.constant 0 : i32
    %c0_i32_0 = arith.constant 0 : i32
    %c0_i32_1 = arith.constant 0 : i32
    return %c0_i32, %c0_i32_0 : i32, i32
  }
  func.func @transform_13(%arg0: i32) -> (i32, i32, i32) {
    %c0_i32 = arith.constant 0 : i32
    %c0_i32_0 = arith.constant 0 : i32
    %c0_i32_1 = arith.constant 0 : i32
    return %arg0, %c0_i32, %c0_i32_0 : i32, i32, i32
  }
}

</mosaic_0001>

<llo_original>
// kernel: _lambda_.1
$region0: #{_lambda_.1}
  #allocation0 [shape = 'u32[]', space=smem, size = 0x4, offset = 0x4, fixed_abs, tag = 'smem constant byte address 0x4 - core index']
  #allocation1 [shape = 'u32[144,128]{1,0:T(1,128)}', space=vmem, size = 0x12000, scoped, tag = 'internal scratch']
  #allocation2 [shape = 'bf16[80,128]{1,0:T(16,128)(2,1)}', space=vmem, size = 0x5000, scoped, tag = 'scratch operand']
  #allocation3 [shape = 'bf16[48,128]{1,0:T(16,128)(2,1)}', space=vmem, size = 0x3000, scoped, tag = 'scratch operand']
  #allocation4 [shape = 'bf16[32,128]{1,0:T(16,128)(2,1)}', space=vmem, size = 0x2000, scoped, tag = 'scratch operand']
  #allocation5 [shape = 'bf16[64,640]{1,0:T(16,128)(2,1)}', space=vmem, size = 0x14000, scoped, tag = 'scratch operand']
  #allocation6 [shape = 'bf16[32,640]{1,0:T(16,128)(2,1)}', space=vmem, size = 0xa000, scoped, tag = 'scratch operand']
  #allocation7 [shape = 'bf16[16,640]{1,0:T(16,128)(2,1)}', space=vmem, size = 0x5000, scoped, tag = 'scratch operand']
  %s0 = inlined_call_operand.vmem [shape: f32[8,16,64], index: 0, kind: input, shape index: {}]
  %s1 = inlined_call_operand.vmem [shape: bf16[640,256], index: 1, kind: input, shape index: {}]
  %s2 = inlined_call_operand.vmem [shape: f32[1,256], index: 2, kind: input, shape index: {}]
  %s3 = inlined_call_operand.vmem [shape: bf16[640,128], index: 3, kind: input, shape index: {}]
  %s4 = inlined_call_operand.vmem [shape: f32[1,128], index: 4, kind: input, shape index: {}]
  %s5 = inlined_call_operand.vmem [shape: bf16[640,64], index: 5, kind: input, shape index: {}]
  %s6 = inlined_call_operand.vmem [shape: f32[1,64], index: 6, kind: input, shape index: {}]
  %s7 = inlined_call_operand.vmem [shape: bf16[64,128], index: 7, kind: input, shape index: {}]
  %s8 = inlined_call_operand.vmem [shape: f32[1,128], index: 8, kind: input, shape index: {}]
  %s9 = inlined_call_operand.vmem [shape: bf16[128,128], index: 9, kind: input, shape index: {}]
  %s10 = inlined_call_operand.vmem [shape: f32[1,128], index: 10, kind: input, shape index: {}]
  %s11 = inlined_call_operand.vmem [shape: bf16[128,128], index: 11, kind: input, shape index: {}]
  %s12 = inlined_call_operand.vmem [shape: f32[1,128], index: 12, kind: input, shape index: {}]
  %s13 = inlined_call_operand.hbm [shape: f32[8,1,128], index: 13, kind: output, shape index: {}]
  %s14 = sld [smem:[#allocation0]]
  $region85: #{_lambda_.1} parent=0
    _
  %s16 = ssub.s32 1, %s14
  %s17 = scalar_select 0, %s16, %s14
  $region1: #{_lambda_.1} parent=0
    #allocation8 [shape = 'u8[4096]{0}', space=vmem, size = 0x1000, scoped, tag = 'output window, operand 0']
    #allocation9 [shape = 's32[2]{0}', space=sflag, size = 0x8, scoped, tag = 'scoped memory for _lambda_.1']
    %18 = vsyncpa [#allocation9], 0
    %s19 = scalar_lea.sflag [#allocation9], 1
    %20 = vsyncpa %s19, 0
    loop: start=0, step=1, limit=4
    $region2: #{_lambda_.1} parent=1 // loop_pre_header
      _
    $region3: #{_lambda_.1} parent=1 // loop_header
      %s22 = sphi 0, %s26
      %p23 = scmp.ge.s32.totalorder %s22, 4
      %s32 = sphi 0, %s34
      %s35 = sphi 0, %s32
      %s36 = sphi 0, %s35
      %s52 = sphi 0, %s36
      %s56 = sphi 0, %s56
      %s58 = sphi 0, %s56
      %s59 = sphi 0, %s58
      %s73 = sphi 0, %s59
      %s77 = sphi 0, %s77
      %s79 = sphi 0, %s77
      %s80 = sphi 0, %s79
      %s94 = sphi 0, %s80
      %s98 = sphi 0, %s98
      %s100 = sphi 0, %s98
      %s101 = sphi 0, %s100
      %s115 = sphi 0, %s101
      %s119 = sphi 0, %s119
      %s121 = sphi 0, %s119
      %s122 = sphi 0, %s121
      %s136 = sphi 0, %s122
      %s140 = sphi 0, %s140
      %s142 = sphi 0, %s140
      %s143 = sphi 0, %s142
      %s157 = sphi 0, %s143
      %s161 = sphi 0, %s161
      %s163 = sphi 0, %s161
      %s164 = sphi 0, %s163
      %s178 = sphi 0, %s164
      %s182 = sphi 0, %s182
      %s184 = sphi 0, %s182
      %s185 = sphi 0, %s184
      %s199 = sphi 0, %s185
      %s203 = sphi 0, %s203
      %s205 = sphi 0, %s203
      %s206 = sphi 0, %s205
      %s220 = sphi 0, %s206
      %s224 = sphi 0, %s224
      %s226 = sphi 0, %s224
      %s227 = sphi 0, %s226
      %s241 = sphi 0, %s227
      %s245 = sphi 0, %s245
      %s247 = sphi 0, %s245
      %s248 = sphi 0, %s247
      %s262 = sphi 0, %s248
      %s266 = sphi 0, %s266
      %s268 = sphi 0, %s266
      %s269 = sphi 0, %s268
      %s283 = sphi 0, %s269
      %s287 = sphi 0, %s287
      %s289 = sphi 0, %s287
      %s290 = sphi 0, %s289
      %s304 = sphi 0, %s290
      %s310 = sphi 0, %s312
      %s313 = sphi 0, %s310
      %s314 = sphi 0, %s313
      %s330 = sphi 0, %s314
    $region4: #{_lambda_.1} parent=1 // loop_header_branch
      %25 = sbr.rel (%p23) target = $region8
    $region5: #{_lambda_.1} parent=1 // loop_body
      %s27 = ssub.s32 %s22, 1
      %s28 = ssub.s32 %s22, 2
      %s29 = sadd.s32 %s22, 1
      %s30 = ssub.s32 %s22, %s29
      %p31 = scmp.eq.s32.totalorder %s30, 0
      %s33 = sadd.s32 %s32, 1
      %s34 = scalar_select %p31, %s32, %s33
      %p37 = pneg %p31
      %p38 = scmp.eq.s32.totalorder %s22, 1
      %p39 = por %p37, %p38
      %p40 = scmp.ne.s32.totalorder %s32, %s35
      %p41 = scmp.eq.s32.totalorder %s22, 0
      %p42 = por %p40, %p41
      %p43 = scmp.ne.s32.totalorder %s32, %s35
      %p44 = scmp.eq.s32.totalorder %s27, 1
      %p45 = por %p43, %p44
      %p46 = scmp.ne.s32.totalorder %s35, %s36
      %p47 = scmp.eq.s32.totalorder %s27, 0
      %p48 = por %p46, %p47
      %p49 = scmp.ne.s32.totalorder %s35, %s36
      %p50 = scmp.eq.s32.totalorder %s28, 1
      %p51 = por %p49, %p50
      %p53 = scmp.ne.s32.totalorder %s36, %s52
      %p54 = scmp.eq.s32.totalorder %s28, 0
      %p55 = por %p53, %p54
      %s57 = sadd.s32 %s56, 1
      %p60 = scmp.eq.s32.totalorder %s22, 1
      %p61 = scmp.ne.s32.totalorder %s56, %s58
      %p62 = scmp.eq.s32.totalorder %s22, 0
      %p63 = por %p61, %p62
      %p64 = scmp.ne.s32.totalorder %s56, %s58
      %p65 = scmp.eq.s32.totalorder %s27, 1
      %p66 = por %p64, %p65
      %p67 = scmp.ne.s32.totalorder %s58, %s59
      %p68 = scmp.eq.s32.totalorder %s27, 0
      %p69 = por %p67, %p68
      %p70 = scmp.ne.s32.totalorder %s58, %s59
      %p71 = scmp.eq.s32.totalorder %s28, 1
      %p72 = por %p70, %p71
      %p74 = scmp.ne.s32.totalorder %s59, %s73
      %p75 = scmp.eq.s32.totalorder %s28, 0
      %p76 = por %p74, %p75
      %s78 = sadd.s32 %s77, 1
      %p81 = scmp.eq.s32.totalorder %s22, 1
      %p82 = scmp.ne.s32.totalorder %s77, %s79
      %p83 = scmp.eq.s32.totalorder %s22, 0
      %p84 = por %p82, %p83
      %p85 = scmp.ne.s32.totalorder %s77, %s79
      %p86 = scmp.eq.s32.totalorder %s27, 1
      %p87 = por %p85, %p86
      %p88 = scmp.ne.s32.totalorder %s79, %s80
      %p89 = scmp.eq.s32.totalorder %s27, 0
      %p90 = por %p88, %p89
      %p91 = scmp.ne.s32.totalorder %s79, %s80
      %p92 = scmp.eq.s32.totalorder %s28, 1
      %p93 = por %p91, %p92
      %p95 = scmp.ne.s32.totalorder %s80, %s94
      %p96 = scmp.eq.s32.totalorder %s28, 0
      %p97 = por %p95, %p96
      %s99 = sadd.s32 %s98, 1
      %p102 = scmp.eq.s32.totalorder %s22, 1
      %p103 = scmp.ne.s32.totalorder %s98, %s100
      %p104 = scmp.eq.s32.totalorder %s22, 0
      %p105 = por %p103, %p104
      %p106 = scmp.ne.s32.totalorder %s98, %s100
      %p107 = scmp.eq.s32.totalorder %s27, 1
      %p108 = por %p106, %p107
      %p109 = scmp.ne.s32.totalorder %s100, %s101
      %p110 = scmp.eq.s32.totalorder %s27, 0
      %p111 = por %p109, %p110
      %p112 = scmp.ne.s32.totalorder %s100, %s101
      %p113 = scmp.eq.s32.totalorder %s28, 1
      %p114 = por %p112, %p113
      %p116 = scmp.ne.s32.totalorder %s101, %s115
      %p117 = scmp.eq.s32.totalorder %s28, 0
      %p118 = por %p116, %p117
      %s120 = sadd.s32 %s119, 1
      %p123 = scmp.eq.s32.totalorder %s22, 1
      %p124 = scmp.ne.s32.totalorder %s119, %s121
      %p125 = scmp.eq.s32.totalorder %s22, 0
      %p126 = por %p124, %p125
      %p127 = scmp.ne.s32.totalorder %s119, %s121
      %p128 = scmp.eq.s32.totalorder %s27, 1
      %p129 = por %p127, %p128
      %p130 = scmp.ne.s32.totalorder %s121, %s122
      %p131 = scmp.eq.s32.totalorder %s27, 0
      %p132 = por %p130, %p131
      %p133 = scmp.ne.s32.totalorder %s121, %s122
      %p134 = scmp.eq.s32.totalorder %s28, 1
      %p135 = por %p133, %p134
      %p137 = scmp.ne.s32.totalorder %s122, %s136
      %p138 = scmp.eq.s32.totalorder %s28, 0
      %p139 = por %p137, %p138
      %s141 = sadd.s32 %s140, 1
      %p144 = scmp.eq.s32.totalorder %s22, 1
      %p145 = scmp.ne.s32.totalorder %s140, %s142
      %p146 = scmp.eq.s32.totalorder %s22, 0
      %p147 = por %p145, %p146
      %p148 = scmp.ne.s32.totalorder %s140, %s142
      %p149 = scmp.eq.s32.totalorder %s27, 1
      %p150 = por %p148, %p149
      %p151 = scmp.ne.s32.totalorder %s142, %s143
      %p152 = scmp.eq.s32.totalorder %s27, 0
      %p153 = por %p151, %p152
      %p154 = scmp.ne.s32.totalorder %s142, %s143
      %p155 = scmp.eq.s32.totalorder %s28, 1
      %p156 = por %p154, %p155
      %p158 = scmp.ne.s32.totalorder %s143, %s157
      %p159 = scmp.eq.s32.totalorder %s28, 0
      %p160 = por %p158, %p159
      %s162 = sadd.s32 %s161, 1
      %p165 = scmp.eq.s32.totalorder %s22, 1
      %p166 = scmp.ne.s32.totalorder %s161, %s163
      %p167 = scmp.eq.s32.totalorder %s22, 0
      %p168 = por %p166, %p167
      %p169 = scmp.ne.s32.totalorder %s161, %s163
      %p170 = scmp.eq.s32.totalorder %s27, 1
      %p171 = por %p169, %p170
      %p172 = scmp.ne.s32.totalorder %s163, %s164
      %p173 = scmp.eq.s32.totalorder %s27, 0
      %p174 = por %p172, %p173
      %p175 = scmp.ne.s32.totalorder %s163, %s164
      %p176 = scmp.eq.s32.totalorder %s28, 1
      %p177 = por %p175, %p176
      %p179 = scmp.ne.s32.totalorder %s164, %s178
      %p180 = scmp.eq.s32.totalorder %s28, 0
      %p181 = por %p179, %p180
      %s183 = sadd.s32 %s182, 1
      %p186 = scmp.eq.s32.totalorder %s22, 1
      %p187 = scmp.ne.s32.totalorder %s182, %s184
      %p188 = scmp.eq.s32.totalorder %s22, 0
      %p189 = por %p187, %p188
      %p190 = scmp.ne.s32.totalorder %s182, %s184
      %p191 = scmp.eq.s32.totalorder %s27, 1
      %p192 = por %p190, %p191
      %p193 = scmp.ne.s32.totalorder %s184, %s185
      %p194 = scmp.eq.s32.totalorder %s27, 0
      %p195 = por %p193, %p194
      %p196 = scmp.ne.s32.totalorder %s184, %s185
      %p197 = scmp.eq.s32.totalorder %s28, 1
      %p198 = por %p196, %p197
      %p200 = scmp.ne.s32.totalorder %s185, %s199
      %p201 = scmp.eq.s32.totalorder %s28, 0
      %p202 = por %p200, %p201
      %s204 = sadd.s32 %s203, 1
      %p207 = scmp.eq.s32.totalorder %s22, 1
      %p208 = scmp.ne.s32.totalorder %s203, %s205
      %p209 = scmp.eq.s32.totalorder %s22, 0
      %p210 = por %p208, %p209
      %p211 = scmp.ne.s32.totalorder %s203, %s205
      %p212 = scmp.eq.s32.totalorder %s27, 1
      %p213 = por %p211, %p212
      %p214 = scmp.ne.s32.totalorder %s205, %s206
      %p215 = scmp.eq.s32.totalorder %s27, 0
      %p216 = por %p214, %p215
      %p217 = scmp.ne.s32.totalorder %s205, %s206
      %p218 = scmp.eq.s32.totalorder %s28, 1
      %p219 = por %p217, %p218
      %p221 = scmp.ne.s32.totalorder %s206, %s220
      %p222 = scmp.eq.s32.totalorder %s28, 0
      %p223 = por %p221, %p222
      %s225 = sadd.s32 %s224, 1
      %p228 = scmp.eq.s32.totalorder %s22, 1
      %p229 = scmp.ne.s32.totalorder %s224, %s226
      %p230 = scmp.eq.s32.totalorder %s22, 0
      %p231 = por %p229, %p230
      %p232 = scmp.ne.s32.totalorder %s224, %s226
      %p233 = scmp.eq.s32.totalorder %s27, 1
      %p234 = por %p232, %p233
      %p235 = scmp.ne.s32.totalorder %s226, %s227
      %p236 = scmp.eq.s32.totalorder %s27, 0
      %p237 = por %p235, %p236
      %p238 = scmp.ne.s32.totalorder %s226, %s227
      %p239 = scmp.eq.s32.totalorder %s28, 1
      %p240 = por %p238, %p239
      %p242 = scmp.ne.s32.totalorder %s227, %s241
      %p243 = scmp.eq.s32.totalorder %s28, 0
      %p244 = por %p242, %p243
      %s246 = sadd.s32 %s245, 1
      %p249 = scmp.eq.s32.totalorder %s22, 1
      %p250 = scmp.ne.s32.totalorder %s245, %s247
      %p251 = scmp.eq.s32.totalorder %s22, 0
      %p252 = por %p250, %p251
      %p253 = scmp.ne.s32.totalorder %s245, %s247
      %p254 = scmp.eq.s32.totalorder %s27, 1
      %p255 = por %p253, %p254
      %p256 = scmp.ne.s32.totalorder %s247, %s248
      %p257 = scmp.eq.s32.totalorder %s27, 0
      %p258 = por %p256, %p257
      %p259 = scmp.ne.s32.totalorder %s247, %s248
      %p260 = scmp.eq.s32.totalorder %s28, 1
      %p261 = por %p259, %p260
      %p263 = scmp.ne.s32.totalorder %s248, %s262
      %p264 = scmp.eq.s32.totalorder %s28, 0
      %p265 = por %p263, %p264
      %s267 = sadd.s32 %s266, 1
      %p270 = scmp.eq.s32.totalorder %s22, 1
      %p271 = scmp.ne.s32.totalorder %s266, %s268
      %p272 = scmp.eq.s32.totalorder %s22, 0
      %p273 = por %p271, %p272
      %p274 = scmp.ne.s32.totalorder %s266, %s268
      %p275 = scmp.eq.s32.totalorder %s27, 1
      %p276 = por %p274, %p275
      %p277 = scmp.ne.s32.totalorder %s268, %s269
      %p278 = scmp.eq.s32.totalorder %s27, 0
      %p279 = por %p277, %p278
      %p280 = scmp.ne.s32.totalorder %s268, %s269
      %p281 = scmp.eq.s32.totalorder %s28, 1
      %p282 = por %p280, %p281
      %p284 = scmp.ne.s32.totalorder %s269, %s283
      %p285 = scmp.eq.s32.totalorder %s28, 0
      %p286 = por %p284, %p285
      %s288 = sadd.s32 %s287, 1
      %p291 = scmp.eq.s32.totalorder %s22, 1
      %p292 = scmp.ne.s32.totalorder %s287, %s289
      %p293 = scmp.eq.s32.totalorder %s22, 0
      %p294 = por %p292, %p293
      %p295 = scmp.ne.s32.totalorder %s287, %s289
      %p296 = scmp.eq.s32.totalorder %s27, 1
      %p297 = por %p295, %p296
      %p298 = scmp.ne.s32.totalorder %s289, %s290
      %p299 = scmp.eq.s32.totalorder %s27, 0
      %p300 = por %p298, %p299
      %p301 = scmp.ne.s32.totalorder %s289, %s290
      %p302 = scmp.eq.s32.totalorder %s28, 1
      %p303 = por %p301, %p302
      %p305 = scmp.ne.s32.totalorder %s290, %s304
      %p306 = scmp.eq.s32.totalorder %s28, 0
      %p307 = por %p305, %p306
      %s308 = ssub.s32 %s22, %s29
      %p309 = scmp.eq.s32.totalorder %s308, 0
      %s311 = sadd.s32 %s310, 1
      %s312 = scalar_select %p309, %s310, %s311
      %p315 = pneg %p309
      %p316 = scmp.eq.s32.totalorder %s22, 1
      %p317 = por %p315, %p316
      %p318 = scmp.ne.s32.totalorder %s310, %s313
      %p319 = scmp.eq.s32.totalorder %s22, 0
      %p320 = por %p318, %p319
      %p321 = scmp.ne.s32.totalorder %s310, %s313
      %p322 = scmp.eq.s32.totalorder %s27, 1
      %p323 = por %p321, %p322
      %p324 = scmp.ne.s32.totalorder %s313, %s314
      %p325 = scmp.eq.s32.totalorder %s27, 0
      %p326 = por %p324, %p325
      %p327 = scmp.ne.s32.totalorder %s313, %s314
      %p328 = scmp.eq.s32.totalorder %s28, 1
      %p329 = por %p327, %p328
      %p331 = scmp.ne.s32.totalorder %s314, %s330
      %p332 = scmp.eq.s32.totalorder %s28, 0
      %p333 = por %p331, %p332
      %p334 = scmp.le.s32.totalorder 1, %s22
      %p335 = scmp.lt.s32.totalorder %s22, 3
      %p336 = pnand %p334, %p335
      %p337 = pneg %p336
      // Predicated region
      $region9: #{_lambda_.1} parent=5 // pred_check
        _
      $region10: #{_lambda_.1} parent=5 // pred_check_branch
        %339 = sbr.rel (%p336) target = $region12
      $region11: #{_lambda_.1} parent=5 // pred_region
        %s340 = ssub.s32 %s22, 1
        // Predicated region
        $region13: #{_lambda_.1} parent=11 // pred_check
          %p341 = pneg %p69
        $region14: #{_lambda_.1} parent=11 // pred_check_branch
          %343 = sbr.rel (%p341) target = $region16
        $region15: #{_lambda_.1} parent=11 // pred_region
          _
        $region16: #{_lambda_.1} parent=11 // pred_fallthru
          _
        // Predicated region
        $region17: #{_lambda_.1} parent=11 // pred_check
          %p344 = pneg %p90
        $region18: #{_lambda_.1} parent=11 // pred_check_branch
          %346 = sbr.rel (%p344) target = $region20
        $region19: #{_lambda_.1} parent=11 // pred_region
          _
        $region20: #{_lambda_.1} parent=11 // pred_fallthru
          _
        // Predicated region
        $region21: #{_lambda_.1} parent=11 // pred_check
          %p347 = pneg %p111
        $region22: #{_lambda_.1} parent=11 // pred_check_branch
          %349 = sbr.rel (%p347) target = $region24
        $region23: #{_lambda_.1} parent=11 // pred_region
          _
        $region24: #{_lambda_.1} parent=11 // pred_fallthru
          _
        // Predicated region
        $region25: #{_lambda_.1} parent=11 // pred_check
          %p350 = pneg %p132
        $region26: #{_lambda_.1} parent=11 // pred_check_branch
          %352 = sbr.rel (%p350) target = $region28
        $region27: #{_lambda_.1} parent=11 // pred_region
          _
        $region28: #{_lambda_.1} parent=11 // pred_fallthru
          _
        // Predicated region
        $region29: #{_lambda_.1} parent=11 // pred_check
          %p353 = pneg %p153
        $region30: #{_lambda_.1} parent=11 // pred_check_branch
          %355 = sbr.rel (%p353) target = $region32
        $region31: #{_lambda_.1} parent=11 // pred_region
          _
        $region32: #{_lambda_.1} parent=11 // pred_fallthru
          _
        // Predicated region
        $region33: #{_lambda_.1} parent=11 // pred_check
          %p356 = pneg %p174
        $region34: #{_lambda_.1} parent=11 // pred_check_branch
          %358 = sbr.rel (%p356) target = $region36
        $region35: #{_lambda_.1} parent=11 // pred_region
          _
        $region36: #{_lambda_.1} parent=11 // pred_fallthru
          _
        // Predicated region
        $region37: #{_lambda_.1} parent=11 // pred_check
          %p359 = pneg %p195
        $region38: #{_lambda_.1} parent=11 // pred_check_branch
          %361 = sbr.rel (%p359) target = $region40
        $region39: #{_lambda_.1} parent=11 // pred_region
          _
        $region40: #{_lambda_.1} parent=11 // pred_fallthru
          _
        // Predicated region
        $region41: #{_lambda_.1} parent=11 // pred_check
          %p362 = pneg %p216
        $region42: #{_lambda_.1} parent=11 // pred_check_branch
          %364 = sbr.rel (%p362) target = $region44
        $region43: #{_lambda_.1} parent=11 // pred_region
          _
        $region44: #{_lambda_.1} parent=11 // pred_fallthru
          _
        // Predicated region
        $region45: #{_lambda_.1} parent=11 // pred_check
          %p365 = pneg %p237
        $region46: #{_lambda_.1} parent=11 // pred_check_branch
          %367 = sbr.rel (%p365) target = $region48
        $region47: #{_lambda_.1} parent=11 // pred_region
          _
        $region48: #{_lambda_.1} parent=11 // pred_fallthru
          _
        // Predicated region
        $region49: #{_lambda_.1} parent=11 // pred_check
          %p368 = pneg %p258
        $region50: #{_lambda_.1} parent=11 // pred_check_branch
          %370 = sbr.rel (%p368) target = $region52
        $region51: #{_lambda_.1} parent=11 // pred_region
          _
        $region52: #{_lambda_.1} parent=11 // pred_fallthru
          _
        // Predicated region
        $region53: #{_lambda_.1} parent=11 // pred_check
          %p371 = pneg %p279
        $region54: #{_lambda_.1} parent=11 // pred_check_branch
          %373 = sbr.rel (%p371) target = $region56
        $region55: #{_lambda_.1} parent=11 // pred_region
          _
        $region56: #{_lambda_.1} parent=11 // pred_fallthru
          _
        // Predicated region
        $region57: #{_lambda_.1} parent=11 // pred_check
          %p374 = pneg %p300
        $region58: #{_lambda_.1} parent=11 // pred_check_branch
          %376 = sbr.rel (%p374) target = $region60
        $region59: #{_lambda_.1} parent=11 // pred_region
          _
        $region60: #{_lambda_.1} parent=11 // pred_fallthru
          _
      $region12: #{_lambda_.1} parent=5 // pred_fallthru
        _
      %p377 = scmp.lt.s32.totalorder %s22, 2
      // Predicated region
      $region61: #{_lambda_.1} parent=5 // pred_check
        %p378 = pneg %p377
      $region62: #{_lambda_.1} parent=5 // pred_check_branch
        %380 = sbr.rel (%p378) target = $region64
      $region63: #{_lambda_.1} parent=5 // pred_region
        // Predicated region
        $region65: #{_lambda_.1} parent=63 // pred_check
          %p381 = pneg %p42
        $region66: #{_lambda_.1} parent=63 // pred_check_branch
          %383 = sbr.rel (%p381) target = $region68
        $region67: #{_lambda_.1} parent=63 // pred_region
          %s384 = smul.u32 4, %s22
          %p385 = scmp.lt.s32.totalorder %s384, 7
          %s386 = scalar_select %p385, %s384, 7
          %s387 = smul.addr %s386, 2
          %s388 = smul.addr %s387, 8
          %s389 = scalar_lea.vmem %s0, %s388
          %s390 = smul.u32 4, %s22
        $region68: #{_lambda_.1} parent=63 // pred_fallthru
          _
      $region64: #{_lambda_.1} parent=5 // pred_fallthru
        _
      %p391 = scmp.le.s32.totalorder 1, %s22
      %p392 = scmp.lt.s32.totalorder %s22, 3
      %p393 = pnand %p391, %p392
      %p394 = pneg %p393
      // Predicated region
      $region69: #{_lambda_.1} parent=5 // pred_check
        _
      $region70: #{_lambda_.1} parent=5 // pred_check_branch
        %396 = sbr.rel (%p393) target = $region72
      $region71: #{_lambda_.1} parent=5 // pred_region
        %s397 = ssub.s32 %s22, 1
        %s398 = smul.u32 4, %s27
        %p399 = scmp.lt.s32.totalorder %s398, 7
        %s400 = scalar_select %p399, %s398, 7
        %s401 = smul.addr %s400, 2
        %s402 = smul.addr %s401, 8
        %s403 = scalar_lea.vmem %s0, %s402
        %p404 = pneg %p48
        %p405 = pneg %p45
        %p406 = pneg %p69
        %p407 = pneg %p66
        %p408 = pneg %p90
        %p409 = pneg %p87
        %p410 = pneg %p111
        %p411 = pneg %p108
        %p412 = pneg %p132
        %p413 = pneg %p129
        %p414 = pneg %p153
        %p415 = pneg %p150
        %p416 = pneg %p174
        %p417 = pneg %p171
        %p418 = pneg %p195
        %p419 = pneg %p192
        %p420 = pneg %p216
        %p421 = pneg %p213
        %p422 = pneg %p237
        %p423 = pneg %p234
        %p424 = pneg %p258
        %p425 = pneg %p255
        %p426 = pneg %p279
        %p427 = pneg %p276
        %p428 = pneg %p300
        %p429 = pneg %p297
        %p430 = pneg %p326
        %p431 = pneg %p323
        %s432 = sand.u32 %s313, 1
        %s433 = scalar_lea.sflag [#allocation9], %s432
        %s434 = sand.u32 %s313, 1
        %s435 = smul.addr %s434, 4
        %s436 = scalar_lea.vmem [#allocation8], %s435
        %s437 = smul.u32 4, %s27
        %p438 = scmp.lt.s32.totalorder %s437, 7
        %s439 = scalar_select %p438, %s437, 7
        %s440 = smul.addr %s439, 2
        %s441 = smul.addr %s440, 8
        %s442 = scalar_lea.vmem %s0, %s441
        %s443 = smul.u32 4, %s27
        %s444 = smul.u32 4, %s27
        %446 = vst [vmem:[#allocation2] sm:$0xf] 0
        %447 = vst [vmem:[#allocation2 + $0x20] sm:$0xf0] 0
        %vm448 = vcmask 1048064
        %449 = vst.msk [vmem:[#allocation2] sm:$0xff] %vm448, 0
        %450 = vst.msk [vmem:[#allocation2 + $0x8] sm:$0xff] %vm448, 0
        %451 = vst.msk [vmem:[#allocation2 + $0x10] sm:$0xff] %vm448, 0
        %452 = vst.msk [vmem:[#allocation2 + $0x18] sm:$0xff] %vm448, 0
        %453 = vst.msk [vmem:[#allocation2 + $0x20] sm:$0xff] %vm448, 0
        %454 = vst [vmem:[#allocation3] sm:$0xf] 0
        %455 = vst [vmem:[#allocation3 + $0x10] sm:$0xf0] 0
        %456 = vst [vmem:[#allocation4] sm:$0xf] 0
        %457 = vst [vmem:[#allocation4 + $0x8] sm:$0xf0] 0
        %458 = vst.msk [vmem:[#allocation4] sm:$0xff] %vm448, 0
        %459 = vst.msk [vmem:[#allocation4 + $0x8] sm:$0xff] %vm448, 0
        %v460 = vld [vmem:[%s442] sm:$0xff]
        %v461 = vld [vmem:[%s442 + $0x8] sm:$0xff]
        %v462 = vld [vmem:[%s442 + $0x10] sm:$0xff]
        %v463 = vld [vmem:[%s442 + $0x18] sm:$0xff]
        %v464 = vld [vmem:[%s442 + $0x20] sm:$0xff]
        %v465 = vld [vmem:[%s442 + $0x28] sm:$0xff]
        %v466 = vld [vmem:[%s442 + $0x30] sm:$0xff]
        %v467 = vld [vmem:[%s442 + $0x38] sm:$0xff]
        %vm468 = vcmp.gt.f32.partialorder %v460, 0.5
        %vm469 = vcmp.gt.f32.partialorder %v461, 0.5
        %vm470 = vcmp.gt.f32.partialorder %v462, 0.5
        %vm471 = vcmp.gt.f32.partialorder %v463, 0.5
        %vm472 = vcmp.gt.f32.partialorder %v464, 0.5
        %vm473 = vcmp.gt.f32.partialorder %v465, 0.5
        %vm474 = vcmp.gt.f32.partialorder %v466, 0.5
        %vm475 = vcmp.gt.f32.partialorder %v467, 0.5
        %v476 = vsel %vm468, 1, 0
        %v477 = vsel %vm469, 1, 0
        %v478 = vsel %vm470, 1, 0
        %v479 = vsel %vm471, 1, 0
        %v480 = vsel %vm472, 1, 0
        %v481 = vsel %vm473, 1, 0
        %v482 = vsel %vm474, 1, 0
        %v483 = vsel %vm475, 1, 0
        %v484 = vcvt.s32.f32 %v476
        %v485 = vcvt.s32.f32 %v477
        %v486 = vcvt.s32.f32 %v478
        %v487 = vcvt.s32.f32 %v479
        %v488 = vcvt.s32.f32 %v480
        %v489 = vcvt.s32.f32 %v481
        %v490 = vcvt.s32.f32 %v482
        %v491 = vcvt.s32.f32 %v483
        %v492 = vpack.c.bf16 %v485, %v484
        %v493 = vpack.c.bf16 %v487, %v486
        %v494 = vpack.c.bf16 %v489, %v488
        %v495 = vpack.c.bf16 %v491, %v490
        %v500 = vunpack.c.l.b16 %v492
        %v501 = vunpack.c.l.b16 %v493
        %v502 = vunpack.c.l.b16 %v494
        %v503 = vunpack.c.l.b16 %v495
        %v504 = vrot.slane %v501, 7
        %vm505 = vcmask 1041409
        %v506 = vsel %vm505, %v504, %v500
        %v507 = vrot.slane %v502, 6
        %vm508 = vcmask 1042434
        %v509 = vsel %vm508, %v507, %v506
        %v510 = vrot.slane %v503, 5
        %vm511 = vcmask 1043459
        %v512 = vsel %vm511, %v510, %v509
        %v513 = vpack.c.b16 %v512, %v512
        %vm515 = vcmask 521220
        %516 = vst.msk [vmem:[#allocation2] sm:$0x30] %vm515, %v513
        %v517 = vrot.slane %v500, 5
        %v518 = vrot.slane %v501, 4
        %vm519 = vcmask 1045509
        %v520 = vsel %vm519, %v518, %v517
        %v521 = vrot.slane %v502, 3
        %vm522 = vcmask 1046534
        %v523 = vsel %vm522, %v521, %v520
        %v524 = vrot.slane %v503, 2
        %vm525 = vcmask 1047559
        %v526 = vsel %vm525, %v524, %v523
        %v527 = vpack.c.b16 %v526, %v526
        %vm529 = vcmask 523270
        %530 = vst.msk [vmem:[#allocation2] sm:$0xc0] %vm529, %v527
        %v531 = vrot.slane %v500, 2
        %v532 = vrot.slane %v501, 1
        %v533 = vsel %vm505, %v532, %v531
        %v534 = vsel %vm508, %v502, %v533
        %v535 = vrot.slane %v503, 7
        %v536 = vsel %vm511, %v535, %v534
        %v537 = vpack.c.b16 %v536, %v536
        %vm539 = vcmask 517120
        %540 = vst.msk [vmem:[#allocation2 + $0x8] sm:$0x3] %vm539, %v537
        %v541 = vrot.slane %v500, 7
        %v542 = vrot.slane %v501, 6
        %v543 = vsel %vm519, %v542, %v541
        %v544 = vrot.slane %v502, 5
        %v545 = vsel %vm522, %v544, %v543
        %v546 = vrot.slane %v503, 4
        %v547 = vsel %vm525, %v546, %v545
        %v548 = vpack.c.b16 %v547, %v547
        %vm550 = vcmask 519170
        %551 = vst.msk [vmem:[#allocation2 + $0x8] sm:$0xc] %vm550, %v548
        %v552 = vrot.slane %v500, 4
        %v553 = vrot.slane %v501, 3
        %v554 = vsel %vm505, %v553, %v552
        %v555 = vrot.slane %v502, 2
        %v556 = vsel %vm508, %v555, %v554
        %v557 = vrot.slane %v503, 1
        %v558 = vsel %vm511, %v557, %v556
        %v559 = vpack.c.b16 %v558, %v558
        %561 = vst.msk [vmem:[#allocation2 + $0x8] sm:$0x30] %vm515, %v559
        %v562 = vrot.slane %v500, 1
        %v563 = vsel %vm519, %v501, %v562
        %v564 = vrot.slane %v502, 7
        %v565 = vsel %vm522, %v564, %v563
        %v566 = vrot.slane %v503, 6
        %v567 = vsel %vm525, %v566, %v565
        %v568 = vpack.c.b16 %v567, %v567
        %570 = vst.msk [vmem:[#allocation2 + $0x8] sm:$0xc0] %vm529, %v568
        %v571 = vrot.slane %v500, 6
        %v572 = vrot.slane %v501, 5
        %v573 = vsel %vm505, %v572, %v571
        %v574 = vrot.slane %v502, 4
        %v575 = vsel %vm508, %v574, %v573
        %v576 = vrot.slane %v503, 3
        %v577 = vsel %vm511, %v576, %v575
        %v578 = vpack.c.b16 %v577, %v577
        %580 = vst.msk [vmem:[#allocation2 + $0x10] sm:$0x3] %vm539, %v578
        %v581 = vrot.slane %v500, 3
        %v582 = vrot.slane %v501, 2
        %v583 = vsel %vm519, %v582, %v581
        %v584 = vrot.slane %v502, 1
        %v585 = vsel %vm522, %v584, %v583
        %v586 = vsel %vm525, %v503, %v585
        %v587 = vpack.c.b16 %v586, %v586
        %589 = vst.msk [vmem:[#allocation2 + $0x10] sm:$0xc] %vm550, %v587
        %v590 = vunpack.c.h.b16 %v492
        %v591 = vunpack.c.h.b16 %v493
        %v592 = vunpack.c.h.b16 %v494
        %v593 = vunpack.c.h.b16 %v495
        %v594 = vrot.slane %v591, 7
        %v595 = vsel %vm505, %v594, %v590
        %v596 = vrot.slane %v592, 6
        %v597 = vsel %vm508, %v596, %v595
        %v598 = vrot.slane %v593, 5
        %v599 = vsel %vm511, %v598, %v597
        %v600 = vpack.c.b16 %v599, %v599
        %602 = vst.msk [vmem:[#allocation2 + $0x10] sm:$0x30] %vm515, %v600
        %v603 = vrot.slane %v590, 5
        %v604 = vrot.slane %v591, 4
        %v605 = vsel %vm519, %v604, %v603
        %v606 = vrot.slane %v592, 3
        %v607 = vsel %vm522, %v606, %v605
        %v608 = vrot.slane %v593, 2
        %v609 = vsel %vm525, %v608, %v607
        %v610 = vpack.c.b16 %v609, %v609
        %612 = vst.msk [vmem:[#allocation2 + $0x10] sm:$0xc0] %vm529, %v610
        %v613 = vrot.slane %v590, 2
        %v614 = vrot.slane %v591, 1
        %v615 = vsel %vm505, %v614, %v613
        %v616 = vsel %vm508, %v592, %v615
        %v617 = vrot.slane %v593, 7
        %v618 = vsel %vm511, %v617, %v616
        %v619 = vpack.c.b16 %v618, %v618
        %621 = vst.msk [vmem:[#allocation2 + $0x18] sm:$0x3] %vm539, %v619
        %v622 = vrot.slane %v590, 7
        %v623 = vrot.slane %v591, 6
        %v624 = vsel %vm519, %v623, %v622
        %v625 = vrot.slane %v592, 5
        %v626 = vsel %vm522, %v625, %v624
        %v627 = vrot.slane %v593, 4
        %v628 = vsel %vm525, %v627, %v626
        %v629 = vpack.c.b16 %v628, %v628
        %631 = vst.msk [vmem:[#allocation2 + $0x18] sm:$0xc] %vm550, %v629
        %v632 = vrot.slane %v590, 4
        %v633 = vrot.slane %v591, 3
        %v634 = vsel %vm505, %v633, %v632
        %v635 = vrot.slane %v592, 2
        %v636 = vsel %vm508, %v635, %v634
        %v637 = vrot.slane %v593, 1
        %v638 = vsel %vm511, %v637, %v636
        %v639 = vpack.c.b16 %v638, %v638
        %641 = vst.msk [vmem:[#allocation2 + $0x18] sm:$0x30] %vm515, %v639
        %v642 = vrot.slane %v590, 1
        %v643 = vsel %vm519, %v591, %v642
        %v644 = vrot.slane %v592, 7
        %v645 = vsel %vm522, %v644, %v643
        %v646 = vrot.slane %v593, 6
        %v647 = vsel %vm525, %v646, %v645
        %v648 = vpack.c.b16 %v647, %v647
        %650 = vst.msk [vmem:[#allocation2 + $0x18] sm:$0xc0] %vm529, %v648
        %v651 = vrot.slane %v590, 6
        %v652 = vrot.slane %v591, 5
        %v653 = vsel %vm505, %v652, %v651
        %v654 = vrot.slane %v592, 4
        %v655 = vsel %vm508, %v654, %v653
        %v656 = vrot.slane %v593, 3
        %v657 = vsel %vm511, %v656, %v655
        %v658 = vpack.c.b16 %v657, %v657
        %660 = vst.msk [vmem:[#allocation2 + $0x20] sm:$0x3] %vm539, %v658
        %v661 = vrot.slane %v590, 3
        %v662 = vrot.slane %v591, 2
        %v663 = vsel %vm519, %v662, %v661
        %v664 = vrot.slane %v592, 1
        %v665 = vsel %vm522, %v664, %v663
        %v666 = vsel %vm525, %v593, %v665
        %v667 = vpack.c.b16 %v666, %v666
        %669 = vst.msk [vmem:[#allocation2 + $0x20] sm:$0xc] %vm550, %v667
        %v670 = vld [vmem:[#allocation2] sm:$0xff]
        %v671 = vld [vmem:[#allocation2 + $0x8] sm:$0xff]
        %v672 = vld [vmem:[#allocation2 + $0x10] sm:$0xff]
        %v673 = vld [vmem:[#allocation2 + $0x18] sm:$0xff]
        %674 = vst [vmem:[#allocation5] sm:$0xff] %v670
        %675 = vst [vmem:[#allocation5 + $0x28] sm:$0xff] %v671
        %676 = vst [vmem:[#allocation5 + $0x50] sm:$0xff] %v672
        %677 = vst [vmem:[#allocation5 + $0x78] sm:$0xff] %v673
        %v678 = vld [vmem:[#allocation2] sm:$0xfc]
        %v679 = vld [vmem:[#allocation2 + $0x8] sm:$0xff]
        %v680 = vld [vmem:[#allocation2 + $0x10] sm:$0xff]
        %v681 = vld [vmem:[#allocation2 + $0x18] sm:$0xff]
        %v682 = vld [vmem:[#allocation2 + $0x20] sm:$0x3]
        %vm688 = vcmask 1045504
        %v689 = vrot.slane %v678, 2
        %v690 = vrot.slane %v679, 2
        %v691 = vsel %vm688, %v689, %v690
        %v692 = vrot.slane %v680, 2
        %v693 = vsel %vm688, %v690, %v692
        %v694 = vrot.slane %v681, 2
        %v695 = vsel %vm688, %v692, %v694
        %v696 = vrot.slane %v682, 2
        %v697 = vsel %vm688, %v694, %v696
        %702 = vst [vmem:[#allocation5 + $0x8] sm:$0xff] %v691
        %703 = vst [vmem:[#allocation5 + $0x30] sm:$0xff] %v693
        %704 = vst [vmem:[#allocation5 + $0x58] sm:$0xff] %v695
        %705 = vst [vmem:[#allocation5 + $0x80] sm:$0xff] %v697
        %v706 = vld [vmem:[#allocation2] sm:$0xf0]
        %v707 = vld [vmem:[#allocation2 + $0x8] sm:$0xff]
        %v708 = vld [vmem:[#allocation2 + $0x10] sm:$0xff]
        %v709 = vld [vmem:[#allocation2 + $0x18] sm:$0xff]
        %v710 = vld [vmem:[#allocation2 + $0x20] sm:$0xf]
        %vm716 = vcmask 1043456
        %v717 = vrot.slane %v706, 4
        %v718 = vrot.slane %v707, 4
        %v719 = vsel %vm716, %v717, %v718
        %v720 = vrot.slane %v708, 4
        %v721 = vsel %vm716, %v718, %v720
        %v722 = vrot.slane %v709, 4
        %v723 = vsel %vm716, %v720, %v722
        %v724 = vrot.slane %v710, 4
        %v725 = vsel %vm716, %v722, %v724
        %730 = vst [vmem:[#allocation5 + $0x10] sm:$0xff] %v719
        %731 = vst [vmem:[#allocation5 + $0x38] sm:$0xff] %v721
        %732 = vst [vmem:[#allocation5 + $0x60] sm:$0xff] %v723
        %733 = vst [vmem:[#allocation5 + $0x88] sm:$0xff] %v725
        %v734 = vld [vmem:[#allocation2] sm:$0xc0]
        %v735 = vld [vmem:[#allocation2 + $0x8] sm:$0xff]
        %v736 = vld [vmem:[#allocation2 + $0x10] sm:$0xff]
        %v737 = vld [vmem:[#allocation2 + $0x18] sm:$0xff]
        %v738 = vld [vmem:[#allocation2 + $0x20] sm:$0x3f]
        %vm744 = vcmask 1041408
        %v745 = vrot.slane %v734, 6
        %v746 = vrot.slane %v735, 6
        %v747 = vsel %vm744, %v745, %v746
        %v748 = vrot.slane %v736, 6
        %v749 = vsel %vm744, %v746, %v748
        %v750 = vrot.slane %v737, 6
        %v751 = vsel %vm744, %v748, %v750
        %v752 = vrot.slane %v738, 6
        %v753 = vsel %vm744, %v750, %v752
        %758 = vst [vmem:[#allocation5 + $0x18] sm:$0xff] %v747
        %759 = vst [vmem:[#allocation5 + $0x40] sm:$0xff] %v749
        %760 = vst [vmem:[#allocation5 + $0x68] sm:$0xff] %v751
        %761 = vst [vmem:[#allocation5 + $0x90] sm:$0xff] %v753
        %v762 = vld [vmem:[#allocation2 + $0x8] sm:$0xff]
        %v763 = vld [vmem:[#allocation2 + $0x10] sm:$0xff]
        %v764 = vld [vmem:[#allocation2 + $0x18] sm:$0xff]
        %v765 = vld [vmem:[#allocation2 + $0x20] sm:$0xff]
        %766 = vst [vmem:[#allocation5 + $0x20] sm:$0xff] %v762
        %767 = vst [vmem:[#allocation5 + $0x48] sm:$0xff] %v763
        %768 = vst [vmem:[#allocation5 + $0x70] sm:$0xff] %v764
        %769 = vst [vmem:[#allocation5 + $0x98] sm:$0xff] %v765
        %v770 = vld [vmem:[#allocation5] sm:$0xff]
        %v771 = vld [vmem:[#allocation5 + $0x8] sm:$0xff]
        %v772 = vld [vmem:[#allocation5 + $0x10] sm:$0xff]
        %v773 = vld [vmem:[#allocation5 + $0x18] sm:$0xff]
        %v774 = vld [vmem:[#allocation5 + $0x20] sm:$0xff]
        %v775 = vld [vmem:[#allocation5 + $0x28] sm:$0xff]
        %v776 = vld [vmem:[#allocation5 + $0x30] sm:$0xff]
        %v777 = vld [vmem:[#allocation5 + $0x38] sm:$0xff]
        %v778 = vld [vmem:[#allocation5 + $0x40] sm:$0xff]
        %v779 = vld [vmem:[#allocation5 + $0x48] sm:$0xff]
        %v780 = vld [vmem:[#allocation5 + $0x50] sm:$0xff]
        %v781 = vld [vmem:[#allocation5 + $0x58] sm:$0xff]
        %v782 = vld [vmem:[#allocation5 + $0x60] sm:$0xff]
        %v783 = vld [vmem:[#allocation5 + $0x68] sm:$0xff]
        %v784 = vld [vmem:[#allocation5 + $0x70] sm:$0xff]
        %v785 = vld [vmem:[#allocation5 + $0x78] sm:$0xff]
        %v786 = vld [vmem:[#allocation5 + $0x80] sm:$0xff]
        %v787 = vld [vmem:[#allocation5 + $0x88] sm:$0xff]
        %v788 = vld [vmem:[#allocation5 + $0x90] sm:$0xff]
        %v789 = vld [vmem:[#allocation5 + $0x98] sm:$0xff]
        %v790 = vld [vmem:[%s1] sm:$0xff]
        %v791 = vld [vmem:[%s1 + $0x8] sm:$0xff]
        %v792 = vld [vmem:[%s1 + $0x10] sm:$0xff]
        %v793 = vld [vmem:[%s1 + $0x18] sm:$0xff]
        %v794 = vld [vmem:[%s1 + $0x20] sm:$0xff]
        %v795 = vld [vmem:[%s1 + $0x28] sm:$0xff]
        %v796 = vld [vmem:[%s1 + $0x30] sm:$0xff]
        %v797 = vld [vmem:[%s1 + $0x38] sm:$0xff]
        %v798 = vld [vmem:[%s1 + $0x40] sm:$0xff]
        %v799 = vld [vmem:[%s1 + $0x48] sm:$0xff]
        %v800 = vld [vmem:[%s1 + $0x50] sm:$0xff]
        %v801 = vld [vmem:[%s1 + $0x58] sm:$0xff]
        %v802 = vld [vmem:[%s1 + $0x60] sm:$0xff]
        %v803 = vld [vmem:[%s1 + $0x68] sm:$0xff]
        %v804 = vld [vmem:[%s1 + $0x70] sm:$0xff]
        %v805 = vld [vmem:[%s1 + $0x78] sm:$0xff]
        %v806 = vld [vmem:[%s1 + $0x80] sm:$0xff]
        %v807 = vld [vmem:[%s1 + $0x88] sm:$0xff]
        %v808 = vld [vmem:[%s1 + $0x90] sm:$0xff]
        %v809 = vld [vmem:[%s1 + $0x98] sm:$0xff]
        %v810 = vld [vmem:[%s1 + $0xa0] sm:$0xff]
        %v811 = vld [vmem:[%s1 + $0xa8] sm:$0xff]
        %v812 = vld [vmem:[%s1 + $0xb0] sm:$0xff]
        %v813 = vld [vmem:[%s1 + $0xb8] sm:$0xff]
        %v814 = vld [vmem:[%s1 + $0xc0] sm:$0xff]
        %v815 = vld [vmem:[%s1 + $0xc8] sm:$0xff]
        %v816 = vld [vmem:[%s1 + $0xd0] sm:$0xff]
        %v817 = vld [vmem:[%s1 + $0xd8] sm:$0xff]
        %v818 = vld [vmem:[%s1 + $0xe0] sm:$0xff]
        %v819 = vld [vmem:[%s1 + $0xe8] sm:$0xff]
        %v820 = vld [vmem:[%s1 + $0xf0] sm:$0xff]
        %v821 = vld [vmem:[%s1 + $0xf8] sm:$0xff]
        %v822 = vld [vmem:[%s1 + $0x100] sm:$0xff]
        %v823 = vld [vmem:[%s1 + $0x108] sm:$0xff]
        %v824 = vld [vmem:[%s1 + $0x110] sm:$0xff]
        %v825 = vld [vmem:[%s1 + $0x118] sm:$0xff]
        %v826 = vld [vmem:[%s1 + $0x120] sm:$0xff]
        %v827 = vld [vmem:[%s1 + $0x128] sm:$0xff]
        %v828 = vld [vmem:[%s1 + $0x130] sm:$0xff]
        %v829 = vld [vmem:[%s1 + $0x138] sm:$0xff]
        %v830 = vld [vmem:[%s1 + $0x140] sm:$0xff]
        %v831 = vld [vmem:[%s1 + $0x148] sm:$0xff]
        %v832 = vld [vmem:[%s1 + $0x150] sm:$0xff]
        %v833 = vld [vmem:[%s1 + $0x158] sm:$0xff]
        %v834 = vld [vmem:[%s1 + $0x160] sm:$0xff]
        %v835 = vld [vmem:[%s1 + $0x168] sm:$0xff]
        %v836 = vld [vmem:[%s1 + $0x170] sm:$0xff]
        %v837 = vld [vmem:[%s1 + $0x178] sm:$0xff]
        %v838 = vld [vmem:[%s1 + $0x180] sm:$0xff]
        %v839 = vld [vmem:[%s1 + $0x188] sm:$0xff]
        %v840 = vld [vmem:[%s1 + $0x190] sm:$0xff]
        %v841 = vld [vmem:[%s1 + $0x198] sm:$0xff]
        %v842 = vld [vmem:[%s1 + $0x1a0] sm:$0xff]
        %v843 = vld [vmem:[%s1 + $0x1a8] sm:$0xff]
        %v844 = vld [vmem:[%s1 + $0x1b0] sm:$0xff]
        %v845 = vld [vmem:[%s1 + $0x1b8] sm:$0xff]
        %v846 = vld [vmem:[%s1 + $0x1c0] sm:$0xff]
        %v847 = vld [vmem:[%s1 + $0x1c8] sm:$0xff]
        %v848 = vld [vmem:[%s1 + $0x1d0] sm:$0xff]
        %v849 = vld [vmem:[%s1 + $0x1d8] sm:$0xff]
        %v850 = vld [vmem:[%s1 + $0x1e0] sm:$0xff]
        %v851 = vld [vmem:[%s1 + $0x1e8] sm:$0xff]
        %v852 = vld [vmem:[%s1 + $0x1f0] sm:$0xff]
        %v853 = vld [vmem:[%s1 + $0x1f8] sm:$0xff]
        %v854 = vld [vmem:[%s1 + $0x200] sm:$0xff]
        %v855 = vld [vmem:[%s1 + $0x208] sm:$0xff]
        %v856 = vld [vmem:[%s1 + $0x210] sm:$0xff]
        %v857 = vld [vmem:[%s1 + $0x218] sm:$0xff]
        %v858 = vld [vmem:[%s1 + $0x220] sm:$0xff]
        %v859 = vld [vmem:[%s1 + $0x228] sm:$0xff]
        %v860 = vld [vmem:[%s1 + $0x230] sm:$0xff]
        %v861 = vld [vmem:[%s1 + $0x238] sm:$0xff]
        %v862 = vld [vmem:[%s1 + $0x240] sm:$0xff]
        %v863 = vld [vmem:[%s1 + $0x248] sm:$0xff]
        %v864 = vld [vmem:[%s1 + $0x250] sm:$0xff]
        %v865 = vld [vmem:[%s1 + $0x258] sm:$0xff]
        %v866 = vld [vmem:[%s1 + $0x260] sm:$0xff]
        %v867 = vld [vmem:[%s1 + $0x268] sm:$0xff]
        %v868 = vld [vmem:[%s1 + $0x270] sm:$0xff]
        %v869 = vld [vmem:[%s1 + $0x278] sm:$0xff]
        %v870 = vld [vmem:[%s2] sm:$0x3]
        %v872 = vlaneseq
        %v873 = vshrl.u32 %v872, 7
        %v874 = vsub.s32 0, %v873
        %v875 = vrot.slane %v870, %v874
        %v876 = vlaneseq
        %v877 = vshrl.u32 %v876, 7
        %v878 = vsub.s32 1, %v877
        %v879 = vrot.slane %v870, %v878
        %v962 = vunpack.c.l.b16 %v790
        %v963 = vunpack.c.h.b16 %v790
        %v964 = vunpack.c.l.b16 %v791
        %v965 = vunpack.c.h.b16 %v791
        %v966 = vunpack.c.l.b16 %v792
        %v967 = vunpack.c.h.b16 %v792
        %v968 = vunpack.c.l.b16 %v793
        %v969 = vunpack.c.h.b16 %v793
        %v970 = vunpack.c.l.b16 %v794
        %v971 = vunpack.c.h.b16 %v794
        %v972 = vunpack.c.l.b16 %v795
        %v973 = vunpack.c.h.b16 %v795
        %v974 = vunpack.c.l.b16 %v796
        %v975 = vunpack.c.h.b16 %v796
        %v976 = vunpack.c.l.b16 %v797
        %v977 = vunpack.c.h.b16 %v797
        %v978 = vunpack.c.l.b16 %v798
        %v979 = vunpack.c.h.b16 %v798
        %v980 = vunpack.c.l.b16 %v799
        %v981 = vunpack.c.h.b16 %v799
        %v982 = vunpack.c.l.b16 %v800
        %v983 = vunpack.c.h.b16 %v800
        %v984 = vunpack.c.l.b16 %v801
        %v985 = vunpack.c.h.b16 %v801
        %v986 = vunpack.c.l.b16 %v802
        %v987 = vunpack.c.h.b16 %v802
        %v988 = vunpack.c.l.b16 %v803
        %v989 = vunpack.c.h.b16 %v803
        %v990 = vunpack.c.l.b16 %v804
        %v991 = vunpack.c.h.b16 %v804
        %v992 = vunpack.c.l.b16 %v805
        %v993 = vunpack.c.h.b16 %v805
        %v994 = vunpack.c.l.b16 %v806
        %v995 = vunpack.c.h.b16 %v806
        %v996 = vunpack.c.l.b16 %v807
        %v997 = vunpack.c.h.b16 %v807
        %v998 = vunpack.c.l.b16 %v808
        %v999 = vunpack.c.h.b16 %v808
        %v1000 = vunpack.c.l.b16 %v809
        %v1001 = vunpack.c.h.b16 %v809
        %v1002 = vunpack.c.l.b16 %v810
        %v1003 = vunpack.c.h.b16 %v810
        %v1004 = vunpack.c.l.b16 %v811
        %v1005 = vunpack.c.h.b16 %v811
        %v1006 = vunpack.c.l.b16 %v812
        %v1007 = vunpack.c.h.b16 %v812
        %v1008 = vunpack.c.l.b16 %v813
        %v1009 = vunpack.c.h.b16 %v813
        %v1010 = vunpack.c.l.b16 %v814
        %v1011 = vunpack.c.h.b16 %v814
        %v1012 = vunpack.c.l.b16 %v815
        %v1013 = vunpack.c.h.b16 %v815
        %v1014 = vunpack.c.l.b16 %v816
        %v1015 = vunpack.c.h.b16 %v816
        %v1016 = vunpack.c.l.b16 %v817
        %v1017 = vunpack.c.h.b16 %v817
        %v1018 = vunpack.c.l.b16 %v818
        %v1019 = vunpack.c.h.b16 %v818
        %v1020 = vunpack.c.l.b16 %v819
        %v1021 = vunpack.c.h.b16 %v819
        %v1022 = vunpack.c.l.b16 %v820
        %v1023 = vunpack.c.h.b16 %v820
        %v1024 = vunpack.c.l.b16 %v821
        %v1025 = vunpack.c.h.b16 %v821
        %v1026 = vunpack.c.l.b16 %v822
        %v1027 = vunpack.c.h.b16 %v822
        %v1028 = vunpack.c.l.b16 %v823
        %v1029 = vunpack.c.h.b16 %v823
        %v1030 = vunpack.c.l.b16 %v824
        %v1031 = vunpack.c.h.b16 %v824
        %v1032 = vunpack.c.l.b16 %v825
        %v1033 = vunpack.c.h.b16 %v825
        %v1034 = vunpack.c.l.b16 %v826
        %v1035 = vunpack.c.h.b16 %v826
        %v1036 = vunpack.c.l.b16 %v827
        %v1037 = vunpack.c.h.b16 %v827
        %v1038 = vunpack.c.l.b16 %v828
        %v1039 = vunpack.c.h.b16 %v828
        %v1040 = vunpack.c.l.b16 %v829
        %v1041 = vunpack.c.h.b16 %v829
        %v1042 = vunpack.c.l.b16 %v830
        %v1043 = vunpack.c.h.b16 %v830
        %v1044 = vunpack.c.l.b16 %v831
        %v1045 = vunpack.c.h.b16 %v831
        %v1046 = vunpack.c.l.b16 %v832
        %v1047 = vunpack.c.h.b16 %v832
        %v1048 = vunpack.c.l.b16 %v833
        %v1049 = vunpack.c.h.b16 %v833
        %v1050 = vunpack.c.l.b16 %v834
        %v1051 = vunpack.c.h.b16 %v834
        %v1052 = vunpack.c.l.b16 %v835
        %v1053 = vunpack.c.h.b16 %v835
        %v1054 = vunpack.c.l.b16 %v836
        %v1055 = vunpack.c.h.b16 %v836
        %v1056 = vunpack.c.l.b16 %v837
        %v1057 = vunpack.c.h.b16 %v837
        %v1058 = vunpack.c.l.b16 %v838
        %v1059 = vunpack.c.h.b16 %v838
        %v1060 = vunpack.c.l.b16 %v839
        %v1061 = vunpack.c.h.b16 %v839
        %v1062 = vunpack.c.l.b16 %v840
        %v1063 = vunpack.c.h.b16 %v840
        %v1064 = vunpack.c.l.b16 %v841
        %v1065 = vunpack.c.h.b16 %v841
        %v1066 = vunpack.c.l.b16 %v842
        %v1067 = vunpack.c.h.b16 %v842
        %v1068 = vunpack.c.l.b16 %v843
        %v1069 = vunpack.c.h.b16 %v843
        %v1070 = vunpack.c.l.b16 %v844
        %v1071 = vunpack.c.h.b16 %v844
        %v1072 = vunpack.c.l.b16 %v845
        %v1073 = vunpack.c.h.b16 %v845
        %v1074 = vunpack.c.l.b16 %v846
        %v1075 = vunpack.c.h.b16 %v846
        %v1076 = vunpack.c.l.b16 %v847
        %v1077 = vunpack.c.h.b16 %v847
        %v1078 = vunpack.c.l.b16 %v848
        %v1079 = vunpack.c.h.b16 %v848
        %v1080 = vunpack.c.l.b16 %v849
        %v1081 = vunpack.c.h.b16 %v849
        %v1082 = vunpack.c.l.b16 %v850
        %v1083 = vunpack.c.h.b16 %v850
        %v1084 = vunpack.c.l.b16 %v851
        %v1085 = vunpack.c.h.b16 %v851
        %v1086 = vunpack.c.l.b16 %v852
        %v1087 = vunpack.c.h.b16 %v852
        %v1088 = vunpack.c.l.b16 %v853
        %v1089 = vunpack.c.h.b16 %v853
        %v1090 = vunpack.c.l.b16 %v854
        %v1091 = vunpack.c.h.b16 %v854
        %v1092 = vunpack.c.l.b16 %v855
        %v1093 = vunpack.c.h.b16 %v855
        %v1094 = vunpack.c.l.b16 %v856
        %v1095 = vunpack.c.h.b16 %v856
        %v1096 = vunpack.c.l.b16 %v857
        %v1097 = vunpack.c.h.b16 %v857
        %v1098 = vunpack.c.l.b16 %v858
        %v1099 = vunpack.c.h.b16 %v858
        %v1100 = vunpack.c.l.b16 %v859
        %v1101 = vunpack.c.h.b16 %v859
        %v1102 = vunpack.c.l.b16 %v860
        %v1103 = vunpack.c.h.b16 %v860
        %v1104 = vunpack.c.l.b16 %v861
        %v1105 = vunpack.c.h.b16 %v861
        %v1106 = vunpack.c.l.b16 %v862
        %v1107 = vunpack.c.h.b16 %v862
        %v1108 = vunpack.c.l.b16 %v863
        %v1109 = vunpack.c.h.b16 %v863
        %v1110 = vunpack.c.l.b16 %v864
        %v1111 = vunpack.c.h.b16 %v864
        %v1112 = vunpack.c.l.b16 %v865
        %v1113 = vunpack.c.h.b16 %v865
        %v1114 = vunpack.c.l.b16 %v866
        %v1115 = vunpack.c.h.b16 %v866
        %v1116 = vunpack.c.l.b16 %v867
        %v1117 = vunpack.c.h.b16 %v867
        %v1118 = vunpack.c.l.b16 %v868
        %v1119 = vunpack.c.h.b16 %v868
        %v1120 = vunpack.c.l.b16 %v869
        %v1121 = vunpack.c.h.b16 %v869
        %v1122 = vpack.c.b16 %v964, %v962
        %v1123 = vpack.c.b16 %v965, %v963
        %v1124 = vpack.c.b16 %v968, %v966
        %v1125 = vpack.c.b16 %v969, %v967
        %v1126 = vpack.c.b16 %v972, %v970
        %v1127 = vpack.c.b16 %v973, %v971
        %v1128 = vpack.c.b16 %v976, %v974
        %v1129 = vpack.c.b16 %v977, %v975
        %v1130 = vpack.c.b16 %v980, %v978
        %v1131 = vpack.c.b16 %v981, %v979
        %v1132 = vpack.c.b16 %v984, %v982
        %v1133 = vpack.c.b16 %v985, %v983
        %v1134 = vpack.c.b16 %v988, %v986
        %v1135 = vpack.c.b16 %v989, %v987
        %v1136 = vpack.c.b16 %v992, %v990
        %v1137 = vpack.c.b16 %v993, %v991
        %v1138 = vpack.c.b16 %v996, %v994
        %v1139 = vpack.c.b16 %v997, %v995
        %v1140 = vpack.c.b16 %v1000, %v998
        %v1141 = vpack.c.b16 %v1001, %v999
        %v1142 = vpack.c.b16 %v1004, %v1002
        %v1143 = vpack.c.b16 %v1005, %v1003
        %v1144 = vpack.c.b16 %v1008, %v1006
        %v1145 = vpack.c.b16 %v1009, %v1007
        %v1146 = vpack.c.b16 %v1012, %v1010
        %v1147 = vpack.c.b16 %v1013, %v1011
        %v1148 = vpack.c.b16 %v1016, %v1014
        %v1149 = vpack.c.b16 %v1017, %v1015
        %v1150 = vpack.c.b16 %v1020, %v1018
        %v1151 = vpack.c.b16 %v1021, %v1019
        %v1152 = vpack.c.b16 %v1024, %v1022
        %v1153 = vpack.c.b16 %v1025, %v1023
        %v1154 = vpack.c.b16 %v1028, %v1026
        %v1155 = vpack.c.b16 %v1029, %v1027
        %v1156 = vpack.c.b16 %v1032, %v1030
        %v1157 = vpack.c.b16 %v1033, %v1031
        %v1158 = vpack.c.b16 %v1036, %v1034
        %v1159 = vpack.c.b16 %v1037, %v1035
        %v1160 = vpack.c.b16 %v1040, %v1038
        %v1161 = vpack.c.b16 %v1041, %v1039
        %v1162 = vpack.c.b16 %v1044, %v1042
        %v1163 = vpack.c.b16 %v1045, %v1043
        %v1164 = vpack.c.b16 %v1048, %v1046
        %v1165 = vpack.c.b16 %v1049, %v1047
        %v1166 = vpack.c.b16 %v1052, %v1050
        %v1167 = vpack.c.b16 %v1053, %v1051
        %v1168 = vpack.c.b16 %v1056, %v1054
        %v1169 = vpack.c.b16 %v1057, %v1055
        %v1170 = vpack.c.b16 %v1060, %v1058
        %v1171 = vpack.c.b16 %v1061, %v1059
        %v1172 = vpack.c.b16 %v1064, %v1062
        %v1173 = vpack.c.b16 %v1065, %v1063
        %v1174 = vpack.c.b16 %v1068, %v1066
        %v1175 = vpack.c.b16 %v1069, %v1067
        %v1176 = vpack.c.b16 %v1072, %v1070
        %v1177 = vpack.c.b16 %v1073, %v1071
        %v1178 = vpack.c.b16 %v1076, %v1074
        %v1179 = vpack.c.b16 %v1077, %v1075
        %v1180 = vpack.c.b16 %v1080, %v1078
        %v1181 = vpack.c.b16 %v1081, %v1079
        %v1182 = vpack.c.b16 %v1084, %v1082
        %v1183 = vpack.c.b16 %v1085, %v1083
        %v1184 = vpack.c.b16 %v1088, %v1086
        %v1185 = vpack.c.b16 %v1089, %v1087
        %v1186 = vpack.c.b16 %v1092, %v1090
        %v1187 = vpack.c.b16 %v1093, %v1091
        %v1188 = vpack.c.b16 %v1096, %v1094
        %v1189 = vpack.c.b16 %v1097, %v1095
        %v1190 = vpack.c.b16 %v1100, %v1098
        %v1191 = vpack.c.b16 %v1101, %v1099
        %v1192 = vpack.c.b16 %v1104, %v1102
        %v1193 = vpack.c.b16 %v1105, %v1103
        %v1194 = vpack.c.b16 %v1108, %v1106
        %v1195 = vpack.c.b16 %v1109, %v1107
        %v1196 = vpack.c.b16 %v1112, %v1110
        %v1197 = vpack.c.b16 %v1113, %v1111
        %v1198 = vpack.c.b16 %v1116, %v1114
        %v1199 = vpack.c.b16 %v1117, %v1115
        %v1200 = vpack.c.b16 %v1120, %v1118
        %v1201 = vpack.c.b16 %v1121, %v1119
        %1282 = vmatprep.subr.bf16.mxu0 %v1123
        %1283 = vmatpush1.bf16.msra.mxu0 %v1122
        %1284 = vmatprep.subr.bf16.mxu0 %v1125
        %1285 = vmatpush1.bf16.msra.mxu0 %v1124
        %1286 = vmatprep.subr.bf16.mxu0 %v1127
        %1287 = vmatpush1.bf16.msra.mxu0 %v1126
        %1288 = vmatprep.subr.bf16.mxu0 %v1129
        %1289 = vmatpush1.bf16.msra.mxu0 %v1128
        %1290 = vmatprep.subr.bf16.mxu0 %v1131
        %1291 = vmatpush1.bf16.msra.mxu0 %v1130
        %1292 = vmatprep.subr.bf16.mxu0 %v1133
        %1293 = vmatpush1.bf16.msra.mxu0 %v1132
        %1294 = vmatprep.subr.bf16.mxu0 %v1135
        %1295 = vmatpush1.bf16.msra.mxu0 %v1134
        %1296 = vmatprep.subr.bf16.mxu0 %v1137
        %1297 = vmatpush1.bf16.msra.mxu0 %v1136
        %1298 = vmatprep.subr.bf16.mxu0 %v1139
        %1299 = vmatpush1.bf16.msra.mxu0 %v1138
        %1300 = vmatprep.subr.bf16.mxu0 %v1141
        %1301 = vmatpush1.bf16.msra.mxu0 %v1140
        %1302 = vmatprep.subr.bf16.mxu0 %v1143
        %1303 = vmatpush1.bf16.msra.mxu0 %v1142
        %1304 = vmatprep.subr.bf16.mxu0 %v1145
        %1305 = vmatpush1.bf16.msra.mxu0 %v1144
        %1306 = vmatprep.subr.bf16.mxu0 %v1147
        %1307 = vmatpush1.bf16.msra.mxu0 %v1146
        %1308 = vmatprep.subr.bf16.mxu0 %v1149
        %1309 = vmatpush1.bf16.msra.mxu0 %v1148
        %1310 = vmatprep.subr.bf16.mxu0 %v1151
        %1311 = vmatpush1.bf16.msra.mxu0 %v1150
        %1312 = vmatprep.subr.bf16.mxu0 %v1153
        %1313 = vmatpush1.bf16.msra.mxu0 %v1152
        %1314 = vmatprep.mubr.bf16.mxu0 %v771
        %1315 = vmatmul.mubr.bf16.gmra.mrb[0].mxu0 %v770
        %v1316 = vpop.f32.mrb[0].mxu0
        %v1317 = vadd.f32 %v875, %v1316
        %v1318 = vpop.f32.mrb[0].mxu0
        %v1319 = vadd.f32 %v879, %v1318
        %v1320 = vpop.f32.mrb[0].mxu0
        %v1321 = vadd.f32 %v875, %v1320
        %v1322 = vpop.f32.mrb[0].mxu0
        %v1323 = vadd.f32 %v879, %v1322
        %1324 = vmatprep.mubr.bf16.mxu0 %v776
        %1325 = vmatmul.mubr.bf16.gmra.mrb[0].mxu0 %v775
        %v1326 = vpop.f32.mrb[0].mxu0
        %v1327 = vadd.f32 %v875, %v1326
        %v1328 = vpop.f32.mrb[0].mxu0
        %v1329 = vadd.f32 %v879, %v1328
        %v1330 = vpop.f32.mrb[0].mxu0
        %v1331 = vadd.f32 %v875, %v1330
        %v1332 = vpop.f32.mrb[0].mxu0
        %v1333 = vadd.f32 %v879, %v1332
        %1334 = vmatprep.mubr.bf16.mxu0 %v781
        %1335 = vmatmul.mubr.bf16.gmra.mrb[0].mxu0 %v780
        %v1336 = vpop.f32.mrb[0].mxu0
        %v1337 = vadd.f32 %v875, %v1336
        %v1338 = vpop.f32.mrb[0].mxu0
        %v1339 = vadd.f32 %v879, %v1338
        %v1340 = vpop.f32.mrb[0].mxu0
        %v1341 = vadd.f32 %v875, %v1340
        %v1342 = vpop.f32.mrb[0].mxu0
        %v1343 = vadd.f32 %v879, %v1342
        %1344 = vmatprep.mubr.bf16.mxu0 %v786
        %1345 = vmatmul.mubr.bf16.gmra.mrb[0].mxu0 %v785
        %v1346 = vpop.f32.mrb[0].mxu0
        %v1347 = vadd.f32 %v875, %v1346
        %v1348 = vpop.f32.mrb[0].mxu0
        %v1349 = vadd.f32 %v879, %v1348
        %v1350 = vpop.f32.mrb[0].mxu0
        %v1351 = vadd.f32 %v875, %v1350
        %v1352 = vpop.f32.mrb[0].mxu0
        %v1353 = vadd.f32 %v879, %v1352
        %1354 = vdwg.mxu0
        %1355 = vmatprep.subr.bf16.mxu0 %v1155
        %1356 = vmatpush1.bf16.msra.mxu0 %v1154
        %1357 = vmatprep.subr.bf16.mxu0 %v1157
        %1358 = vmatpush1.bf16.msra.mxu0 %v1156
        %1359 = vmatprep.subr.bf16.mxu0 %v1159
        %1360 = vmatpush1.bf16.msra.mxu0 %v1158
        %1361 = vmatprep.subr.bf16.mxu0 %v1161
        %1362 = vmatpush1.bf16.msra.mxu0 %v1160
        %1363 = vmatprep.subr.bf16.mxu0 %v1163
        %1364 = vmatpush1.bf16.msra.mxu0 %v1162
        %1365 = vmatprep.subr.bf16.mxu0 %v1165
        %1366 = vmatpush1.bf16.msra.mxu0 %v1164
        %1367 = vmatprep.subr.bf16.mxu0 %v1167
        %1368 = vmatpush1.bf16.msra.mxu0 %v1166
        %1369 = vmatprep.subr.bf16.mxu0 %v1169
        %1370 = vmatpush1.bf16.msra.mxu0 %v1168
        %1371 = vmatprep.subr.bf16.mxu0 %v1171
        %1372 = vmatpush1.bf16.msra.mxu0 %v1170
        %1373 = vmatprep.subr.bf16.mxu0 %v1173
        %1374 = vmatpush1.bf16.msra.mxu0 %v1172
        %1375 = vmatprep.subr.bf16.mxu0 %v1175
        %1376 = vmatpush1.bf16.msra.mxu0 %v1174
        %1377 = vmatprep.subr.bf16.mxu0 %v1177
        %1378 = vmatpush1.bf16.msra.mxu0 %v1176
        %1379 = vmatprep.subr.bf16.mxu0 %v1179
        %1380 = vmatpush1.bf16.msra.mxu0 %v1178
        %1381 = vmatprep.subr.bf16.mxu0 %v1181
        %1382 = vmatpush1.bf16.msra.mxu0 %v1180
        %1383 = vmatprep.subr.bf16.mxu0 %v1183
        %1384 = vmatpush1.bf16.msra.mxu0 %v1182
        %1385 = vmatprep.subr.bf16.mxu0 %v1185
        %1386 = vmatpush1.bf16.msra.mxu0 %v1184
        %1387 = vmatprep.mubr.bf16.mxu0 %v773
        %1388 = vmatmul.mubr.bf16.gmra.mrb[0].mxu0 %v772
        %v1389 = vpop.f32.mrb[0].mxu0
        %v1390 = vadd.f32 %v1317, %v1389
        %v1391 = vpop.f32.mrb[0].mxu0
        %v1392 = vadd.f32 %v1319, %v1391
        %v1393 = vpop.f32.mrb[0].mxu0
        %v1394 = vadd.f32 %v1321, %v1393
        %v1395 = vpop.f32.mrb[0].mxu0
        %v1396 = vadd.f32 %v1323, %v1395
        %1397 = vmatprep.mubr.bf16.mxu0 %v778
        %1398 = vmatmul.mubr.bf16.gmra.mrb[0].mxu0 %v777
        %v1399 = vpop.f32.mrb[0].mxu0
        %v1400 = vadd.f32 %v1327, %v1399
        %v1401 = vpop.f32.mrb[0].mxu0
        %v1402 = vadd.f32 %v1329, %v1401
        %v1403 = vpop.f32.mrb[0].mxu0
        %v1404 = vadd.f32 %v1331, %v1403
        %v1405 = vpop.f32.mrb[0].mxu0
        %v1406 = vadd.f32 %v1333, %v1405
        %1407 = vmatprep.mubr.bf16.mxu0 %v783
        %1408 = vmatmul.mubr.bf16.gmra.mrb[0].mxu0 %v782
        %v1409 = vpop.f32.mrb[0].mxu0
        %v1410 = vadd.f32 %v1337, %v1409
        %v1411 = vpop.f32.mrb[0].mxu0
        %v1412 = vadd.f32 %v1339, %v1411
        %v1413 = vpop.f32.mrb[0].mxu0
        %v1414 = vadd.f32 %v1341, %v1413
        %v1415 = vpop.f32.mrb[0].mxu0
        %v1416 = vadd.f32 %v1343, %v1415
        %1417 = vmatprep.mubr.bf16.mxu0 %v788
        %1418 = vmatmul.mubr.bf16.gmra.mrb[0].mxu0 %v787
        %v1419 = vpop.f32.mrb[0].mxu0
        %v1420 = vadd.f32 %v1347, %v1419
        %v1421 = vpop.f32.mrb[0].mxu0
        %v1422 = vadd.f32 %v1349, %v1421
        %v1423 = vpop.f32.mrb[0].mxu0
        %v1424 = vadd.f32 %v1351, %v1423
        %v1425 = vpop.f32.mrb[0].mxu0
        %v1426 = vadd.f32 %v1353, %v1425
        %1427 = vdwg.mxu0
        %1428 = vmatprep.subr.bf16.mxu0 %v1187
        %1429 = vmatpush1.bf16.msra.mxu0 %v1186
        %1430 = vmatprep.subr.bf16.mxu0 %v1189
        %1431 = vmatpush1.bf16.msra.mxu0 %v1188
        %1432 = vmatprep.subr.bf16.mxu0 %v1191
        %1433 = vmatpush1.bf16.msra.mxu0 %v1190
        %1434 = vmatprep.subr.bf16.mxu0 %v1193
        %1435 = vmatpush1.bf16.msra.mxu0 %v1192
        %1436 = vmatprep.subr.bf16.mxu0 %v1195
        %1437 = vmatpush1.bf16.msra.mxu0 %v1194
        %1438 = vmatprep.subr.bf16.mxu0 %v1197
        %1439 = vmatpush1.bf16.msra.mxu0 %v1196
        %1440 = vmatprep.subr.bf16.mxu0 %v1199
        %1441 = vmatpush1.bf16.msra.mxu0 %v1198
        %1442 = vmatprep.subr.bf16.mxu0 %v1201
        %1443 = vmatpush1.bf16.msra.mxu0 %v1200
        %1444 = vmatprep.subr.bf16.mxu0 0
        %1445 = vmatpush1.bf16.msra.mxu0 0
        %1446 = vmatprep.subr.bf16.mxu0 0
        %1447 = vmatpush1.bf16.msra.mxu0 0
        %1448 = vmatprep.subr.bf16.mxu0 0
        %1449 = vmatpush1.bf16.msra.mxu0 0
        %1450 = vmatprep.subr.bf16.mxu0 0
        %1451 = vmatpush1.bf16.msra.mxu0 0
        %1452 = vmatprep.subr.bf16.mxu0 0
        %1453 = vmatpush1.bf16.msra.mxu0 0
        %1454 = vmatprep.subr.bf16.mxu0 0
        %1455 = vmatpush1.bf16.msra.mxu0 0
        %1456 = vmatprep.subr.bf16.mxu0 0
        %1457 = vmatpush1.bf16.msra.mxu0 0
        %1458 = vmatprep.subr.bf16.mxu0 0
        %1459 = vmatpush1.bf16.msra.mxu0 0
        %1460 = vmatprep.mubr.bf16.mxu0 0
        %1461 = vmatmul.mubr.bf16.gmra.mrb[0].mxu0 %v774
        %v1462 = vpop.f32.mrb[0].mxu0
        %v1463 = vadd.f32 %v1390, %v1462
        %v1464 = vpop.f32.mrb[0].mxu0
        %v1465 = vadd.f32 %v1392, %v1464
        %v1466 = vpop.f32.mrb[0].mxu0
        %v1467 = vadd.f32 %v1394, %v1466
        %v1468 = vpop.f32.mrb[0].mxu0
        %v1469 = vadd.f32 %v1396, %v1468
        %1470 = vmatprep.mubr.bf16.mxu0 0
        %1471 = vmatmul.mubr.bf16.gmra.mrb[0].mxu0 %v779
        %v1472 = vpop.f32.mrb[0].mxu0
        %v1473 = vadd.f32 %v1400, %v1472
        %v1474 = vpop.f32.mrb[0].mxu0
        %v1475 = vadd.f32 %v1402, %v1474
        %v1476 = vpop.f32.mrb[0].mxu0
        %v1477 = vadd.f32 %v1404, %v1476
        %v1478 = vpop.f32.mrb[0].mxu0
        %v1479 = vadd.f32 %v1406, %v1478
        %1480 = vmatprep.mubr.bf16.mxu0 0
        %1481 = vmatmul.mubr.bf16.gmra.mrb[0].mxu0 %v784
        %v1482 = vpop.f32.mrb[0].mxu0
        %v1483 = vadd.f32 %v1410, %v1482
        %v1484 = vpop.f32.mrb[0].mxu0
        %v1485 = vadd.f32 %v1412, %v1484
        %v1486 = vpop.f32.mrb[0].mxu0
        %v1487 = vadd.f32 %v1414, %v1486
        %v1488 = vpop.f32.mrb[0].mxu0
        %v1489 = vadd.f32 %v1416, %v1488
        %1490 = vmatprep.mubr.bf16.mxu0 0
        %1491 = vmatmul.mubr.bf16.gmra.mrb[0].mxu0 %v789
        %v1492 = vpop.f32.mrb[0].mxu0
        %v1493 = vadd.f32 %v1420, %v1492
        %v1494 = vpop.f32.mrb[0].mxu0
        %v1495 = vadd.f32 %v1422, %v1494
        %v1496 = vpop.f32.mrb[0].mxu0
        %v1497 = vadd.f32 %v1424, %v1496
        %v1498 = vpop.f32.mrb[0].mxu0
        %v1499 = vadd.f32 %v1426, %v1498
        %1500 = vdwg.mxu0
        %v1501 = vmax.f32 %v1463, 0.0
        %v1502 = vmax.f32 %v1465, 0.0
        %v1503 = vmax.f32 %v1467, 0.0
        %v1504 = vmax.f32 %v1469, 0.0
        %v1505 = vmax.f32 %v1473, 0.0
        %v1506 = vmax.f32 %v1475, 0.0
        %v1507 = vmax.f32 %v1477, 0.0
        %v1508 = vmax.f32 %v1479, 0.0
        %v1509 = vmax.f32 %v1483, 0.0
        %v1510 = vmax.f32 %v1485, 0.0
        %v1511 = vmax.f32 %v1487, 0.0
        %v1512 = vmax.f32 %v1489, 0.0
        %v1513 = vmax.f32 %v1493, 0.0
        %v1514 = vmax.f32 %v1495, 0.0
        %v1515 = vmax.f32 %v1497, 0.0
        %v1516 = vmax.f32 %v1499, 0.0
        %v1517 = vmax.f32 %v1501, %v1502
        %v1518 = vmax.f32 %v1503, %v1504
        %v1519 = vmax.f32 %v1505, %v1506
        %v1520 = vmax.f32 %v1507, %v1508
        %v1521 = vmax.f32 %v1509, %v1510
        %v1522 = vmax.f32 %v1511, %v1512
        %v1523 = vmax.f32 %v1513, %v1514
        %v1524 = vmax.f32 %v1515, %v1516
        %v1526 = vrot.slane %v1517, 4
        %v1528 = vmax.f32 %v1517, %v1526
        %v1529 = vpack.c.bf16 %v1528, %v1528
        %v1531 = vrot.slane %v1529, 4
        %1533 = vst [vmem:[#allocation3] sm:$0x30] %v1531
        %v1535 = vrot.slane %v1518, 4
        %v1537 = vmax.f32 %v1518, %v1535
        %v1538 = vpack.c.bf16 %v1537, %v1537
        %v1540 = vrot.slane %v1538, 2
        %1542 = vst [vmem:[#allocation3] sm:$0xc0] %v1540
        %v1544 = vrot.slane %v1519, 4
        %v1546 = vmax.f32 %v1519, %v1544
        %v1547 = vpack.c.bf16 %v1546, %v1546
        %1548 = vst [vmem:[#allocation3 + $0x8] sm:$0x3] %v1547
        %v1550 = vrot.slane %v1520, 4
        %v1552 = vmax.f32 %v1520, %v1550
        %v1553 = vpack.c.bf16 %v1552, %v1552
        %v1555 = vrot.slane %v1553, 6
        %1557 = vst [vmem:[#allocation3 + $0x8] sm:$0xc] %v1555
        %v1559 = vrot.slane %v1521, 4
        %v1561 = vmax.f32 %v1521, %v1559
        %v1562 = vpack.c.bf16 %v1561, %v1561
        %v1564 = vrot.slane %v1562, 4
        %1566 = vst [vmem:[#allocation3 + $0x8] sm:$0x30] %v1564
        %v1568 = vrot.slane %v1522, 4
        %v1570 = vmax.f32 %v1522, %v1568
        %v1571 = vpack.c.bf16 %v1570, %v1570
        %v1573 = vrot.slane %v1571, 2
        %1575 = vst [vmem:[#allocation3 + $0x8] sm:$0xc0] %v1573
        %v1577 = vrot.slane %v1523, 4
        %v1579 = vmax.f32 %v1523, %v1577
        %v1580 = vpack.c.bf16 %v1579, %v1579
        %1581 = vst [vmem:[#allocation3 + $0x10] sm:$0x3] %v1580
        %v1583 = vrot.slane %v1524, 4
        %v1585 = vmax.f32 %v1524, %v1583
        %v1586 = vpack.c.bf16 %v1585, %v1585
        %v1588 = vrot.slane %v1586, 6
        %1590 = vst [vmem:[#allocation3 + $0x10] sm:$0xc] %v1588
        %v1591 = vld [vmem:[#allocation3] sm:$0xff]
        %v1592 = vld [vmem:[#allocation3 + $0x8] sm:$0xff]
        %1593 = vst [vmem:[#allocation6] sm:$0xff] %v1591
        %1594 = vst [vmem:[#allocation6 + $0x28] sm:$0xff] %v1592
        %v1595 = vld [vmem:[#allocation3] sm:$0xfc]
        %v1596 = vld [vmem:[#allocation3 + $0x8] sm:$0xff]
        %v1597 = vld [vmem:[#allocation3 + $0x10] sm:$0x3]
        %v1601 = vrot.slane %v1595, 2
        %v1602 = vrot.slane %v1596, 2
        %v1603 = vsel %vm688, %v1601, %v1602
        %v1604 = vrot.slane %v1597, 2
        %v1605 = vsel %vm688, %v1602, %v1604
        %1608 = vst [vmem:[#allocation6 + $0x8] sm:$0xff] %v1603
        %1609 = vst [vmem:[#allocation6 + $0x30] sm:$0xff] %v1605
        %v1610 = vld [vmem:[#allocation3] sm:$0xf0]
        %v1611 = vld [vmem:[#allocation3 + $0x8] sm:$0xff]
        %v1612 = vld [vmem:[#allocation3 + $0x10] sm:$0xf]
        %v1616 = vrot.slane %v1610, 4
        %v1617 = vrot.slane %v1611, 4
        %v1618 = vsel %vm716, %v1616, %v1617
        %v1619 = vrot.slane %v1612, 4
        %v1620 = vsel %vm716, %v1617, %v1619
        %1623 = vst [vmem:[#allocation6 + $0x10] sm:$0xff] %v1618
        %1624 = vst [vmem:[#allocation6 + $0x38] sm:$0xff] %v1620
        %v1625 = vld [vmem:[#allocation3] sm:$0xc0]
        %v1626 = vld [vmem:[#allocation3 + $0x8] sm:$0xff]
        %v1627 = vld [vmem:[#allocation3 + $0x10] sm:$0x3f]
        %v1631 = vrot.slane %v1625, 6
        %v1632 = vrot.slane %v1626, 6
        %v1633 = vsel %vm744, %v1631, %v1632
        %v1634 = vrot.slane %v1627, 6
        %v1635 = vsel %vm744, %v1632, %v1634
        %1638 = vst [vmem:[#allocation6 + $0x18] sm:$0xff] %v1633
        %1639 = vst [vmem:[#allocation6 + $0x40] sm:$0xff] %v1635
        %v1640 = vld [vmem:[#allocation3 + $0x8] sm:$0xff]
        %v1641 = vld [vmem:[#allocation3 + $0x10] sm:$0xff]
        %1642 = vst [vmem:[#allocation6 + $0x20] sm:$0xff] %v1640
        %1643 = vst [vmem:[#allocation6 + $0x48] sm:$0xff] %v1641
        %v1644 = vld [vmem:[#allocation6] sm:$0xff]
        %v1645 = vld [vmem:[#allocation6 + $0x8] sm:$0xff]
        %v1646 = vld [vmem:[#allocation6 + $0x10] sm:$0xff]
        %v1647 = vld [vmem:[#allocation6 + $0x18] sm:$0xff]
        %v1648 = vld [vmem:[#allocation6 + $0x20] sm:$0xff]
        %v1649 = vld [vmem:[#allocation6 + $0x28] sm:$0xff]
        %v1650 = vld [vmem:[#allocation6 + $0x30] sm:$0xff]
        %v1651 = vld [vmem:[#allocation6 + $0x38] sm:$0xff]
        %v1652 = vld [vmem:[#allocation6 + $0x40] sm:$0xff]
        %v1653 = vld [vmem:[#allocation6 + $0x48] sm:$0xff]
        %v1654 = vld [vmem:[%s3] sm:$0xf]
        %v1655 = vld [vmem:[%s3 + $0x4] sm:$0xf]
        %v1656 = vld [vmem:[%s3 + $0x8] sm:$0xf]
        %v1657 = vld [vmem:[%s3 + $0xc] sm:$0xf]
        %v1658 = vld [vmem:[%s3 + $0x10] sm:$0xf]
        %v1659 = vld [vmem:[%s3 + $0x14] sm:$0xf]
        %v1660 = vld [vmem:[%s3 + $0x18] sm:$0xf]
        %v1661 = vld [vmem:[%s3 + $0x1c] sm:$0xf]
        %v1662 = vld [vmem:[%s3 + $0x20] sm:$0xf]
        %v1663 = vld [vmem:[%s3 + $0x24] sm:$0xf]
        %v1664 = vld [vmem:[%s3 + $0x28] sm:$0xf]
        %v1665 = vld [vmem:[%s3 + $0x2c] sm:$0xf]
        %v1666 = vld [vmem:[%s3 + $0x30] sm:$0xf]
        %v1667 = vld [vmem:[%s3 + $0x34] sm:$0xf]
        %v1668 = vld [vmem:[%s3 + $0x38] sm:$0xf]
        %v1669 = vld [vmem:[%s3 + $0x3c] sm:$0xf]
        %v1670 = vld [vmem:[%s3 + $0x40] sm:$0xf]
        %v1671 = vld [vmem:[%s3 + $0x44] sm:$0xf]
        %v1672 = vld [vmem:[%s3 + $0x48] sm:$0xf]
        %v1673 = vld [vmem:[%s3 + $0x4c] sm:$0xf]
        %v1674 = vld [vmem:[%s3 + $0x50] sm:$0xf]
        %v1675 = vld [vmem:[%s3 + $0x54] sm:$0xf]
        %v1676 = vld [vmem:[%s3 + $0x58] sm:$0xf]
        %v1677 = vld [vmem:[%s3 + $0x5c] sm:$0xf]
        %v1678 = vld [vmem:[%s3 + $0x60] sm:$0xf]
        %v1679 = vld [vmem:[%s3 + $0x64] sm:$0xf]
        %v1680 = vld [vmem:[%s3 + $0x68] sm:$0xf]
        %v1681 = vld [vmem:[%s3 + $0x6c] sm:$0xf]
        %v1682 = vld [vmem:[%s3 + $0x70] sm:$0xf]
        %v1683 = vld [vmem:[%s3 + $0x74] sm:$0xf]
        %v1684 = vld [vmem:[%s3 + $0x78] sm:$0xf]
        %v1685 = vld [vmem:[%s3 + $0x7c] sm:$0xf]
        %v1686 = vld [vmem:[%s3 + $0x80] sm:$0xf]
        %v1687 = vld [vmem:[%s3 + $0x84] sm:$0xf]
        %v1688 = vld [vmem:[%s3 + $0x88] sm:$0xf]
        %v1689 = vld [vmem:[%s3 + $0x8c] sm:$0xf]
        %v1690 = vld [vmem:[%s3 + $0x90] sm:$0xf]
        %v1691 = vld [vmem:[%s3 + $0x94] sm:$0xf]
        %v1692 = vld [vmem:[%s3 + $0x98] sm:$0xf]
        %v1693 = vld [vmem:[%s3 + $0x9c] sm:$0xf]
        %v1694 = vld [vmem:[%s3 + $0xa0] sm:$0xf]
        %v1695 = vld [vmem:[%s3 + $0xa4] sm:$0xf]
        %v1696 = vld [vmem:[%s3 + $0xa8] sm:$0xf]
        %v1697 = vld [vmem:[%s3 + $0xac] sm:$0xf]
        %v1698 = vld [vmem:[%s3 + $0xb0] sm:$0xf]
        %v1699 = vld [vmem:[%s3 + $0xb4] sm:$0xf]
        %v1700 = vld [vmem:[%s3 + $0xb8] sm:$0xf]
        %v1701 = vld [vmem:[%s3 + $0xbc] sm:$0xf]
        %v1702 = vld [vmem:[%s3 + $0xc0] sm:$0xf]
        %v1703 = vld [vmem:[%s3 + $0xc4] sm:$0xf]
        %v1704 = vld [vmem:[%s3 + $0xc8] sm:$0xf]
        %v1705 = vld [vmem:[%s3 + $0xcc] sm:$0xf]
        %v1706 = vld [vmem:[%s3 + $0xd0] sm:$0xf]
        %v1707 = vld [vmem:[%s3 + $0xd4] sm:$0xf]
        %v1708 = vld [vmem:[%s3 + $0xd8] sm:$0xf]
        %v1709 = vld [vmem:[%s3 + $0xdc] sm:$0xf]
        %v1710 = vld [vmem:[%s3 + $0xe0] sm:$0xf]
        %v1711 = vld [vmem:[%s3 + $0xe4] sm:$0xf]
        %v1712 = vld [vmem:[%s3 + $0xe8] sm:$0xf]
        %v1713 = vld [vmem:[%s3 + $0xec] sm:$0xf]
        %v1714 = vld [vmem:[%s3 + $0xf0] sm:$0xf]
        %v1715 = vld [vmem:[%s3 + $0xf4] sm:$0xf]
        %v1716 = vld [vmem:[%s3 + $0xf8] sm:$0xf]
        %v1717 = vld [vmem:[%s3 + $0xfc] sm:$0xf]
        %v1718 = vld [vmem:[%s3 + $0x100] sm:$0xf]
        %v1719 = vld [vmem:[%s3 + $0x104] sm:$0xf]
        %v1720 = vld [vmem:[%s3 + $0x108] sm:$0xf]
        %v1721 = vld [vmem:[%s3 + $0x10c] sm:$0xf]
        %v1722 = vld [vmem:[%s3 + $0x110] sm:$0xf]
        %v1723 = vld [vmem:[%s3 + $0x114] sm:$0xf]
        %v1724 = vld [vmem:[%s3 + $0x118] sm:$0xf]
        %v1725 = vld [vmem:[%s3 + $0x11c] sm:$0xf]
        %v1726 = vld [vmem:[%s3 + $0x120] sm:$0xf]
        %v1727 = vld [vmem:[%s3 + $0x124] sm:$0xf]
        %v1728 = vld [vmem:[%s3 + $0x128] sm:$0xf]
        %v1729 = vld [vmem:[%s3 + $0x12c] sm:$0xf]
        %v1730 = vld [vmem:[%s3 + $0x130] sm:$0xf]
        %v1731 = vld [vmem:[%s3 + $0x134] sm:$0xf]
        %v1732 = vld [vmem:[%s3 + $0x138] sm:$0xf]
        %v1733 = vld [vmem:[%s3 + $0x13c] sm:$0xf]
        %v1734 = vld [vmem:[%s4] sm:$0x1]
        %v1736 = vlaneseq
        %v1737 = vshrl.u32 %v1736, 7
        %v1738 = vsub.s32 0, %v1737
        %v1739 = vrot.slane %v1734, %v1738
        %v1821 = vunpack.c.l.b16 %v1654
        %v1822 = vunpack.c.l.b16 %v1655
        %v1823 = vunpack.c.l.b16 %v1656
        %v1824 = vunpack.c.l.b16 %v1657
        %v1825 = vunpack.c.l.b16 %v1658
        %v1826 = vunpack.c.l.b16 %v1659
        %v1827 = vunpack.c.l.b16 %v1660
        %v1828 = vunpack.c.l.b16 %v1661
        %v1829 = vunpack.c.l.b16 %v1662
        %v1830 = vunpack.c.l.b16 %v1663
        %v1831 = vunpack.c.l.b16 %v1664
        %v1832 = vunpack.c.l.b16 %v1665
        %v1833 = vunpack.c.l.b16 %v1666
        %v1834 = vunpack.c.l.b16 %v1667
        %v1835 = vunpack.c.l.b16 %v1668
        %v1836 = vunpack.c.l.b16 %v1669
        %v1837 = vunpack.c.l.b16 %v1670
        %v1838 = vunpack.c.l.b16 %v1671
        %v1839 = vunpack.c.l.b16 %v1672
        %v1840 = vunpack.c.l.b16 %v1673
        %v1841 = vunpack.c.l.b16 %v1674
        %v1842 = vunpack.c.l.b16 %v1675
        %v1843 = vunpack.c.l.b16 %v1676
        %v1844 = vunpack.c.l.b16 %v1677
        %v1845 = vunpack.c.l.b16 %v1678
        %v1846 = vunpack.c.l.b16 %v1679
        %v1847 = vunpack.c.l.b16 %v1680
        %v1848 = vunpack.c.l.b16 %v1681
        %v1849 = vunpack.c.l.b16 %v1682
        %v1850 = vunpack.c.l.b16 %v1683
        %v1851 = vunpack.c.l.b16 %v1684
        %v1852 = vunpack.c.l.b16 %v1685
        %v1853 = vunpack.c.l.b16 %v1686
        %v1854 = vunpack.c.l.b16 %v1687
        %v1855 = vunpack.c.l.b16 %v1688
        %v1856 = vunpack.c.l.b16 %v1689
        %v1857 = vunpack.c.l.b16 %v1690
        %v1858 = vunpack.c.l.b16 %v1691
        %v1859 = vunpack.c.l.b16 %v1692
        %v1860 = vunpack.c.l.b16 %v1693
        %v1861 = vunpack.c.l.b16 %v1694
        %v1862 = vunpack.c.l.b16 %v1695
        %v1863 = vunpack.c.l.b16 %v1696
        %v1864 = vunpack.c.l.b16 %v1697
        %v1865 = vunpack.c.l.b16 %v1698
        %v1866 = vunpack.c.l.b16 %v1699
        %v1867 = vunpack.c.l.b16 %v1700
        %v1868 = vunpack.c.l.b16 %v1701
        %v1869 = vunpack.c.l.b16 %v1702
        %v1870 = vunpack.c.l.b16 %v1703
        %v1871 = vunpack.c.l.b16 %v1704
        %v1872 = vunpack.c.l.b16 %v1705
        %v1873 = vunpack.c.l.b16 %v1706
        %v1874 = vunpack.c.l.b16 %v1707
        %v1875 = vunpack.c.l.b16 %v1708
        %v1876 = vunpack.c.l.b16 %v1709
        %v1877 = vunpack.c.l.b16 %v1710
        %v1878 = vunpack.c.l.b16 %v1711
        %v1879 = vunpack.c.l.b16 %v1712
        %v1880 = vunpack.c.l.b16 %v1713
        %v1881 = vunpack.c.l.b16 %v1714
        %v1882 = vunpack.c.l.b16 %v1715
        %v1883 = vunpack.c.l.b16 %v1716
        %v1884 = vunpack.c.l.b16 %v1717
        %v1885 = vunpack.c.l.b16 %v1718
        %v1886 = vunpack.c.l.b16 %v1719
        %v1887 = vunpack.c.l.b16 %v1720
        %v1888 = vunpack.c.l.b16 %v1721
        %v1889 = vunpack.c.l.b16 %v1722
        %v1890 = vunpack.c.l.b16 %v1723
        %v1891 = vunpack.c.l.b16 %v1724
        %v1892 = vunpack.c.l.b16 %v1725
        %v1893 = vunpack.c.l.b16 %v1726
        %v1894 = vunpack.c.l.b16 %v1727
        %v1895 = vunpack.c.l.b16 %v1728
        %v1896 = vunpack.c.l.b16 %v1729
        %v1897 = vunpack.c.l.b16 %v1730
        %v1898 = vunpack.c.l.b16 %v1731
        %v1899 = vunpack.c.l.b16 %v1732
        %v1900 = vunpack.c.l.b16 %v1733
        %v1901 = vpack.c.b16 %v1822, %v1821
        %v1902 = vpack.c.b16 %v1824, %v1823
        %v1903 = vpack.c.b16 %v1826, %v1825
        %v1904 = vpack.c.b16 %v1828, %v1827
        %v1905 = vpack.c.b16 %v1830, %v1829
        %v1906 = vpack.c.b16 %v1832, %v1831
        %v1907 = vpack.c.b16 %v1834, %v1833
        %v1908 = vpack.c.b16 %v1836, %v1835
        %v1909 = vpack.c.b16 %v1838, %v1837
        %v1910 = vpack.c.b16 %v1840, %v1839
        %v1911 = vpack.c.b16 %v1842, %v1841
        %v1912 = vpack.c.b16 %v1844, %v1843
        %v1913 = vpack.c.b16 %v1846, %v1845
        %v1914 = vpack.c.b16 %v1848, %v1847
        %v1915 = vpack.c.b16 %v1850, %v1849
        %v1916 = vpack.c.b16 %v1852, %v1851
        %v1917 = vpack.c.b16 %v1854, %v1853
        %v1918 = vpack.c.b16 %v1856, %v1855
        %v1919 = vpack.c.b16 %v1858, %v1857
        %v1920 = vpack.c.b16 %v1860, %v1859
        %v1921 = vpack.c.b16 %v1862, %v1861
        %v1922 = vpack.c.b16 %v1864, %v1863
        %v1923 = vpack.c.b16 %v1866, %v1865
        %v1924 = vpack.c.b16 %v1868, %v1867
        %v1925 = vpack.c.b16 %v1870, %v1869
        %v1926 = vpack.c.b16 %v1872, %v1871
        %v1927 = vpack.c.b16 %v1874, %v1873
        %v1928 = vpack.c.b16 %v1876, %v1875
        %v1929 = vpack.c.b16 %v1878, %v1877
        %v1930 = vpack.c.b16 %v1880, %v1879
        %v1931 = vpack.c.b16 %v1882, %v1881
        %v1932 = vpack.c.b16 %v1884, %v1883
        %v1933 = vpack.c.b16 %v1886, %v1885
        %v1934 = vpack.c.b16 %v1888, %v1887
        %v1935 = vpack.c.b16 %v1890, %v1889
        %v1936 = vpack.c.b16 %v1892, %v1891
        %v1937 = vpack.c.b16 %v1894, %v1893
        %v1938 = vpack.c.b16 %v1896, %v1895
        %v1939 = vpack.c.b16 %v1898, %v1897
        %v1940 = vpack.c.b16 %v1900, %v1899
        %1981 = vmatprep.subr.bf16.mxu0 0
        %1982 = vmatpush1.bf16.msra.mxu0 %v1901
        %1983 = vmatprep.subr.bf16.mxu0 0
        %1984 = vmatpush1.bf16.msra.mxu0 %v1902
        %1985 = vmatprep.subr.bf16.mxu0 0
        %1986 = vmatpush1.bf16.msra.mxu0 %v1903
        %1987 = vmatprep.subr.bf16.mxu0 0
        %1988 = vmatpush1.bf16.msra.mxu0 %v1904
        %1989 = vmatprep.subr.bf16.mxu0 0
        %1990 = vmatpush1.bf16.msra.mxu0 %v1905
        %1991 = vmatprep.subr.bf16.mxu0 0
        %1992 = vmatpush1.bf16.msra.mxu0 %v1906
        %1993 = vmatprep.subr.bf16.mxu0 0
        %1994 = vmatpush1.bf16.msra.mxu0 %v1907
        %1995 = vmatprep.subr.bf16.mxu0 0
        %1996 = vmatpush1.bf16.msra.mxu0 %v1908
        %1997 = vmatprep.subr.bf16.mxu0 0
        %1998 = vmatpush1.bf16.msra.mxu0 %v1909
        %1999 = vmatprep.subr.bf16.mxu0 0
        %2000 = vmatpush1.bf16.msra.mxu0 %v1910
        %2001 = vmatprep.subr.bf16.mxu0 0
        %2002 = vmatpush1.bf16.msra.mxu0 %v1911
        %2003 = vmatprep.subr.bf16.mxu0 0
        %2004 = vmatpush1.bf16.msra.mxu0 %v1912
        %2005 = vmatprep.subr.bf16.mxu0 0
        %2006 = vmatpush1.bf16.msra.mxu0 %v1913
        %2007 = vmatprep.subr.bf16.mxu0 0
        %2008 = vmatpush1.bf16.msra.mxu0 %v1914
        %2009 = vmatprep.subr.bf16.mxu0 0
        %2010 = vmatpush1.bf16.msra.mxu0 %v1915
        %2011 = vmatprep.subr.bf16.mxu0 0
        %2012 = vmatpush1.bf16.msra.mxu0 %v1916
        %2013 = vmatprep.mubr.bf16.mxu0 %v1645
        %2014 = vmatmul.mubr.bf16.gmra.mrb[0].mxu0 %v1644
        %v2015 = vpop.f32.mrb[0].mxu0
        %v2016 = vadd.f32 %v1739, %v2015
        %v2017 = vpop.f32.mrb[0].mxu0
        %v2018 = vpop.f32.mrb[0].mxu0
        %v2019 = vadd.f32 %v1739, %v2018
        %v2020 = vpop.f32.mrb[0].mxu0
        %2021 = vmatprep.mubr.bf16.mxu0 %v1650
        %2022 = vmatmul.mubr.bf16.gmra.mrb[0].mxu0 %v1649
        %v2023 = vpop.f32.mrb[0].mxu0
        %v2024 = vadd.f32 %v1739, %v2023
        %v2025 = vpop.f32.mrb[0].mxu0
        %v2026 = vpop.f32.mrb[0].mxu0
        %v2027 = vadd.f32 %v1739, %v2026
        %v2028 = vpop.f32.mrb[0].mxu0
        %2029 = vdwg.mxu0
        %2030 = vmatprep.subr.bf16.mxu0 0
        %2031 = vmatpush1.bf16.msra.mxu0 %v1917
        %2032 = vmatprep.subr.bf16.mxu0 0
        %2033 = vmatpush1.bf16.msra.mxu0 %v1918
        %2034 = vmatprep.subr.bf16.mxu0 0
        %2035 = vmatpush1.bf16.msra.mxu0 %v1919
        %2036 = vmatprep.subr.bf16.mxu0 0
        %2037 = vmatpush1.bf16.msra.mxu0 %v1920
        %2038 = vmatprep.subr.bf16.mxu0 0
        %2039 = vmatpush1.bf16.msra.mxu0 %v1921
        %2040 = vmatprep.subr.bf16.mxu0 0
        %2041 = vmatpush1.bf16.msra.mxu0 %v1922
        %2042 = vmatprep.subr.bf16.mxu0 0
        %2043 = vmatpush1.bf16.msra.mxu0 %v1923
        %2044 = vmatprep.subr.bf16.mxu0 0
        %2045 = vmatpush1.bf16.msra.mxu0 %v1924
        %2046 = vmatprep.subr.bf16.mxu0 0
        %2047 = vmatpush1.bf16.msra.mxu0 %v1925
        %2048 = vmatprep.subr.bf16.mxu0 0
        %2049 = vmatpush1.bf16.msra.mxu0 %v1926
        %2050 = vmatprep.subr.bf16.mxu0 0
        %2051 = vmatpush1.bf16.msra.mxu0 %v1927
        %2052 = vmatprep.subr.bf16.mxu0 0
        %2053 = vmatpush1.bf16.msra.mxu0 %v1928
        %2054 = vmatprep.subr.bf16.mxu0 0
        %2055 = vmatpush1.bf16.msra.mxu0 %v1929
        %2056 = vmatprep.subr.bf16.mxu0 0
        %2057 = vmatpush1.bf16.msra.mxu0 %v1930
        %2058 = vmatprep.subr.bf16.mxu0 0
        %2059 = vmatpush1.bf16.msra.mxu0 %v1931
        %2060 = vmatprep.subr.bf16.mxu0 0
        %2061 = vmatpush1.bf16.msra.mxu0 %v1932
        %2062 = vmatprep.mubr.bf16.mxu0 %v1647
        %2063 = vmatmul.mubr.bf16.gmra.mrb[0].mxu0 %v1646
        %v2064 = vpop.f32.mrb[0].mxu0
        %v2065 = vadd.f32 %v2016, %v2064
        %v2066 = vpop.f32.mrb[0].mxu0
        %v2067 = vpop.f32.mrb[0].mxu0
        %v2068 = vadd.f32 %v2019, %v2067
        %v2069 = vpop.f32.mrb[0].mxu0
        %2070 = vmatprep.mubr.bf16.mxu0 %v1652
        %2071 = vmatmul.mubr.bf16.gmra.mrb[0].mxu0 %v1651
        %v2072 = vpop.f32.mrb[0].mxu0
        %v2073 = vadd.f32 %v2024, %v2072
        %v2074 = vpop.f32.mrb[0].mxu0
        %v2075 = vpop.f32.mrb[0].mxu0
        %v2076 = vadd.f32 %v2027, %v2075
        %v2077 = vpop.f32.mrb[0].mxu0
        %2078 = vdwg.mxu0
        %2079 = vmatprep.subr.bf16.mxu0 0
        %2080 = vmatpush1.bf16.msra.mxu0 %v1933
        %2081 = vmatprep.subr.bf16.mxu0 0
        %2082 = vmatpush1.bf16.msra.mxu0 %v1934
        %2083 = vmatprep.subr.bf16.mxu0 0
        %2084 = vmatpush1.bf16.msra.mxu0 %v1935
        %2085 = vmatprep.subr.bf16.mxu0 0
        %2086 = vmatpush1.bf16.msra.mxu0 %v1936
        %2087 = vmatprep.subr.bf16.mxu0 0
        %2088 = vmatpush1.bf16.msra.mxu0 %v1937
        %2089 = vmatprep.subr.bf16.mxu0 0
        %2090 = vmatpush1.bf16.msra.mxu0 %v1938
        %2091 = vmatprep.subr.bf16.mxu0 0
        %2092 = vmatpush1.bf16.msra.mxu0 %v1939
        %2093 = vmatprep.subr.bf16.mxu0 0
        %2094 = vmatpush1.bf16.msra.mxu0 %v1940
        %2095 = vmatprep.subr.bf16.mxu0 0
        %2096 = vmatpush1.bf16.msra.mxu0 0
        %2097 = vmatprep.subr.bf16.mxu0 0
        %2098 = vmatpush1.bf16.msra.mxu0 0
        %2099 = vmatprep.subr.bf16.mxu0 0
        %2100 = vmatpush1.bf16.msra.mxu0 0
        %2101 = vmatprep.subr.bf16.mxu0 0
        %2102 = vmatpush1.bf16.msra.mxu0 0
        %2103 = vmatprep.subr.bf16.mxu0 0
        %2104 = vmatpush1.bf16.msra.mxu0 0
        %2105 = vmatprep.subr.bf16.mxu0 0
        %2106 = vmatpush1.bf16.msra.mxu0 0
        %2107 = vmatprep.subr.bf16.mxu0 0
        %2108 = vmatpush1.bf16.msra.mxu0 0
        %2109 = vmatprep.subr.bf16.mxu0 0
        %2110 = vmatpush1.bf16.msra.mxu0 0
        %2111 = vmatprep.mubr.bf16.mxu0 0
        %2112 = vmatmul.mubr.bf16.gmra.mrb[0].mxu0 %v1648
        %v2113 = vpop.f32.mrb[0].mxu0
        %v2114 = vadd.f32 %v2065, %v2113
        %v2115 = vpop.f32.mrb[0].mxu0
        %v2116 = vpop.f32.mrb[0].mxu0
        %v2117 = vadd.f32 %v2068, %v2116
        %v2118 = vpop.f32.mrb[0].mxu0
        %2119 = vmatprep.mubr.bf16.mxu0 0
        %2120 = vmatmul.mubr.bf16.gmra.mrb[0].mxu0 %v1653
        %v2121 = vpop.f32.mrb[0].mxu0
        %v2122 = vadd.f32 %v2073, %v2121
        %v2123 = vpop.f32.mrb[0].mxu0
        %v2124 = vpop.f32.mrb[0].mxu0
        %v2125 = vadd.f32 %v2076, %v2124
        %v2126 = vpop.f32.mrb[0].mxu0
        %2127 = vdwg.mxu0
        %v2128 = vmax.f32 %v2114, 0.0
        %v2129 = vmax.f32 %v2117, 0.0
        %v2130 = vmax.f32 %v2122, 0.0
        %v2131 = vmax.f32 %v2125, 0.0
        %2136 = vrot.lane.b32.xlu0 %v2128, 64
        %v2137 = vpop.permute.xlu0 %2136
        %2138 = vrot.lane.b32.xlu0 %v2129, 64
        %v2139 = vpop.permute.xlu0 %2138
        %2140 = vrot.lane.b32.xlu0 %v2130, 64
        %v2141 = vpop.permute.xlu0 %2140
        %2142 = vrot.lane.b32.xlu0 %v2131, 64
        %v2143 = vpop.permute.xlu0 %2142
        %v2148 = vmax.f32 %v2128, %v2137
        %v2149 = vmax.f32 %v2129, %v2139
        %v2150 = vmax.f32 %v2130, %v2141
        %v2151 = vmax.f32 %v2131, %v2143
        %v2153 = vrot.slane %v2148, 4
        %v2155 = vmax.f32 %v2148, %v2153
        %v2156 = vpack.c.bf16 %v2155, %v2155
        %v2158 = vrot.slane %v2156, 4
        %2160 = vst.msk [vmem:[#allocation4] sm:$0x30] %vm515, %v2158
        %v2162 = vrot.slane %v2149, 4
        %v2164 = vmax.f32 %v2149, %v2162
        %v2165 = vpack.c.bf16 %v2164, %v2164
        %v2167 = vrot.slane %v2165, 2
        %2169 = vst.msk [vmem:[#allocation4] sm:$0xc0] %vm529, %v2167
        %v2171 = vrot.slane %v2150, 4
        %v2173 = vmax.f32 %v2150, %v2171
        %v2174 = vpack.c.bf16 %v2173, %v2173
        %2175 = vst.msk [vmem:[#allocation4 + $0x8] sm:$0x3] %vm539, %v2174
        %v2177 = vrot.slane %v2151, 4
        %v2179 = vmax.f32 %v2151, %v2177
        %v2180 = vpack.c.bf16 %v2179, %v2179
        %v2182 = vrot.slane %v2180, 6
        %2184 = vst.msk [vmem:[#allocation4 + $0x8] sm:$0xc] %vm550, %v2182
        %v2185 = vld [vmem:[#allocation4] sm:$0xff]
        %2186 = vst [vmem:[#allocation7] sm:$0xff] %v2185
        %v2187 = vld [vmem:[#allocation4] sm:$0xfc]
        %v2188 = vld [vmem:[#allocation4 + $0x8] sm:$0x3]
        %v2191 = vrot.slane %v2187, 2
        %v2192 = vrot.slane %v2188, 2
        %v2193 = vsel %vm688, %v2191, %v2192
        %2195 = vst [vmem:[#allocation7 + $0x8] sm:$0xff] %v2193
        %v2196 = vld [vmem:[#allocation4] sm:$0xf0]
        %v2197 = vld [vmem:[#allocation4 + $0x8] sm:$0xf]
        %v2200 = vrot.slane %v2196, 4
        %v2201 = vrot.slane %v2197, 4
        %v2202 = vsel %vm716, %v2200, %v2201
        %2204 = vst [vmem:[#allocation7 + $0x10] sm:$0xff] %v2202
        %v2205 = vld [vmem:[#allocation4] sm:$0xc0]
        %v2206 = vld [vmem:[#allocation4 + $0x8] sm:$0x3f]
        %v2209 = vrot.slane %v2205, 6
        %v2210 = vrot.slane %v2206, 6
        %v2211 = vsel %vm744, %v2209, %v2210
        %2213 = vst [vmem:[#allocation7 + $0x18] sm:$0xff] %v2211
        %v2214 = vld [vmem:[#allocation4 + $0x8] sm:$0xff]
        %2215 = vst [vmem:[#allocation7 + $0x20] sm:$0xff] %v2214
        %v2216 = vld [vmem:[#allocation7] sm:$0xff]
        %v2217 = vld [vmem:[#allocation7 + $0x8] sm:$0xff]
        %v2218 = vld [vmem:[#allocation7 + $0x10] sm:$0xff]
        %v2219 = vld [vmem:[#allocation7 + $0x18] sm:$0xff]
        %v2220 = vld [vmem:[#allocation7 + $0x20] sm:$0xff]
        %v2221 = vld [vmem:[%s5] sm:$0xf]
        %v2222 = vld [vmem:[%s5 + $0x4] sm:$0xf]
        %v2223 = vld [vmem:[%s5 + $0x8] sm:$0xf]
        %v2224 = vld [vmem:[%s5 + $0xc] sm:$0xf]
        %v2225 = vld [vmem:[%s5 + $0x10] sm:$0xf]
        %v2226 = vld [vmem:[%s5 + $0x14] sm:$0xf]
        %v2227 = vld [vmem:[%s5 + $0x18] sm:$0xf]
        %v2228 = vld [vmem:[%s5 + $0x1c] sm:$0xf]
        %v2229 = vld [vmem:[%s5 + $0x20] sm:$0xf]
        %v2230 = vld [vmem:[%s5 + $0x24] sm:$0xf]
        %v2231 = vld [vmem:[%s5 + $0x28] sm:$0xf]
        %v2232 = vld [vmem:[%s5 + $0x2c] sm:$0xf]
        %v2233 = vld [vmem:[%s5 + $0x30] sm:$0xf]
        %v2234 = vld [vmem:[%s5 + $0x34] sm:$0xf]
        %v2235 = vld [vmem:[%s5 + $0x38] sm:$0xf]
        %v2236 = vld [vmem:[%s5 + $0x3c] sm:$0xf]
        %v2237 = vld [vmem:[%s5 + $0x40] sm:$0xf]
        %v2238 = vld [vmem:[%s5 + $0x44] sm:$0xf]
        %v2239 = vld [vmem:[%s5 + $0x48] sm:$0xf]
        %v2240 = vld [vmem:[%s5 + $0x4c] sm:$0xf]
        %v2241 = vld [vmem:[%s5 + $0x50] sm:$0xf]
        %v2242 = vld [vmem:[%s5 + $0x54] sm:$0xf]
        %v2243 = vld [vmem:[%s5 + $0x58] sm:$0xf]
        %v2244 = vld [vmem:[%s5 + $0x5c] sm:$0xf]
        %v2245 = vld [vmem:[%s5 + $0x60] sm:$0xf]
        %v2246 = vld [vmem:[%s5 + $0x64] sm:$0xf]
        %v2247 = vld [vmem:[%s5 + $0x68] sm:$0xf]
        %v2248 = vld [vmem:[%s5 + $0x6c] sm:$0xf]
        %v2249 = vld [vmem:[%s5 + $0x70] sm:$0xf]
        %v2250 = vld [vmem:[%s5 + $0x74] sm:$0xf]
        %v2251 = vld [vmem:[%s5 + $0x78] sm:$0xf]
        %v2252 = vld [vmem:[%s5 + $0x7c] sm:$0xf]
        %v2253 = vld [vmem:[%s5 + $0x80] sm:$0xf]
        %v2254 = vld [vmem:[%s5 + $0x84] sm:$0xf]
        %v2255 = vld [vmem:[%s5 + $0x88] sm:$0xf]
        %v2256 = vld [vmem:[%s5 + $0x8c] sm:$0xf]
        %v2257 = vld [vmem:[%s5 + $0x90] sm:$0xf]
        %v2258 = vld [vmem:[%s5 + $0x94] sm:$0xf]
        %v2259 = vld [vmem:[%s5 + $0x98] sm:$0xf]
        %v2260 = vld [vmem:[%s5 + $0x9c] sm:$0xf]
        %v2261 = vld [vmem:[%s5 + $0xa0] sm:$0xf]
        %v2262 = vld [vmem:[%s5 + $0xa4] sm:$0xf]
        %v2263 = vld [vmem:[%s5 + $0xa8] sm:$0xf]
        %v2264 = vld [vmem:[%s5 + $0xac] sm:$0xf]
        %v2265 = vld [vmem:[%s5 + $0xb0] sm:$0xf]
        %v2266 = vld [vmem:[%s5 + $0xb4] sm:$0xf]
        %v2267 = vld [vmem:[%s5 + $0xb8] sm:$0xf]
        %v2268 = vld [vmem:[%s5 + $0xbc] sm:$0xf]
        %v2269 = vld [vmem:[%s5 + $0xc0] sm:$0xf]
        %v2270 = vld [vmem:[%s5 + $0xc4] sm:$0xf]
        %v2271 = vld [vmem:[%s5 + $0xc8] sm:$0xf]
        %v2272 = vld [vmem:[%s5 + $0xcc] sm:$0xf]
        %v2273 = vld [vmem:[%s5 + $0xd0] sm:$0xf]
        %v2274 = vld [vmem:[%s5 + $0xd4] sm:$0xf]
        %v2275 = vld [vmem:[%s5 + $0xd8] sm:$0xf]
        %v2276 = vld [vmem:[%s5 + $0xdc] sm:$0xf]
        %v2277 = vld [vmem:[%s5 + $0xe0] sm:$0xf]
        %v2278 = vld [vmem:[%s5 + $0xe4] sm:$0xf]
        %v2279 = vld [vmem:[%s5 + $0xe8] sm:$0xf]
        %v2280 = vld [vmem:[%s5 + $0xec] sm:$0xf]
        %v2281 = vld [vmem:[%s5 + $0xf0] sm:$0xf]
        %v2282 = vld [vmem:[%s5 + $0xf4] sm:$0xf]
        %v2283 = vld [vmem:[%s5 + $0xf8] sm:$0xf]
        %v2284 = vld [vmem:[%s5 + $0xfc] sm:$0xf]
        %v2285 = vld [vmem:[%s5 + $0x100] sm:$0xf]
        %v2286 = vld [vmem:[%s5 + $0x104] sm:$0xf]
        %v2287 = vld [vmem:[%s5 + $0x108] sm:$0xf]
        %v2288 = vld [vmem:[%s5 + $0x10c] sm:$0xf]
        %v2289 = vld [vmem:[%s5 + $0x110] sm:$0xf]
        %v2290 = vld [vmem:[%s5 + $0x114] sm:$0xf]
        %v2291 = vld [vmem:[%s5 + $0x118] sm:$0xf]
        %v2292 = vld [vmem:[%s5 + $0x11c] sm:$0xf]
        %v2293 = vld [vmem:[%s5 + $0x120] sm:$0xf]
        %v2294 = vld [vmem:[%s5 + $0x124] sm:$0xf]
        %v2295 = vld [vmem:[%s5 + $0x128] sm:$0xf]
        %v2296 = vld [vmem:[%s5 + $0x12c] sm:$0xf]
        %v2297 = vld [vmem:[%s5 + $0x130] sm:$0xf]
        %v2298 = vld [vmem:[%s5 + $0x134] sm:$0xf]
        %v2299 = vld [vmem:[%s5 + $0x138] sm:$0xf]
        %v2300 = vld [vmem:[%s5 + $0x13c] sm:$0xf]
        %v2301 = vld [vmem:[%s6] sm:$0x1]
        %v2303 = vlaneseq
        %v2304 = vshrl.u32 %v2303, 7
        %v2305 = vsub.s32 0, %v2304
        %v2306 = vrot.slane %v2301, %v2305
        %v2388 = vunpack.c.l.b16 %v2221
        %v2389 = vunpack.c.l.b16 %v2222
        %v2390 = vunpack.c.l.b16 %v2223
        %v2391 = vunpack.c.l.b16 %v2224
        %v2392 = vunpack.c.l.b16 %v2225
        %v2393 = vunpack.c.l.b16 %v2226
        %v2394 = vunpack.c.l.b16 %v2227
        %v2395 = vunpack.c.l.b16 %v2228
        %v2396 = vunpack.c.l.b16 %v2229
        %v2397 = vunpack.c.l.b16 %v2230
        %v2398 = vunpack.c.l.b16 %v2231
        %v2399 = vunpack.c.l.b16 %v2232
        %v2400 = vunpack.c.l.b16 %v2233
        %v2401 = vunpack.c.l.b16 %v2234
        %v2402 = vunpack.c.l.b16 %v2235
        %v2403 = vunpack.c.l.b16 %v2236
        %v2404 = vunpack.c.l.b16 %v2237
        %v2405 = vunpack.c.l.b16 %v2238
        %v2406 = vunpack.c.l.b16 %v2239
        %v2407 = vunpack.c.l.b16 %v2240
        %v2408 = vunpack.c.l.b16 %v2241
        %v2409 = vunpack.c.l.b16 %v2242
        %v2410 = vunpack.c.l.b16 %v2243
        %v2411 = vunpack.c.l.b16 %v2244
        %v2412 = vunpack.c.l.b16 %v2245
        %v2413 = vunpack.c.l.b16 %v2246
        %v2414 = vunpack.c.l.b16 %v2247
        %v2415 = vunpack.c.l.b16 %v2248
        %v2416 = vunpack.c.l.b16 %v2249
        %v2417 = vunpack.c.l.b16 %v2250
        %v2418 = vunpack.c.l.b16 %v2251
        %v2419 = vunpack.c.l.b16 %v2252
        %v2420 = vunpack.c.l.b16 %v2253
        %v2421 = vunpack.c.l.b16 %v2254
        %v2422 = vunpack.c.l.b16 %v2255
        %v2423 = vunpack.c.l.b16 %v2256
        %v2424 = vunpack.c.l.b16 %v2257
        %v2425 = vunpack.c.l.b16 %v2258
        %v2426 = vunpack.c.l.b16 %v2259
        %v2427 = vunpack.c.l.b16 %v2260
        %v2428 = vunpack.c.l.b16 %v2261
        %v2429 = vunpack.c.l.b16 %v2262
        %v2430 = vunpack.c.l.b16 %v2263
        %v2431 = vunpack.c.l.b16 %v2264
        %v2432 = vunpack.c.l.b16 %v2265
        %v2433 = vunpack.c.l.b16 %v2266
        %v2434 = vunpack.c.l.b16 %v2267
        %v2435 = vunpack.c.l.b16 %v2268
        %v2436 = vunpack.c.l.b16 %v2269
        %v2437 = vunpack.c.l.b16 %v2270
        %v2438 = vunpack.c.l.b16 %v2271
        %v2439 = vunpack.c.l.b16 %v2272
        %v2440 = vunpack.c.l.b16 %v2273
        %v2441 = vunpack.c.l.b16 %v2274
        %v2442 = vunpack.c.l.b16 %v2275
        %v2443 = vunpack.c.l.b16 %v2276
        %v2444 = vunpack.c.l.b16 %v2277
        %v2445 = vunpack.c.l.b16 %v2278
        %v2446 = vunpack.c.l.b16 %v2279
        %v2447 = vunpack.c.l.b16 %v2280
        %v2448 = vunpack.c.l.b16 %v2281
        %v2449 = vunpack.c.l.b16 %v2282
        %v2450 = vunpack.c.l.b16 %v2283
        %v2451 = vunpack.c.l.b16 %v2284
        %v2452 = vunpack.c.l.b16 %v2285
        %v2453 = vunpack.c.l.b16 %v2286
        %v2454 = vunpack.c.l.b16 %v2287
        %v2455 = vunpack.c.l.b16 %v2288
        %v2456 = vunpack.c.l.b16 %v2289
        %v2457 = vunpack.c.l.b16 %v2290
        %v2458 = vunpack.c.l.b16 %v2291
        %v2459 = vunpack.c.l.b16 %v2292
        %v2460 = vunpack.c.l.b16 %v2293
        %v2461 = vunpack.c.l.b16 %v2294
        %v2462 = vunpack.c.l.b16 %v2295
        %v2463 = vunpack.c.l.b16 %v2296
        %v2464 = vunpack.c.l.b16 %v2297
        %v2465 = vunpack.c.l.b16 %v2298
        %v2466 = vunpack.c.l.b16 %v2299
        %v2467 = vunpack.c.l.b16 %v2300
        %v2468 = vpack.c.b16 %v2389, %v2388
        %v2469 = vpack.c.b16 %v2391, %v2390
        %v2470 = vpack.c.b16 %v2393, %v2392
        %v2471 = vpack.c.b16 %v2395, %v2394
        %v2472 = vpack.c.b16 %v2397, %v2396
        %v2473 = vpack.c.b16 %v2399, %v2398
        %v2474 = vpack.c.b16 %v2401, %v2400
        %v2475 = vpack.c.b16 %v2403, %v2402
        %v2476 = vpack.c.b16 %v2405, %v2404
        %v2477 = vpack.c.b16 %v2407, %v2406
        %v2478 = vpack.c.b16 %v2409, %v2408
        %v2479 = vpack.c.b16 %v2411, %v2410
        %v2480 = vpack.c.b16 %v2413, %v2412
        %v2481 = vpack.c.b16 %v2415, %v2414
        %v2482 = vpack.c.b16 %v2417, %v2416
        %v2483 = vpack.c.b16 %v2419, %v2418
        %v2484 = vpack.c.b16 %v2421, %v2420
        %v2485 = vpack.c.b16 %v2423, %v2422
        %v2486 = vpack.c.b16 %v2425, %v2424
        %v2487 = vpack.c.b16 %v2427, %v2426
        %v2488 = vpack.c.b16 %v2429, %v2428
        %v2489 = vpack.c.b16 %v2431, %v2430
        %v2490 = vpack.c.b16 %v2433, %v2432
        %v2491 = vpack.c.b16 %v2435, %v2434
        %v2492 = vpack.c.b16 %v2437, %v2436
        %v2493 = vpack.c.b16 %v2439, %v2438
        %v2494 = vpack.c.b16 %v2441, %v2440
        %v2495 = vpack.c.b16 %v2443, %v2442
        %v2496 = vpack.c.b16 %v2445, %v2444
        %v2497 = vpack.c.b16 %v2447, %v2446
        %v2498 = vpack.c.b16 %v2449, %v2448
        %v2499 = vpack.c.b16 %v2451, %v2450
        %v2500 = vpack.c.b16 %v2453, %v2452
        %v2501 = vpack.c.b16 %v2455, %v2454
        %v2502 = vpack.c.b16 %v2457, %v2456
        %v2503 = vpack.c.b16 %v2459, %v2458
        %v2504 = vpack.c.b16 %v2461, %v2460
        %v2505 = vpack.c.b16 %v2463, %v2462
        %v2506 = vpack.c.b16 %v2465, %v2464
        %v2507 = vpack.c.b16 %v2467, %v2466
        %2548 = vmatprep.subr.bf16.mxu0 0
        %2549 = vmatpush1.bf16.msra.mxu0 %v2468
        %2550 = vmatprep.subr.bf16.mxu0 0
        %2551 = vmatpush1.bf16.msra.mxu0 %v2469
        %2552 = vmatprep.subr.bf16.mxu0 0
        %2553 = vmatpush1.bf16.msra.mxu0 %v2470
        %2554 = vmatprep.subr.bf16.mxu0 0
        %2555 = vmatpush1.bf16.msra.mxu0 %v2471
        %2556 = vmatprep.subr.bf16.mxu0 0
        %2557 = vmatpush1.bf16.msra.mxu0 %v2472
        %2558 = vmatprep.subr.bf16.mxu0 0
        %2559 = vmatpush1.bf16.msra.mxu0 %v2473
        %2560 = vmatprep.subr.bf16.mxu0 0
        %2561 = vmatpush1.bf16.msra.mxu0 %v2474
        %2562 = vmatprep.subr.bf16.mxu0 0
        %2563 = vmatpush1.bf16.msra.mxu0 %v2475
        %2564 = vmatprep.subr.bf16.mxu0 0
        %2565 = vmatpush1.bf16.msra.mxu0 %v2476
        %2566 = vmatprep.subr.bf16.mxu0 0
        %2567 = vmatpush1.bf16.msra.mxu0 %v2477
        %2568 = vmatprep.subr.bf16.mxu0 0
        %2569 = vmatpush1.bf16.msra.mxu0 %v2478
        %2570 = vmatprep.subr.bf16.mxu0 0
        %2571 = vmatpush1.bf16.msra.mxu0 %v2479
        %2572 = vmatprep.subr.bf16.mxu0 0
        %2573 = vmatpush1.bf16.msra.mxu0 %v2480
        %2574 = vmatprep.subr.bf16.mxu0 0
        %2575 = vmatpush1.bf16.msra.mxu0 %v2481
        %2576 = vmatprep.subr.bf16.mxu0 0
        %2577 = vmatpush1.bf16.msra.mxu0 %v2482
        %2578 = vmatprep.subr.bf16.mxu0 0
        %2579 = vmatpush1.bf16.msra.mxu0 %v2483
        %2580 = vmatprep.mubr.bf16.mxu0 %v2217
        %2581 = vmatmul.mubr.bf16.gmra.mrb[0].mxu0 %v2216
        %v2582 = vpop.f32.mrb[0].mxu0
        %v2583 = vadd.f32 %v2306, %v2582
        %v2584 = vpop.f32.mrb[0].mxu0
        %v2585 = vpop.f32.mrb[0].mxu0
        %v2586 = vadd.f32 %v2306, %v2585
        %v2587 = vpop.f32.mrb[0].mxu0
        %2588 = vdwg.mxu0
        %2589 = vmatprep.subr.bf16.mxu0 0
        %2590 = vmatpush1.bf16.msra.mxu0 %v2484
        %2591 = vmatprep.subr.bf16.mxu0 0
        %2592 = vmatpush1.bf16.msra.mxu0 %v2485
        %2593 = vmatprep.subr.bf16.mxu0 0
        %2594 = vmatpush1.bf16.msra.mxu0 %v2486
        %2595 = vmatprep.subr.bf16.mxu0 0
        %2596 = vmatpush1.bf16.msra.mxu0 %v2487
        %2597 = vmatprep.subr.bf16.mxu0 0
        %2598 = vmatpush1.bf16.msra.mxu0 %v2488
        %2599 = vmatprep.subr.bf16.mxu0 0
        %2600 = vmatpush1.bf16.msra.mxu0 %v2489
        %2601 = vmatprep.subr.bf16.mxu0 0
        %2602 = vmatpush1.bf16.msra.mxu0 %v2490
        %2603 = vmatprep.subr.bf16.mxu0 0
        %2604 = vmatpush1.bf16.msra.mxu0 %v2491
        %2605 = vmatprep.subr.bf16.mxu0 0
        %2606 = vmatpush1.bf16.msra.mxu0 %v2492
        %2607 = vmatprep.subr.bf16.mxu0 0
        %2608 = vmatpush1.bf16.msra.mxu0 %v2493
        %2609 = vmatprep.subr.bf16.mxu0 0
        %2610 = vmatpush1.bf16.msra.mxu0 %v2494
        %2611 = vmatprep.subr.bf16.mxu0 0
        %2612 = vmatpush1.bf16.msra.mxu0 %v2495
        %2613 = vmatprep.subr.bf16.mxu0 0
        %2614 = vmatpush1.bf16.msra.mxu0 %v2496
        %2615 = vmatprep.subr.bf16.mxu0 0
        %2616 = vmatpush1.bf16.msra.mxu0 %v2497
        %2617 = vmatprep.subr.bf16.mxu0 0
        %2618 = vmatpush1.bf16.msra.mxu0 %v2498
        %2619 = vmatprep.subr.bf16.mxu0 0
        %2620 = vmatpush1.bf16.msra.mxu0 %v2499
        %2621 = vmatprep.mubr.bf16.mxu0 %v2219
        %2622 = vmatmul.mubr.bf16.gmra.mrb[0].mxu0 %v2218
        %v2623 = vpop.f32.mrb[0].mxu0
        %v2624 = vadd.f32 %v2583, %v2623
        %v2625 = vpop.f32.mrb[0].mxu0
        %v2626 = vpop.f32.mrb[0].mxu0
        %v2627 = vadd.f32 %v2586, %v2626
        %v2628 = vpop.f32.mrb[0].mxu0
        %2629 = vdwg.mxu0
        %2630 = vmatprep.subr.bf16.mxu0 0
        %2631 = vmatpush1.bf16.msra.mxu0 %v2500
        %2632 = vmatprep.subr.bf16.mxu0 0
        %2633 = vmatpush1.bf16.msra.mxu0 %v2501
        %2634 = vmatprep.subr.bf16.mxu0 0
        %2635 = vmatpush1.bf16.msra.mxu0 %v2502
        %2636 = vmatprep.subr.bf16.mxu0 0
        %2637 = vmatpush1.bf16.msra.mxu0 %v2503
        %2638 = vmatprep.subr.bf16.mxu0 0
        %2639 = vmatpush1.bf16.msra.mxu0 %v2504
        %2640 = vmatprep.subr.bf16.mxu0 0
        %2641 = vmatpush1.bf16.msra.mxu0 %v2505
        %2642 = vmatprep.subr.bf16.mxu0 0
        %2643 = vmatpush1.bf16.msra.mxu0 %v2506
        %2644 = vmatprep.subr.bf16.mxu0 0
        %2645 = vmatpush1.bf16.msra.mxu0 %v2507
        %2646 = vmatprep.subr.bf16.mxu0 0
        %2647 = vmatpush1.bf16.msra.mxu0 0
        %2648 = vmatprep.subr.bf16.mxu0 0
        %2649 = vmatpush1.bf16.msra.mxu0 0
        %2650 = vmatprep.subr.bf16.mxu0 0
        %2651 = vmatpush1.bf16.msra.mxu0 0
        %2652 = vmatprep.subr.bf16.mxu0 0
        %2653 = vmatpush1.bf16.msra.mxu0 0
        %2654 = vmatprep.subr.bf16.mxu0 0
        %2655 = vmatpush1.bf16.msra.mxu0 0
        %2656 = vmatprep.subr.bf16.mxu0 0
        %2657 = vmatpush1.bf16.msra.mxu0 0
        %2658 = vmatprep.subr.bf16.mxu0 0
        %2659 = vmatpush1.bf16.msra.mxu0 0
        %2660 = vmatprep.subr.bf16.mxu0 0
        %2661 = vmatpush1.bf16.msra.mxu0 0
        %2662 = vmatprep.mubr.bf16.mxu0 0
        %2663 = vmatmul.mubr.bf16.gmra.mrb[0].mxu0 %v2220
        %v2664 = vpop.f32.mrb[0].mxu0
        %v2665 = vadd.f32 %v2624, %v2664
        %v2666 = vpop.f32.mrb[0].mxu0
        %v2667 = vpop.f32.mrb[0].mxu0
        %v2668 = vadd.f32 %v2627, %v2667
        %v2669 = vpop.f32.mrb[0].mxu0
        %2670 = vdwg.mxu0
        %v2671 = vmax.f32 %v2665, 0.0
        %v2672 = vmax.f32 %v2668, 0.0
        %2675 = vrot.lane.b32.xlu0 %v2671, 96
        %v2676 = vpop.permute.xlu0 %2675
        %2677 = vrot.lane.b32.xlu0 %v2672, 96
        %v2678 = vpop.permute.xlu0 %2677
        %v2681 = vmax.f32 %v2671, %v2676
        %v2682 = vmax.f32 %v2672, %v2678
        %v2684 = vrot.slane %v2681, 4
        %v2686 = vmax.f32 %v2681, %v2684
        %v2687 = vpack.c.bf16 %v2686, %v2686
        %v2689 = vrot.slane %v2682, 4
        %v2691 = vmax.f32 %v2682, %v2689
        %v2692 = vpack.c.bf16 %v2691, %v2691
        %2694 = vrot.lane.b32.xlu0 %v2692, 32
        %v2695 = vpop.permute.xlu0 %2694
        %vm2696 = vcmask 261120
        %v2699 = vsel %vm2696, %v2687, %v2695
        %v2700 = vld [vmem:[%s7] sm:$0xf]
        %v2701 = vld [vmem:[%s7 + $0x4] sm:$0xf]
        %v2702 = vld [vmem:[%s7 + $0x8] sm:$0xf]
        %v2703 = vld [vmem:[%s7 + $0xc] sm:$0xf]
        %v2704 = vld [vmem:[%s7 + $0x10] sm:$0xf]
        %v2705 = vld [vmem:[%s7 + $0x14] sm:$0xf]
        %v2706 = vld [vmem:[%s7 + $0x18] sm:$0xf]
        %v2707 = vld [vmem:[%s7 + $0x1c] sm:$0xf]
        %v2708 = vld [vmem:[%s8] sm:$0x1]
        %v2710 = vlaneseq
        %v2711 = vshrl.u32 %v2710, 7
        %v2712 = vsub.s32 0, %v2711
        %v2713 = vrot.slane %v2708, %v2712
        %v2723 = vunpack.c.l.b16 %v2700
        %v2724 = vunpack.c.l.b16 %v2701
        %v2725 = vunpack.c.l.b16 %v2702
        %v2726 = vunpack.c.l.b16 %v2703
        %v2727 = vunpack.c.l.b16 %v2704
        %v2728 = vunpack.c.l.b16 %v2705
        %v2729 = vunpack.c.l.b16 %v2706
        %v2730 = vunpack.c.l.b16 %v2707
        %v2731 = vpack.c.b16 %v2724, %v2723
        %v2732 = vpack.c.b16 %v2726, %v2725
        %v2733 = vpack.c.b16 %v2728, %v2727
        %v2734 = vpack.c.b16 %v2730, %v2729
        %vm2739 = vcmask 523264
        %v2740 = vsel %vm2739, %v2699, 0
        %2742 = vmatprep.subr.bf16.mxu0 0
        %2743 = vmatpush1.bf16.msra.mxu0 %v2731
        %2744 = vmatprep.subr.bf16.mxu0 0
        %2745 = vmatpush1.bf16.msra.mxu0 %v2732
        %2746 = vmatprep.subr.bf16.mxu0 0
        %2747 = vmatpush1.bf16.msra.mxu0 %v2733
        %2748 = vmatprep.subr.bf16.mxu0 0
        %2749 = vmatpush1.bf16.msra.mxu0 %v2734
        %2750 = vmatprep.subr.bf16.mxu0 0
        %2751 = vmatpush1.bf16.msra.mxu0 0
        %2752 = vmatprep.subr.bf16.mxu0 0
        %2753 = vmatpush1.bf16.msra.mxu0 0
        %2754 = vmatprep.subr.bf16.mxu0 0
        %2755 = vmatpush1.bf16.msra.mxu0 0
        %2756 = vmatprep.subr.bf16.mxu0 0
        %2757 = vmatpush1.bf16.msra.mxu0 0
        %2758 = vmatprep.subr.bf16.mxu0 0
        %2759 = vmatpush1.bf16.msra.mxu0 0
        %2760 = vmatprep.subr.bf16.mxu0 0
        %2761 = vmatpush1.bf16.msra.mxu0 0
        %2762 = vmatprep.subr.bf16.mxu0 0
        %2763 = vmatpush1.bf16.msra.mxu0 0
        %2764 = vmatprep.subr.bf16.mxu0 0
        %2765 = vmatpush1.bf16.msra.mxu0 0
        %2766 = vmatprep.subr.bf16.mxu0 0
        %2767 = vmatpush1.bf16.msra.mxu0 0
        %2768 = vmatprep.subr.bf16.mxu0 0
        %2769 = vmatpush1.bf16.msra.mxu0 0
        %2770 = vmatprep.subr.bf16.mxu0 0
        %2771 = vmatpush1.bf16.msra.mxu0 0
        %2772 = vmatprep.subr.bf16.mxu0 0
        %2773 = vmatpush1.bf16.msra.mxu0 0
        %2774 = vmatprep.mubr.bf16.mxu0 0
        %2775 = vmatmul.mubr.bf16.gmra.mrb[0].mxu0 %v2740
        %v2776 = vpop.f32.mrb[0].mxu0
        %v2777 = vadd.f32 %v2713, %v2776
        %v2778 = vpop.f32.mrb[0].mxu0
        %v2779 = vpop.f32.mrb[0].mxu0
        %v2780 = vpop.f32.mrb[0].mxu0
        %2781 = vdwg.mxu0
        %v2782 = vmax.f32 %v2777, 0.0
        %v2783 = vpack.c.bf16 %v2782, %v2782
        %v2784 = vld [vmem:[%s9] sm:$0xf]
        %v2785 = vld [vmem:[%s9 + $0x4] sm:$0xf]
        %v2786 = vld [vmem:[%s9 + $0x8] sm:$0xf]
        %v2787 = vld [vmem:[%s9 + $0xc] sm:$0xf]
        %v2788 = vld [vmem:[%s9 + $0x10] sm:$0xf]
        %v2789 = vld [vmem:[%s9 + $0x14] sm:$0xf]
        %v2790 = vld [vmem:[%s9 + $0x18] sm:$0xf]
        %v2791 = vld [vmem:[%s9 + $0x1c] sm:$0xf]
        %v2792 = vld [vmem:[%s9 + $0x20] sm:$0xf]
        %v2793 = vld [vmem:[%s9 + $0x24] sm:$0xf]
        %v2794 = vld [vmem:[%s9 + $0x28] sm:$0xf]
        %v2795 = vld [vmem:[%s9 + $0x2c] sm:$0xf]
        %v2796 = vld [vmem:[%s9 + $0x30] sm:$0xf]
        %v2797 = vld [vmem:[%s9 + $0x34] sm:$0xf]
        %v2798 = vld [vmem:[%s9 + $0x38] sm:$0xf]
        %v2799 = vld [vmem:[%s9 + $0x3c] sm:$0xf]
        %v2800 = vld [vmem:[%s10] sm:$0x1]
        %v2802 = vlaneseq
        %v2803 = vshrl.u32 %v2802, 7
        %v2804 = vsub.s32 0, %v2803
        %v2805 = vrot.slane %v2800, %v2804
        %v2823 = vunpack.c.l.b16 %v2784
        %v2824 = vunpack.c.l.b16 %v2785
        %v2825 = vunpack.c.l.b16 %v2786
        %v2826 = vunpack.c.l.b16 %v2787
        %v2827 = vunpack.c.l.b16 %v2788
        %v2828 = vunpack.c.l.b16 %v2789
        %v2829 = vunpack.c.l.b16 %v2790
        %v2830 = vunpack.c.l.b16 %v2791
        %v2831 = vunpack.c.l.b16 %v2792
        %v2832 = vunpack.c.l.b16 %v2793
        %v2833 = vunpack.c.l.b16 %v2794
        %v2834 = vunpack.c.l.b16 %v2795
        %v2835 = vunpack.c.l.b16 %v2796
        %v2836 = vunpack.c.l.b16 %v2797
        %v2837 = vunpack.c.l.b16 %v2798
        %v2838 = vunpack.c.l.b16 %v2799
        %v2839 = vpack.c.b16 %v2824, %v2823
        %v2840 = vpack.c.b16 %v2826, %v2825
        %v2841 = vpack.c.b16 %v2828, %v2827
        %v2842 = vpack.c.b16 %v2830, %v2829
        %v2843 = vpack.c.b16 %v2832, %v2831
        %v2844 = vpack.c.b16 %v2834, %v2833
        %v2845 = vpack.c.b16 %v2836, %v2835
        %v2846 = vpack.c.b16 %v2838, %v2837
        %2855 = vmatprep.subr.bf16.mxu0 0
        %2856 = vmatpush1.bf16.msra.mxu0 %v2839
        %2857 = vmatprep.subr.bf16.mxu0 0
        %2858 = vmatpush1.bf16.msra.mxu0 %v2840
        %2859 = vmatprep.subr.bf16.mxu0 0
        %2860 = vmatpush1.bf16.msra.mxu0 %v2841
        %2861 = vmatprep.subr.bf16.mxu0 0
        %2862 = vmatpush1.bf16.msra.mxu0 %v2842
        %2863 = vmatprep.subr.bf16.mxu0 0
        %2864 = vmatpush1.bf16.msra.mxu0 %v2843
        %2865 = vmatprep.subr.bf16.mxu0 0
        %2866 = vmatpush1.bf16.msra.mxu0 %v2844
        %2867 = vmatprep.subr.bf16.mxu0 0
        %2868 = vmatpush1.bf16.msra.mxu0 %v2845
        %2869 = vmatprep.subr.bf16.mxu0 0
        %2870 = vmatpush1.bf16.msra.mxu0 %v2846
        %2871 = vmatprep.subr.bf16.mxu0 0
        %2872 = vmatpush1.bf16.msra.mxu0 0
        %2873 = vmatprep.subr.bf16.mxu0 0
        %2874 = vmatpush1.bf16.msra.mxu0 0
        %2875 = vmatprep.subr.bf16.mxu0 0
        %2876 = vmatpush1.bf16.msra.mxu0 0
        %2877 = vmatprep.subr.bf16.mxu0 0
        %2878 = vmatpush1.bf16.msra.mxu0 0
        %2879 = vmatprep.subr.bf16.mxu0 0
        %2880 = vmatpush1.bf16.msra.mxu0 0
        %2881 = vmatprep.subr.bf16.mxu0 0
        %2882 = vmatpush1.bf16.msra.mxu0 0
        %2883 = vmatprep.subr.bf16.mxu0 0
        %2884 = vmatpush1.bf16.msra.mxu0 0
        %2885 = vmatprep.subr.bf16.mxu0 0
        %2886 = vmatpush1.bf16.msra.mxu0 0
        %2887 = vmatprep.mubr.bf16.mxu0 0
        %2888 = vmatmul.mubr.bf16.gmra.mrb[0].mxu0 %v2783
        %v2889 = vpop.f32.mrb[0].mxu0
        %v2890 = vadd.f32 %v2805, %v2889
        %v2891 = vpop.f32.mrb[0].mxu0
        %v2892 = vpop.f32.mrb[0].mxu0
        %v2893 = vpop.f32.mrb[0].mxu0
        %2894 = vdwg.mxu0
        %v2895 = vmax.f32 %v2890, 0.0
        %v2896 = vpack.c.bf16 %v2895, %v2895
        %v2897 = vld [vmem:[%s11] sm:$0xf]
        %v2898 = vld [vmem:[%s11 + $0x4] sm:$0xf]
        %v2899 = vld [vmem:[%s11 + $0x8] sm:$0xf]
        %v2900 = vld [vmem:[%s11 + $0xc] sm:$0xf]
        %v2901 = vld [vmem:[%s11 + $0x10] sm:$0xf]
        %v2902 = vld [vmem:[%s11 + $0x14] sm:$0xf]
        %v2903 = vld [vmem:[%s11 + $0x18] sm:$0xf]
        %v2904 = vld [vmem:[%s11 + $0x1c] sm:$0xf]
        %v2905 = vld [vmem:[%s11 + $0x20] sm:$0xf]
        %v2906 = vld [vmem:[%s11 + $0x24] sm:$0xf]
        %v2907 = vld [vmem:[%s11 + $0x28] sm:$0xf]
        %v2908 = vld [vmem:[%s11 + $0x2c] sm:$0xf]
        %v2909 = vld [vmem:[%s11 + $0x30] sm:$0xf]
        %v2910 = vld [vmem:[%s11 + $0x34] sm:$0xf]
        %v2911 = vld [vmem:[%s11 + $0x38] sm:$0xf]
        %v2912 = vld [vmem:[%s11 + $0x3c] sm:$0xf]
        %v2913 = vld [vmem:[%s12] sm:$0x1]
        %v2915 = vlaneseq
        %v2916 = vshrl.u32 %v2915, 7
        %v2917 = vsub.s32 0, %v2916
        %v2918 = vrot.slane %v2913, %v2917
        %v2936 = vunpack.c.l.b16 %v2897
        %v2937 = vunpack.c.l.b16 %v2898
        %v2938 = vunpack.c.l.b16 %v2899
        %v2939 = vunpack.c.l.b16 %v2900
        %v2940 = vunpack.c.l.b16 %v2901
        %v2941 = vunpack.c.l.b16 %v2902
        %v2942 = vunpack.c.l.b16 %v2903
        %v2943 = vunpack.c.l.b16 %v2904
        %v2944 = vunpack.c.l.b16 %v2905
        %v2945 = vunpack.c.l.b16 %v2906
        %v2946 = vunpack.c.l.b16 %v2907
        %v2947 = vunpack.c.l.b16 %v2908
        %v2948 = vunpack.c.l.b16 %v2909
        %v2949 = vunpack.c.l.b16 %v2910
        %v2950 = vunpack.c.l.b16 %v2911
        %v2951 = vunpack.c.l.b16 %v2912
        %v2952 = vpack.c.b16 %v2937, %v2936
        %v2953 = vpack.c.b16 %v2939, %v2938
        %v2954 = vpack.c.b16 %v2941, %v2940
        %v2955 = vpack.c.b16 %v2943, %v2942
        %v2956 = vpack.c.b16 %v2945, %v2944
        %v2957 = vpack.c.b16 %v2947, %v2946
        %v2958 = vpack.c.b16 %v2949, %v2948
        %v2959 = vpack.c.b16 %v2951, %v2950
        %2968 = vmatprep.subr.bf16.mxu0 0
        %2969 = vmatpush1.bf16.msra.mxu0 %v2952
        %2970 = vmatprep.subr.bf16.mxu0 0
        %2971 = vmatpush1.bf16.msra.mxu0 %v2953
        %2972 = vmatprep.subr.bf16.mxu0 0
        %2973 = vmatpush1.bf16.msra.mxu0 %v2954
        %2974 = vmatprep.subr.bf16.mxu0 0
        %2975 = vmatpush1.bf16.msra.mxu0 %v2955
        %2976 = vmatprep.subr.bf16.mxu0 0
        %2977 = vmatpush1.bf16.msra.mxu0 %v2956
        %2978 = vmatprep.subr.bf16.mxu0 0
        %2979 = vmatpush1.bf16.msra.mxu0 %v2957
        %2980 = vmatprep.subr.bf16.mxu0 0
        %2981 = vmatpush1.bf16.msra.mxu0 %v2958
        %2982 = vmatprep.subr.bf16.mxu0 0
        %2983 = vmatpush1.bf16.msra.mxu0 %v2959
        %2984 = vmatprep.subr.bf16.mxu0 0
        %2985 = vmatpush1.bf16.msra.mxu0 0
        %2986 = vmatprep.subr.bf16.mxu0 0
        %2987 = vmatpush1.bf16.msra.mxu0 0
        %2988 = vmatprep.subr.bf16.mxu0 0
        %2989 = vmatpush1.bf16.msra.mxu0 0
        %2990 = vmatprep.subr.bf16.mxu0 0
        %2991 = vmatpush1.bf16.msra.mxu0 0
        %2992 = vmatprep.subr.bf16.mxu0 0
        %2993 = vmatpush1.bf16.msra.mxu0 0
        %2994 = vmatprep.subr.bf16.mxu0 0
        %2995 = vmatpush1.bf16.msra.mxu0 0
        %2996 = vmatprep.subr.bf16.mxu0 0
        %2997 = vmatpush1.bf16.msra.mxu0 0
        %2998 = vmatprep.subr.bf16.mxu0 0
        %2999 = vmatpush1.bf16.msra.mxu0 0
        %3000 = vmatprep.mubr.bf16.mxu0 0
        %3001 = vmatmul.mubr.bf16.gmra.mrb[0].mxu0 %v2896
        %v3002 = vpop.f32.mrb[0].mxu0
        %v3003 = vadd.f32 %v2918, %v3002
        %v3004 = vpop.f32.mrb[0].mxu0
        %v3005 = vpop.f32.mrb[0].mxu0
        %v3006 = vpop.f32.mrb[0].mxu0
        %3007 = vdwg.mxu0
        %v3010 = vunpack.c.l.s4 1966171168
        %v3011 = vunpack.c.0.s8 %v3010
        %v3012 = vlaneseq
        %v3013 = vshrl.u32 %v3012, 7
        %v3014 = vsub.s32 %v3011, %v3013
        %v3015 = vrot.slane %v3003, %v3014
        %v3016 = vcombine.high %v3015, %v3015
        %v3018 = vunpack.c.l.s4 1966171168
        %v3019 = vunpack.c.0.s8 %v3018
        %v3020 = vlaneseq
        %v3021 = vshrl.u32 %v3020, 7
        %v3022 = vsub.s32 %v3019, %v3021
        %v3023 = vrot.slane %v3015, %v3022
        %v3025 = vunpack.c.l.s4 1966171168
        %v3026 = vunpack.c.0.s8 %v3025
        %v3027 = vlaneseq
        %v3028 = vshrl.u32 %v3027, 7
        %v3029 = vsub.s32 %v3026, %v3028
        %v3030 = vrot.slane %v3016, %v3029
        %v3031 = vcombine.high %v3023, %v3023
        %v3032 = vcombine.high %v3030, %v3030
        %3037 = vst [vmem:[%s436] sm:$0x1] %v3023
        %3038 = vst [vmem:[%s436 + $0x1] sm:$0x1] %v3030
        %3039 = vst [vmem:[%s436 + $0x2] sm:$0x1] %v3031
        %3040 = vst [vmem:[%s436 + $0x3] sm:$0x1] %v3032
        %s3041 = sand.u32 %s313, 1
        %s3042 = scalar_lea.sflag [#allocation9], %s3041
        %s3043 = sand.u32 %s313, 1
        %s3044 = smul.addr %s3043, 4
        %s3045 = scalar_lea.vmem [#allocation8], %s3044
        // Predicated region
        $region73: #{_lambda_.1} parent=71 // pred_check
          %p3046 = pneg %p323
        $region74: #{_lambda_.1} parent=71 // pred_check_branch
          %3048 = sbr.rel (%p3046) target = $region76
        $region75: #{_lambda_.1} parent=71 // pred_region
          %s3049 = smul.u32 4, %s27
          %s3051 = ssub.s32 64, 64
          %3052 = vsyncadd %s3042, %s3051
          %s3053 = smul.addr %s3049, 16
          %s3054 = scalar_lea.hbm %s13, %s3053
          %s3055 = sshll.u32 %s3045, 4
          %s3056 = int_to_ptr.vmem [resolvable:$true] %s3055
          %3061 = dma.vmem_to_hbm [thread:$0]  %s3056, 64, %s3054, %s3042, 16, 16, 1
        $region76: #{_lambda_.1} parent=71 // pred_fallthru
          _
      $region72: #{_lambda_.1} parent=5 // pred_fallthru
        _
      %p3062 = scmp.le.s32.totalorder 2, %s22
      // Predicated region
      $region77: #{_lambda_.1} parent=5 // pred_check
        %p3063 = pneg %p3062
      $region78: #{_lambda_.1} parent=5 // pred_check_branch
        %3065 = sbr.rel (%p3063) target = $region80
      $region79: #{_lambda_.1} parent=5 // pred_region
        %s3066 = ssub.s32 %s22, 2
        // Predicated region
        $region81: #{_lambda_.1} parent=79 // pred_check
          %p3067 = pneg %p329
        $region82: #{_lambda_.1} parent=79 // pred_check_branch
          %3069 = sbr.rel (%p3067) target = $region84
        $region83: #{_lambda_.1} parent=79 // pred_region
          %s3070 = sand.u32 %s314, 1
          %s3071 = scalar_lea.sflag [#allocation9], %s3070
          %s3072 = sand.u32 %s314, 1
          %s3073 = smul.addr %s3072, 4
          %s3074 = scalar_lea.vmem [#allocation8], %s3073
          %3075 = dma.done %s3071, 64
        $region84: #{_lambda_.1} parent=79 // pred_fallthru
          _
      $region80: #{_lambda_.1} parent=5 // pred_fallthru
        _
    $region6: #{_lambda_.1} parent=1 // loop_footer
      %s26 = sadd.s32 1, %s22
    $region7: #{_lambda_.1} parent=1 // loop_footer_branch
      %21 = sbr.rel target = $region3
    $region8: #{_lambda_.1} parent=1 // loop_exit
      _
    %3076 = vsyncpa [#allocation9], 1
    %s3077 = scalar_lea.sflag [#allocation9], 1
    %3078 = vsyncpa %s3077, 1

</llo_original>
